<compile_context>
chip_gen: v5e
topology: v5e:2x2
jax: 0.10.0
libtpu: 0.0.40
codegen_flags: <defaults>
</compile_context>

<pallas_src>
import functools

import jax
import jax.numpy as jnp
from jax.experimental import pallas as pl
from jax.experimental.pallas import tpu as pltpu

LANE = 128                       # TPU lane width; channel dims padded to this.
_COMPUTE_DTYPE = jnp.bfloat16    # MXU-native operand dtype; accum/epilogue f32.


# ------------------------------ small helpers -------------------------------


def _round_up(n, m):
    return ((n + m - 1) // m) * m


def _pad_dim(a, axis, size):
    pad = size - a.shape[axis]
    if pad == 0:
        return a
    widths = [(0, 0)] * a.ndim
    widths[axis] = (0, pad)
    return jnp.pad(a, widths)


def _vmem_limit_bytes():
    """Generation-dependent scoped-VMEM budget (v5e/v6e: 128 MiB, v7x: 64 MiB)."""
    default = 32 * 1024 * 1024
    try:
        cap = int(pltpu.get_tpu_info().vmem_capacity_bytes)
    except Exception:
        return default
    return max(default, min(cap * 3 // 4, 96 * 1024 * 1024))


# ------------------------------ fused kernel ---------------------------------


def _bottleneck_kernel(*refs, H, W, dil, has_down):
    """Whole Bottleneck for one image: conv1+BN+ReLU -> 3x3+BN+ReLU ->
    conv3+BN + residual + ReLU, with the Cmid activation resident in VMEM."""
    if has_down:
        (x_ref, w1_ref, s1_ref, b1_ref,
         w2_ref, s2_ref, b2_ref,
         w3_ref, s3_ref, b3_ref,
         wd_ref, sd_ref, bd_ref,
         o_ref, a1_ref, col_ref) = refs
    else:
        (x_ref, w1_ref, s1_ref, b1_ref,
         w2_ref, s2_ref, b2_ref,
         w3_ref, s3_ref, b3_ref,
         o_ref, a1_ref, col_ref) = refs

    Cin = x_ref.shape[-1]
    Cmid = w1_ref.shape[-1]
    Cout = o_ref.shape[-1]

    x2d = x_ref[...].reshape(H * W, Cin)                     # bf16 (M, Cin_p)

    # ----- identity / downsample branch (kept in f32 until the final add) -----
    if has_down:
        ident = jnp.dot(x2d, wd_ref[...], preferred_element_type=jnp.float32)
        ident = ident * sd_ref[...] + bd_ref[...]
    else:
        ident = x2d.astype(jnp.float32)                      # Cin_p == Cout_p

    # ----- conv1 (1x1) + BN1 + ReLU into a spatially padded VMEM activation ---
    a1 = jnp.dot(x2d, w1_ref[...], preferred_element_type=jnp.float32)
    a1 = jnp.maximum(a1 * s1_ref[...] + b1_ref[...], 0.0)
    # Only the `dil`-wide border actually needs zeroing (conv2's zero padding);
    # a full clear of this small bf16 scratch is simpler and cheap.
    a1_ref[...] = jnp.zeros_like(a1_ref)
    a1_ref[dil:dil + H, dil:dil + W, :] = (
        a1.reshape(H, W, Cmid).astype(a1_ref.dtype))

    # ----- conv2 (3x3, groups=1): im2col built once in VMEM, ONE deep-K matmul -
    for t in range(9):                                       # static unroll
        ky, kx = divmod(t, 3)
        patch = a1_ref[ky * dil:ky * dil + H, kx * dil:kx * dil + W, :]
        col_ref[:, t * Cmid:(t + 1) * Cmid] = patch.reshape(H * W, Cmid)
    a2 = jnp.dot(col_ref[...], w2_ref[...], preferred_element_type=jnp.float32)
    a2 = jnp.maximum(a2 * s2_ref[...] + b2_ref[...], 0.0).astype(_COMPUTE_DTYPE)

    # ----- conv3 (1x1) + BN3 + residual add + ReLU -----------------------------
    y = jnp.dot(a2, w3_ref[...], preferred_element_type=jnp.float32)
    y = jnp.maximum(y * s3_ref[...] + b3_ref[...] + ident, 0.0)
    o_ref[...] = y.reshape(H, W, Cout).astype(o_ref.dtype)


# ------------------------ parameter packing helpers --------------------------


def frozen_bn_affine(bn):
    """maskrcnn FrozenBatchNorm2d: y = x*scale + bias (no eps, matching spec)."""
    gamma, beta, mean, var = bn
    scale = gamma * jax.lax.rsqrt(var)
    bias = beta - mean * scale
    return scale, bias


def _bn_padded(bn, n_p):
    scale, bias = frozen_bn_affine(bn)
    return (_pad_dim(scale, 0, n_p).reshape(1, n_p).astype(jnp.float32),
            _pad_dim(bias, 0, n_p).reshape(1, n_p).astype(jnp.float32))


def _pad_weight_1x1(w_oi, k_p, n_p):
    """PyTorch [C_out, C_in] -> zero-padded (C_in_p, C_out_p) matmul weight."""
    w = jnp.transpose(w_oi)
    return _pad_dim(_pad_dim(w, 0, k_p), 1, n_p).astype(_COMPUTE_DTYPE)


def _pad_weight_3x3_im2col(w, c_p, n_p):
    """PyTorch [C_out, C_in, 3, 3] -> im2col-ordered (9*C_in_p, C_out_p)."""
    w = jnp.transpose(w, (2, 3, 1, 0))          # (3, 3, C_in, C_out)
    w = _pad_dim(_pad_dim(w, 2, c_p), 3, n_p)
    return w.reshape(9 * c_p, n_p).astype(_COMPUTE_DTYPE)


# ------------------------------ forward wrapper -------------------------------


def bottleneck_forward(x_nchw, params, *, stride, stride_in_1x1, dilation):
    B, C_in, H, W = x_nchw.shape
    C_mid = params["w1"].shape[0]
    C_out = params["w3"].shape[0]
    Cin_p = _round_up(C_in, LANE)
    Cmid_p = _round_up(C_mid, LANE)
    Cout_p = _round_up(C_out, LANE)
    has_down = "down_w" in params

    # torch stride resolution (see the module spec)
    eff_stride = 1 if dilation > 1 else stride
    stride_1x1, stride_3x3 = (eff_stride, 1) if stride_in_1x1 else (1, eff_stride)
    assert stride_3x3 == 1, "TODO(synk): strided 3x3 path not implemented"
    if not has_down:
        assert C_in == C_out and eff_stride == 1, \
            "stride>1 / channel change without a downsample branch is invalid"

    # NCHW -> NHWC, lane-dense channel pad, bf16 activations.
    # TODO(synk): in a full backbone keep activations NHWC/channel-padded end to
    #             end so this transpose/pad is paid once per network, not per block.
    x = jnp.transpose(x_nchw, (0, 2, 3, 1))
    x = _pad_dim(x, 3, Cin_p).astype(_COMPUTE_DTYPE)
    if stride_1x1 > 1:
        # conv1 and the downsample conv share this stride (stride_in_1x1=True),
        # so one wrapper-side subsample feeds both in-kernel 1x1 matmuls.
        x = x[:, ::stride_1x1, ::stride_1x1, :]
    _, Ho, Wo, _ = x.shape
    Hp, Wp = Ho + 2 * dilation, Wo + 2 * dilation

    # weights / frozen-BN affines, zero-padded to lane multiples
    w1 = _pad_weight_1x1(params["w1"], Cin_p, Cmid_p)
    s1, b1 = _bn_padded(params["bn1"], Cmid_p)
    w2 = _pad_weight_3x3_im2col(params["w2"], Cmid_p, Cmid_p)
    s2, b2 = _bn_padded(params["bn2"], Cmid_p)
    w3 = _pad_weight_1x1(params["w3"], Cmid_p, Cout_p)
    s3, b3 = _bn_padded(params["bn3"], Cout_p)

    def const_spec(shape):
        return pl.BlockSpec(shape, lambda b: (0, 0))

    args = [x, w1, s1, b1, w2, s2, b2, w3, s3, b3]
    in_specs = [
        pl.BlockSpec((None, Ho, Wo, Cin_p), lambda b: (b, 0, 0, 0)),
        const_spec((Cin_p, Cmid_p)), const_spec((1, Cmid_p)), const_spec((1, Cmid_p)),
        const_spec((9 * Cmid_p, Cmid_p)), const_spec((1, Cmid_p)), const_spec((1, Cmid_p)),
        const_spec((Cmid_p, Cout_p)), const_spec((1, Cout_p)), const_spec((1, Cout_p)),
    ]
    if has_down:
        wd = _pad_weight_1x1(params["down_w"], Cin_p, Cout_p)
        sd, bd = _bn_padded(params["down_bn"], Cout_p)
        args += [wd, sd, bd]
        in_specs += [const_spec((Cin_p, Cout_p)),
                     const_spec((1, Cout_p)), const_spec((1, Cout_p))]

    # Advisory cost estimate so XLA schedules the boundary transposes/pads well.
    M = B * Ho * Wo
    flops = 2 * M * (Cin_p * Cmid_p + 9 * Cmid_p * Cmid_p + Cmid_p * Cout_p)
    if has_down:
        flops += 2 * M * Cin_p * Cout_p
    bytes_accessed = (sum(int(a.size) * a.dtype.itemsize for a in args)
                      + M * Cout_p * jnp.dtype(_COMPUTE_DTYPE).itemsize)

    kernel = functools.partial(_bottleneck_kernel, H=Ho, W=Wo,
                               dil=dilation, has_down=has_down)

    out = pl.pallas_call(
        kernel,
        out_shape=jax.ShapeDtypeStruct((B, Ho, Wo, Cout_p), _COMPUTE_DTYPE),
        grid=(B,),
        in_specs=in_specs,
        out_specs=pl.BlockSpec((None, Ho, Wo, Cout_p), lambda b: (b, 0, 0, 0)),
        scratch_shapes=[
            pltpu.VMEM((Hp, Wp, Cmid_p), _COMPUTE_DTYPE),      # padded conv1 act
            pltpu.VMEM((Ho * Wo, 9 * Cmid_p), _COMPUTE_DTYPE),  # conv2 im2col
        ],
        compiler_params=pltpu.CompilerParams(
            dimension_semantics=("parallel",),
            vmem_limit_bytes=_vmem_limit_bytes()),
        cost_estimate=pl.CostEstimate(flops=int(flops), transcendentals=0,
                                      bytes_accessed=int(bytes_accessed)),
    )(*args)

    out = out[:, :, :, :C_out]                         # drop channel padding
    return jnp.transpose(out, (0, 3, 1, 2)).astype(x_nchw.dtype)   # NHWC -> NCHW


# --------------------------- parameter init ----------------------------------


def kaiming_uniform(key, shape, a=1.0):
    fan_in = 1
    for d in shape[1:]:
        fan_in *= d
    gain = (2.0 / (1.0 + a * a)) ** 0.5
    bound = gain * (3.0 / fan_in) ** 0.5
    return jax.random.uniform(key, shape, jnp.float32, -bound, bound)


def make_bn(key, c):
    k1, k2, k3, k4 = jax.random.split(key, 4)
    gamma = jax.random.uniform(k1, (c,), jnp.float32, 0.5, 1.5)
    beta = jax.random.uniform(k2, (c,), jnp.float32, -0.2, 0.2)
    mean = jax.random.uniform(k3, (c,), jnp.float32, -0.2, 0.2)
    var = jax.random.uniform(k4, (c,), jnp.float32, 0.5, 2.0)
    return (gamma, beta, mean, var)


def make_params(key, c_in, c_mid, c_out):
    ks = jax.random.split(key, 8)
    params = {
        "w1": kaiming_uniform(ks[0], (c_mid, c_in)),            # 1x1
        "bn1": make_bn(ks[1], c_mid),
        "w2": kaiming_uniform(ks[2], (c_mid, c_mid, 3, 3)),      # 3x3
        "bn2": make_bn(ks[3], c_mid),
        "w3": kaiming_uniform(ks[4], (c_out, c_mid)),            # 1x1
        "bn3": make_bn(ks[5], c_out),
    }
    if c_in != c_out:
        params["down_w"] = kaiming_uniform(ks[6], (c_out, c_in))
        params["down_bn"] = make_bn(ks[7], c_out)
    return params


# ------------------------- pure-JAX f32 reference ----------------------------


def _conv_nchw(x, w, stride, padding, dilation):
    return jax.lax.conv_general_dilated(
        x, w, window_strides=(stride, stride),
        padding=((padding, padding), (padding, padding)),
        rhs_dilation=(dilation, dilation),
        dimension_numbers=("NCHW", "OIHW", "NCHW"))


def _bn_nchw(x, bn):
    scale, bias = frozen_bn_affine(bn)
    return x * scale.reshape(1, -1, 1, 1) + bias.reshape(1, -1, 1, 1)


def bottleneck_reference(x, params, *, stride, stride_in_1x1, dilation):
    orig_stride = stride
    if dilation > 1:
        stride = 1
    stride_1x1, stride_3x3 = (stride, 1) if stride_in_1x1 else (1, stride)

    identity = x
    if "down_w" in params:
        down_stride = orig_stride if dilation == 1 else 1
        identity = _conv_nchw(x, params["down_w"][:, :, None, None],
                              down_stride, 0, 1)
        identity = _bn_nchw(identity, params["down_bn"])

    out = _conv_nchw(x, params["w1"][:, :, None, None], stride_1x1, 0, 1)
    out = jax.nn.relu(_bn_nchw(out, params["bn1"]))
    out = _conv_nchw(out, params["w2"], stride_3x3, dilation, dilation)
    out = jax.nn.relu(_bn_nchw(out, params["bn2"]))
    out = _conv_nchw(out, params["w3"][:, :, None, None], 1, 0, 1)
    out = _bn_nchw(out, params["bn3"])
    return jax.nn.relu(out + identity)


# --------------------------------- main ---------------------------------------


if __name__ == "__main__":
    key = jax.random.PRNGKey(0)
    kx, kp = jax.random.split(key)

    # Bottleneck(in_channels=32, bottleneck_channels=16, out_channels=64,
    #            num_groups=1, stride_in_1x1=True, stride=1, dilation=1,
    #            norm_func=FrozenBatchNorm2d, dcn_config={})
    B, C_IN, C_MID, C_OUT, H, W = 2, 32, 16, 64, 16, 16
    STRIDE, STRIDE_IN_1X1, DILATION = 1, True, 1

    x = jax.random.normal(kx, (B, C_IN, H, W), jnp.float32)
    params = make_params(kp, C_IN, C_MID, C_OUT)

    fwd = jax.jit(functools.partial(bottleneck_forward, stride=STRIDE,
                                    stride_in_1x1=STRIDE_IN_1X1,
                                    dilation=DILATION))
    out = jax.block_until_ready(fwd(x, params))

    ref = bottleneck_reference(x, params, stride=STRIDE,
                               stride_in_1x1=STRIDE_IN_1X1, dilation=DILATION)
    ref = jax.block_until_ready(ref)

    assert out.shape == ref.shape == (B, C_OUT, H, W)
    # bf16 MXU operands / bf16 kernel output (f32 accumulation) -> compare with
    # a loosened tolerance relative to the f32 reference.
    max_err = float(jnp.max(jnp.abs(out - ref)))
    ref_scale = float(jnp.max(jnp.abs(ref))) + 1e-6
    assert max_err / ref_scale < 5e-2, (max_err, ref_scale)

    print("KERNEL_OK")
</pallas_src>

<mosaic_0001>
module attributes {stable_mosaic.version = 11 : i64} {
  func.func @_bottleneck_kernel(%arg0: i32, %arg1: memref<1x16x16x128xbf16, #tpu.memory_space<vmem>>, %arg2: memref<128x128xbf16, #tpu.memory_space<vmem>>, %arg3: memref<1x128xf32, #tpu.memory_space<vmem>>, %arg4: memref<1x128xf32, #tpu.memory_space<vmem>>, %arg5: memref<1152x128xbf16, #tpu.memory_space<vmem>>, %arg6: memref<1x128xf32, #tpu.memory_space<vmem>>, %arg7: memref<1x128xf32, #tpu.memory_space<vmem>>, %arg8: memref<128x128xbf16, #tpu.memory_space<vmem>>, %arg9: memref<1x128xf32, #tpu.memory_space<vmem>>, %arg10: memref<1x128xf32, #tpu.memory_space<vmem>>, %arg11: memref<128x128xbf16, #tpu.memory_space<vmem>>, %arg12: memref<1x128xf32, #tpu.memory_space<vmem>>, %arg13: memref<1x128xf32, #tpu.memory_space<vmem>>, %arg14: memref<1x16x16x128xbf16, #tpu.memory_space<vmem>>, %arg15: memref<18x18x128xbf16, #tpu.memory_space<vmem>>, %arg16: memref<256x1152xbf16, #tpu.memory_space<vmem>>) attributes {dimension_semantics = [#tpu.dimension_semantics<parallel>], iteration_bounds = array<i64: 2>, scalar_prefetch = 0 : i64, scratch_operands = 2 : i64, tpu.core_type = #tpu.core_type<tc>, window_params = [{transform_indices = @transform_0, window_bounds = array<i64: 1, 16, 16, 128>}, {pipeline_mode = #tpu.pipeline_mode<synchronous>, transform_indices = @transform_1, window_bounds = array<i64: 128, 128>}, {pipeline_mode = #tpu.pipeline_mode<synchronous>, transform_indices = @transform_2, window_bounds = array<i64: 1, 128>}, {pipeline_mode = #tpu.pipeline_mode<synchronous>, transform_indices = @transform_3, window_bounds = array<i64: 1, 128>}, {pipeline_mode = #tpu.pipeline_mode<synchronous>, transform_indices = @transform_4, window_bounds = array<i64: 1152, 128>}, {pipeline_mode = #tpu.pipeline_mode<synchronous>, transform_indices = @transform_5, window_bounds = array<i64: 1, 128>}, {pipeline_mode = #tpu.pipeline_mode<synchronous>, transform_indices = @transform_6, window_bounds = array<i64: 1, 128>}, {pipeline_mode = #tpu.pipeline_mode<synchronous>, transform_indices = @transform_7, window_bounds = array<i64: 128, 128>}, {pipeline_mode = #tpu.pipeline_mode<synchronous>, transform_indices = @transform_8, window_bounds = array<i64: 1, 128>}, {pipeline_mode = #tpu.pipeline_mode<synchronous>, transform_indices = @transform_9, window_bounds = array<i64: 1, 128>}, {pipeline_mode = #tpu.pipeline_mode<synchronous>, transform_indices = @transform_10, window_bounds = array<i64: 128, 128>}, {pipeline_mode = #tpu.pipeline_mode<synchronous>, transform_indices = @transform_11, window_bounds = array<i64: 1, 128>}, {pipeline_mode = #tpu.pipeline_mode<synchronous>, transform_indices = @transform_12, window_bounds = array<i64: 1, 128>}, {transform_indices = @transform_13, window_bounds = array<i64: 1, 16, 16, 128>}]} {
    %c0 = arith.constant 0 : index
    %c0_0 = arith.constant 0 : index
    %c0_1 = arith.constant 0 : index
    %c0_2 = arith.constant 0 : index
    %0 = vector.load %arg1[%c0, %c0_0, %c0_1, %c0_2] : memref<1x16x16x128xbf16, #tpu.memory_space<vmem>>, vector<1x16x16x128xbf16>
    %1 = vector.shape_cast %0 : vector<1x16x16x128xbf16> to vector<16x16x128xbf16>
    %2 = vector.shape_cast %1 : vector<16x16x128xbf16> to vector<256x128xbf16>
    %c0_3 = arith.constant 0 : index
    %c0_4 = arith.constant 0 : index
    %3 = vector.load %arg11[%c0_3, %c0_4] : memref<128x128xbf16, #tpu.memory_space<vmem>>, vector<128x128xbf16>
    %cst = arith.constant dense<0.000000e+00> : vector<256x128xf32>
    %4 = tpu.matmul %2, %3, %cst {dimension_numbers = #tpu.dot_dimension_numbers<[1], [0], [0], [1], [0, 0, 1, 1], [], []>} : vector<256x128xbf16>, vector<128x128xbf16>, vector<256x128xf32> -> vector<256x128xf32>
    %c0_5 = arith.constant 0 : index
    %c0_6 = arith.constant 0 : index
    %5 = vector.load %arg12[%c0_5, %c0_6] : memref<1x128xf32, #tpu.memory_space<vmem>>, vector<1x128xf32>
    %6 = vector.broadcast %5 : vector<1x128xf32> to vector<256x128xf32>
    %7 = arith.mulf %4, %6 : vector<256x128xf32>
    %c0_7 = arith.constant 0 : index
    %c0_8 = arith.constant 0 : index
    %8 = vector.load %arg13[%c0_7, %c0_8] : memref<1x128xf32, #tpu.memory_space<vmem>>, vector<1x128xf32>
    %9 = vector.broadcast %8 : vector<1x128xf32> to vector<256x128xf32>
    %10 = arith.addf %7, %9 : vector<256x128xf32>
    %c0_9 = arith.constant 0 : index
    %c0_10 = arith.constant 0 : index
    %11 = vector.load %arg2[%c0_9, %c0_10] : memref<128x128xbf16, #tpu.memory_space<vmem>>, vector<128x128xbf16>
    %cst_11 = arith.constant dense<0.000000e+00> : vector<256x128xf32>
    %12 = tpu.matmul %2, %11, %cst_11 {dimension_numbers = #tpu.dot_dimension_numbers<[1], [0], [0], [1], [0, 0, 1, 1], [], []>} : vector<256x128xbf16>, vector<128x128xbf16>, vector<256x128xf32> -> vector<256x128xf32>
    %c0_12 = arith.constant 0 : index
    %c0_13 = arith.constant 0 : index
    %13 = vector.load %arg3[%c0_12, %c0_13] : memref<1x128xf32, #tpu.memory_space<vmem>>, vector<1x128xf32>
    %14 = vector.broadcast %13 : vector<1x128xf32> to vector<256x128xf32>
    %15 = arith.mulf %12, %14 : vector<256x128xf32>
    %c0_14 = arith.constant 0 : index
    %c0_15 = arith.constant 0 : index
    %16 = vector.load %arg4[%c0_14, %c0_15] : memref<1x128xf32, #tpu.memory_space<vmem>>, vector<1x128xf32>
    %17 = vector.broadcast %16 : vector<1x128xf32> to vector<256x128xf32>
    %18 = arith.addf %15, %17 : vector<256x128xf32>
    %cst_16 = arith.constant 0.000000e+00 : f32
    %19 = vector.broadcast %cst_16 : f32 to vector<256x128xf32>
    %20 = arith.maximumf %18, %19 : vector<256x128xf32>
    %cst_17 = arith.constant 0.000000e+00 : bf16
    %21 = vector.broadcast %cst_17 : bf16 to vector<18x18x128xbf16>
    %c0_18 = arith.constant 0 : index
    %c0_19 = arith.constant 0 : index
    %c0_20 = arith.constant 0 : index
    %22 = vector.load %arg15[%c0_18, %c0_19, %c0_20] : memref<18x18x128xbf16, #tpu.memory_space<vmem>>, vector<18x18x128xbf16>
    tpu.vector_store %arg15[%c0_18, %c0_19, %c0_20], %21 {strides = array<i32>} : memref<18x18x128xbf16, #tpu.memory_space<vmem>>, vector<18x18x128xbf16>,
    %23 = vector.shape_cast %20 : vector<256x128xf32> to vector<16x16x128xf32>
    %24 = arith.truncf %23 : vector<16x16x128xf32> to vector<16x16x128xbf16>
    %c1 = arith.constant 1 : index
    %c1_21 = arith.constant 1 : index
    %c0_22 = arith.constant 0 : index
    %25 = vector.load %arg15[%c1, %c1_21, %c0_22] : memref<18x18x128xbf16, #tpu.memory_space<vmem>>, vector<16x16x128xbf16>
    tpu.vector_store %arg15[%c1, %c1_21, %c0_22], %24 {strides = array<i32>} : memref<18x18x128xbf16, #tpu.memory_space<vmem>>, vector<16x16x128xbf16>,
    %c0_23 = arith.constant 0 : index
    %c0_24 = arith.constant 0 : index
    %c0_25 = arith.constant 0 : index
    %26 = vector.load %arg15[%c0_23, %c0_24, %c0_25] : memref<18x18x128xbf16, #tpu.memory_space<vmem>>, vector<16x16x128xbf16>
    %27 = vector.shape_cast %26 : vector<16x16x128xbf16> to vector<256x128xbf16>
    %c0_26 = arith.constant 0 : index
    %c0_27 = arith.constant 0 : index
    %28 = vector.load %arg16[%c0_26, %c0_27] : memref<256x1152xbf16, #tpu.memory_space<vmem>>, vector<256x128xbf16>
    tpu.vector_store %arg16[%c0_26, %c0_27], %27 {strides = array<i32>} : memref<256x1152xbf16, #tpu.memory_space<vmem>>, vector<256x128xbf16>,
    %c0_28 = arith.constant 0 : index
    %c1_29 = arith.constant 1 : index
    %c0_30 = arith.constant 0 : index
    %29 = vector.load %arg15[%c0_28, %c1_29, %c0_30] : memref<18x18x128xbf16, #tpu.memory_space<vmem>>, vector<16x16x128xbf16>
    %30 = vector.shape_cast %29 : vector<16x16x128xbf16> to vector<256x128xbf16>
    %c0_31 = arith.constant 0 : index
    %c128 = arith.constant 128 : index
    %31 = vector.load %arg16[%c0_31, %c128] : memref<256x1152xbf16, #tpu.memory_space<vmem>>, vector<256x128xbf16>
    tpu.vector_store %arg16[%c0_31, %c128], %30 {strides = array<i32>} : memref<256x1152xbf16, #tpu.memory_space<vmem>>, vector<256x128xbf16>,
    %c0_32 = arith.constant 0 : index
    %c2 = arith.constant 2 : index
    %c0_33 = arith.constant 0 : index
    %32 = vector.load %arg15[%c0_32, %c2, %c0_33] : memref<18x18x128xbf16, #tpu.memory_space<vmem>>, vector<16x16x128xbf16>
    %33 = vector.shape_cast %32 : vector<16x16x128xbf16> to vector<256x128xbf16>
    %c0_34 = arith.constant 0 : index
    %c256 = arith.constant 256 : index
    %34 = vector.load %arg16[%c0_34, %c256] : memref<256x1152xbf16, #tpu.memory_space<vmem>>, vector<256x128xbf16>
    tpu.vector_store %arg16[%c0_34, %c256], %33 {strides = array<i32>} : memref<256x1152xbf16, #tpu.memory_space<vmem>>, vector<256x128xbf16>,
    %c1_35 = arith.constant 1 : index
    %c0_36 = arith.constant 0 : index
    %c0_37 = arith.constant 0 : index
    %35 = vector.load %arg15[%c1_35, %c0_36, %c0_37] : memref<18x18x128xbf16, #tpu.memory_space<vmem>>, vector<16x16x128xbf16>
    %36 = vector.shape_cast %35 : vector<16x16x128xbf16> to vector<256x128xbf16>
    %c0_38 = arith.constant 0 : index
    %c384 = arith.constant 384 : index
    %37 = vector.load %arg16[%c0_38, %c384] : memref<256x1152xbf16, #tpu.memory_space<vmem>>, vector<256x128xbf16>
    tpu.vector_store %arg16[%c0_38, %c384], %36 {strides = array<i32>} : memref<256x1152xbf16, #tpu.memory_space<vmem>>, vector<256x128xbf16>,
    %c1_39 = arith.constant 1 : index
    %c1_40 = arith.constant 1 : index
    %c0_41 = arith.constant 0 : index
    %38 = vector.load %arg15[%c1_39, %c1_40, %c0_41] : memref<18x18x128xbf16, #tpu.memory_space<vmem>>, vector<16x16x128xbf16>
    %39 = vector.shape_cast %38 : vector<16x16x128xbf16> to vector<256x128xbf16>
    %c0_42 = arith.constant 0 : index
    %c512 = arith.constant 512 : index
    %40 = vector.load %arg16[%c0_42, %c512] : memref<256x1152xbf16, #tpu.memory_space<vmem>>, vector<256x128xbf16>
    tpu.vector_store %arg16[%c0_42, %c512], %39 {strides = array<i32>} : memref<256x1152xbf16, #tpu.memory_space<vmem>>, vector<256x128xbf16>,
    %c1_43 = arith.constant 1 : index
    %c2_44 = arith.constant 2 : index
    %c0_45 = arith.constant 0 : index
    %41 = vector.load %arg15[%c1_43, %c2_44, %c0_45] : memref<18x18x128xbf16, #tpu.memory_space<vmem>>, vector<16x16x128xbf16>
    %42 = vector.shape_cast %41 : vector<16x16x128xbf16> to vector<256x128xbf16>
    %c0_46 = arith.constant 0 : index
    %c640 = arith.constant 640 : index
    %43 = vector.load %arg16[%c0_46, %c640] : memref<256x1152xbf16, #tpu.memory_space<vmem>>, vector<256x128xbf16>
    tpu.vector_store %arg16[%c0_46, %c640], %42 {strides = array<i32>} : memref<256x1152xbf16, #tpu.memory_space<vmem>>, vector<256x128xbf16>,
    %c2_47 = arith.constant 2 : index
    %c0_48 = arith.constant 0 : index
    %c0_49 = arith.constant 0 : index
    %44 = vector.load %arg15[%c2_47, %c0_48, %c0_49] : memref<18x18x128xbf16, #tpu.memory_space<vmem>>, vector<16x16x128xbf16>
    %45 = vector.shape_cast %44 : vector<16x16x128xbf16> to vector<256x128xbf16>
    %c0_50 = arith.constant 0 : index
    %c768 = arith.constant 768 : index
    %46 = vector.load %arg16[%c0_50, %c768] : memref<256x1152xbf16, #tpu.memory_space<vmem>>, vector<256x128xbf16>
    tpu.vector_store %arg16[%c0_50, %c768], %45 {strides = array<i32>} : memref<256x1152xbf16, #tpu.memory_space<vmem>>, vector<256x128xbf16>,
    %c2_51 = arith.constant 2 : index
    %c1_52 = arith.constant 1 : index
    %c0_53 = arith.constant 0 : index
    %47 = vector.load %arg15[%c2_51, %c1_52, %c0_53] : memref<18x18x128xbf16, #tpu.memory_space<vmem>>, vector<16x16x128xbf16>
    %48 = vector.shape_cast %47 : vector<16x16x128xbf16> to vector<256x128xbf16>
    %c0_54 = arith.constant 0 : index
    %c896 = arith.constant 896 : index
    %49 = vector.load %arg16[%c0_54, %c896] : memref<256x1152xbf16, #tpu.memory_space<vmem>>, vector<256x128xbf16>
    tpu.vector_store %arg16[%c0_54, %c896], %48 {strides = array<i32>} : memref<256x1152xbf16, #tpu.memory_space<vmem>>, vector<256x128xbf16>,
    %c2_55 = arith.constant 2 : index
    %c2_56 = arith.constant 2 : index
    %c0_57 = arith.constant 0 : index
    %50 = vector.load %arg15[%c2_55, %c2_56, %c0_57] : memref<18x18x128xbf16, #tpu.memory_space<vmem>>, vector<16x16x128xbf16>
    %51 = vector.shape_cast %50 : vector<16x16x128xbf16> to vector<256x128xbf16>
    %c0_58 = arith.constant 0 : index
    %c1024 = arith.constant 1024 : index
    %52 = vector.load %arg16[%c0_58, %c1024] : memref<256x1152xbf16, #tpu.memory_space<vmem>>, vector<256x128xbf16>
    tpu.vector_store %arg16[%c0_58, %c1024], %51 {strides = array<i32>} : memref<256x1152xbf16, #tpu.memory_space<vmem>>, vector<256x128xbf16>,
    %c0_59 = arith.constant 0 : index
    %c0_60 = arith.constant 0 : index
    %53 = vector.load %arg16[%c0_59, %c0_60] : memref<256x1152xbf16, #tpu.memory_space<vmem>>, vector<256x1152xbf16>
    %c0_61 = arith.constant 0 : index
    %c0_62 = arith.constant 0 : index
    %54 = vector.load %arg5[%c0_61, %c0_62] : memref<1152x128xbf16, #tpu.memory_space<vmem>>, vector<1152x128xbf16>
    %cst_63 = arith.constant dense<0.000000e+00> : vector<256x128xf32>
    %55 = tpu.matmul %53, %54, %cst_63 {dimension_numbers = #tpu.dot_dimension_numbers<[1], [0], [0], [1], [0, 0, 1, 1], [], []>} : vector<256x1152xbf16>, vector<1152x128xbf16>, vector<256x128xf32> -> vector<256x128xf32>
    %c0_64 = arith.constant 0 : index
    %c0_65 = arith.constant 0 : index
    %56 = vector.load %arg6[%c0_64, %c0_65] : memref<1x128xf32, #tpu.memory_space<vmem>>, vector<1x128xf32>
    %57 = vector.broadcast %56 : vector<1x128xf32> to vector<256x128xf32>
    %58 = arith.mulf %55, %57 : vector<256x128xf32>
    %c0_66 = arith.constant 0 : index
    %c0_67 = arith.constant 0 : index
    %59 = vector.load %arg7[%c0_66, %c0_67] : memref<1x128xf32, #tpu.memory_space<vmem>>, vector<1x128xf32>
    %60 = vector.broadcast %59 : vector<1x128xf32> to vector<256x128xf32>
    %61 = arith.addf %58, %60 : vector<256x128xf32>
    %cst_68 = arith.constant 0.000000e+00 : f32
    %62 = vector.broadcast %cst_68 : f32 to vector<256x128xf32>
    %63 = arith.maximumf %61, %62 : vector<256x128xf32>
    %64 = arith.truncf %63 : vector<256x128xf32> to vector<256x128xbf16>
    %c0_69 = arith.constant 0 : index
    %c0_70 = arith.constant 0 : index
    %65 = vector.load %arg8[%c0_69, %c0_70] : memref<128x128xbf16, #tpu.memory_space<vmem>>, vector<128x128xbf16>
    %cst_71 = arith.constant dense<0.000000e+00> : vector<256x128xf32>
    %66 = tpu.matmul %64, %65, %cst_71 {dimension_numbers = #tpu.dot_dimension_numbers<[1], [0], [0], [1], [0, 0, 1, 1], [], []>} : vector<256x128xbf16>, vector<128x128xbf16>, vector<256x128xf32> -> vector<256x128xf32>
    %c0_72 = arith.constant 0 : index
    %c0_73 = arith.constant 0 : index
    %67 = vector.load %arg9[%c0_72, %c0_73] : memref<1x128xf32, #tpu.memory_space<vmem>>, vector<1x128xf32>
    %68 = vector.broadcast %67 : vector<1x128xf32> to vector<256x128xf32>
    %69 = arith.mulf %66, %68 : vector<256x128xf32>
    %c0_74 = arith.constant 0 : index
    %c0_75 = arith.constant 0 : index
    %70 = vector.load %arg10[%c0_74, %c0_75] : memref<1x128xf32, #tpu.memory_space<vmem>>, vector<1x128xf32>
    %71 = vector.broadcast %70 : vector<1x128xf32> to vector<256x128xf32>
    %72 = arith.addf %69, %71 : vector<256x128xf32>
    %73 = arith.addf %72, %10 : vector<256x128xf32>
    %cst_76 = arith.constant 0.000000e+00 : f32
    %74 = vector.broadcast %cst_76 : f32 to vector<256x128xf32>
    %75 = arith.maximumf %73, %74 : vector<256x128xf32>
    %76 = vector.shape_cast %75 : vector<256x128xf32> to vector<16x16x128xf32>
    %77 = arith.truncf %76 : vector<16x16x128xf32> to vector<16x16x128xbf16>
    %c0_77 = arith.constant 0 : index
    %c0_78 = arith.constant 0 : index
    %c0_79 = arith.constant 0 : index
    %c0_80 = arith.constant 0 : index
    %78 = vector.load %arg14[%c0_77, %c0_78, %c0_79, %c0_80] : memref<1x16x16x128xbf16, #tpu.memory_space<vmem>>, vector<1x16x16x128xbf16>
    %79 = vector.shape_cast %78 : vector<1x16x16x128xbf16> to vector<16x16x128xbf16>
    %80 = vector.shape_cast %77 : vector<16x16x128xbf16> to vector<1x16x16x128xbf16>
    tpu.vector_store %arg14[%c0_77, %c0_78, %c0_79, %c0_80], %80 {strides = array<i32>} : memref<1x16x16x128xbf16, #tpu.memory_space<vmem>>, vector<1x16x16x128xbf16>,
    return
  }
  func.func @transform_0(%arg0: i32) -> (i32, i32, i32, i32) {
    %c0_i32 = arith.constant 0 : i32
    %c0_i32_0 = arith.constant 0 : i32
    %c0_i32_1 = arith.constant 0 : i32
    %c0_i32_2 = arith.constant 0 : i32
    return %arg0, %c0_i32, %c0_i32_0, %c0_i32_1 : i32, i32, i32, i32
  }
  func.func @transform_1(%arg0: i32) -> (i32, i32) {
    %c0_i32 = arith.constant 0 : i32
    %c0_i32_0 = arith.constant 0 : i32
    %c0_i32_1 = arith.constant 0 : i32
    return %c0_i32, %c0_i32_0 : i32, i32
  }
  func.func @transform_2(%arg0: i32) -> (i32, i32) {
    %c0_i32 = arith.constant 0 : i32
    %c0_i32_0 = arith.constant 0 : i32
    %c0_i32_1 = arith.constant 0 : i32
    return %c0_i32, %c0_i32_0 : i32, i32
  }
  func.func @transform_3(%arg0: i32) -> (i32, i32) {
    %c0_i32 = arith.constant 0 : i32
    %c0_i32_0 = arith.constant 0 : i32
    %c0_i32_1 = arith.constant 0 : i32
    return %c0_i32, %c0_i32_0 : i32, i32
  }
  func.func @transform_4(%arg0: i32) -> (i32, i32) {
    %c0_i32 = arith.constant 0 : i32
    %c0_i32_0 = arith.constant 0 : i32
    %c0_i32_1 = arith.constant 0 : i32
    return %c0_i32, %c0_i32_0 : i32, i32
  }
  func.func @transform_5(%arg0: i32) -> (i32, i32) {
    %c0_i32 = arith.constant 0 : i32
    %c0_i32_0 = arith.constant 0 : i32
    %c0_i32_1 = arith.constant 0 : i32
    return %c0_i32, %c0_i32_0 : i32, i32
  }
  func.func @transform_6(%arg0: i32) -> (i32, i32) {
    %c0_i32 = arith.constant 0 : i32
    %c0_i32_0 = arith.constant 0 : i32
    %c0_i32_1 = arith.constant 0 : i32
    return %c0_i32, %c0_i32_0 : i32, i32
  }
  func.func @transform_7(%arg0: i32) -> (i32, i32) {
    %c0_i32 = arith.constant 0 : i32
    %c0_i32_0 = arith.constant 0 : i32
    %c0_i32_1 = arith.constant 0 : i32
    return %c0_i32, %c0_i32_0 : i32, i32
  }
  func.func @transform_8(%arg0: i32) -> (i32, i32) {
    %c0_i32 = arith.constant 0 : i32
    %c0_i32_0 = arith.constant 0 : i32
    %c0_i32_1 = arith.constant 0 : i32
    return %c0_i32, %c0_i32_0 : i32, i32
  }
  func.func @transform_9(%arg0: i32) -> (i32, i32) {
    %c0_i32 = arith.constant 0 : i32
    %c0_i32_0 = arith.constant 0 : i32
    %c0_i32_1 = arith.constant 0 : i32
    return %c0_i32, %c0_i32_0 : i32, i32
  }
  func.func @transform_10(%arg0: i32) -> (i32, i32) {
    %c0_i32 = arith.constant 0 : i32
    %c0_i32_0 = arith.constant 0 : i32
    %c0_i32_1 = arith.constant 0 : i32
    return %c0_i32, %c0_i32_0 : i32, i32
  }
  func.func @transform_11(%arg0: i32) -> (i32, i32) {
    %c0_i32 = arith.constant 0 : i32
    %c0_i32_0 = arith.constant 0 : i32
    %c0_i32_1 = arith.constant 0 : i32
    return %c0_i32, %c0_i32_0 : i32, i32
  }
  func.func @transform_12(%arg0: i32) -> (i32, i32) {
    %c0_i32 = arith.constant 0 : i32
    %c0_i32_0 = arith.constant 0 : i32
    %c0_i32_1 = arith.constant 0 : i32
    return %c0_i32, %c0_i32_0 : i32, i32
  }
  func.func @transform_13(%arg0: i32) -> (i32, i32, i32, i32) {
    %c0_i32 = arith.constant 0 : i32
    %c0_i32_0 = arith.constant 0 : i32
    %c0_i32_1 = arith.constant 0 : i32
    %c0_i32_2 = arith.constant 0 : i32
    return %arg0, %c0_i32, %c0_i32_0, %c0_i32_1 : i32, i32, i32, i32
  }
}

</mosaic_0001>

<llo_original>
// kernel: bottleneck_forward.1
$region0: #{bottleneck_forward.1}
  #allocation0 [shape = 'u32[]', space=smem, size = 0x4, offset = 0x4, fixed_abs, tag = 'smem constant byte address 0x4 - core index']
  #allocation1 [shape = 'u32[72,128]{1,0:T(1,128)}', space=vmem, size = 0x9000, scoped, tag = 'internal scratch']
  #allocation2 [shape = 'bf16[18,18,128]{2,1,0:T(8,128)(2,1)}', space=vmem, size = 0x1b000, scoped, tag = 'scratch operand']
  #allocation3 [shape = 'bf16[256,1152]{1,0:T(8,128)(2,1)}', space=vmem, size = 0x90000, scoped, tag = 'scratch operand']
  %s0 = inlined_call_operand.vmem [shape: bf16[2,16,16,128], index: 0, kind: input, shape index: {}]
  %s1 = inlined_call_operand.vmem [shape: bf16[128,128], index: 1, kind: input, shape index: {}]
  %s2 = inlined_call_operand.vmem [shape: f32[1,128], index: 2, kind: input, shape index: {}]
  %s3 = inlined_call_operand.vmem [shape: f32[1,128], index: 3, kind: input, shape index: {}]
  %s4 = inlined_call_operand.vmem [shape: bf16[1152,128], index: 4, kind: input, shape index: {}]
  %s5 = inlined_call_operand.vmem [shape: f32[1,128], index: 5, kind: input, shape index: {}]
  %s6 = inlined_call_operand.vmem [shape: f32[1,128], index: 6, kind: input, shape index: {}]
  %s7 = inlined_call_operand.vmem [shape: bf16[128,128], index: 7, kind: input, shape index: {}]
  %s8 = inlined_call_operand.vmem [shape: f32[1,128], index: 8, kind: input, shape index: {}]
  %s9 = inlined_call_operand.vmem [shape: f32[1,128], index: 9, kind: input, shape index: {}]
  %s10 = inlined_call_operand.vmem [shape: bf16[128,128], index: 10, kind: input, shape index: {}]
  %s11 = inlined_call_operand.vmem [shape: f32[1,128], index: 11, kind: input, shape index: {}]
  %s12 = inlined_call_operand.vmem [shape: f32[1,128], index: 12, kind: input, shape index: {}]
  %s13 = inlined_call_operand.vmem [shape: bf16[2,16,16,128], index: 13, kind: output, shape index: {}]
  %s14 = sld [smem:[#allocation0]]
  $region85: #{bottleneck_forward.1} parent=0
    _
  %s16 = ssub.s32 1, %s14
  %s17 = scalar_select 0, %s16, %s14
  loop: start=0, step=1, limit=4
  $region2: #{bottleneck_forward.1} parent=0 // loop_pre_header
    _
  $region3: #{bottleneck_forward.1} parent=0 // loop_header
    %s19 = sphi 0, %s23
    %p20 = scmp.ge.s32.totalorder %s19, 4
    %s29 = sphi 0, %s31
    %s32 = sphi 0, %s29
    %s33 = sphi 0, %s32
    %s49 = sphi 0, %s33
    %s53 = sphi 0, %s53
    %s55 = sphi 0, %s53
    %s56 = sphi 0, %s55
    %s70 = sphi 0, %s56
    %s74 = sphi 0, %s74
    %s76 = sphi 0, %s74
    %s77 = sphi 0, %s76
    %s91 = sphi 0, %s77
    %s95 = sphi 0, %s95
    %s97 = sphi 0, %s95
    %s98 = sphi 0, %s97
    %s112 = sphi 0, %s98
    %s116 = sphi 0, %s116
    %s118 = sphi 0, %s116
    %s119 = sphi 0, %s118
    %s133 = sphi 0, %s119
    %s137 = sphi 0, %s137
    %s139 = sphi 0, %s137
    %s140 = sphi 0, %s139
    %s154 = sphi 0, %s140
    %s158 = sphi 0, %s158
    %s160 = sphi 0, %s158
    %s161 = sphi 0, %s160
    %s175 = sphi 0, %s161
    %s179 = sphi 0, %s179
    %s181 = sphi 0, %s179
    %s182 = sphi 0, %s181
    %s196 = sphi 0, %s182
    %s200 = sphi 0, %s200
    %s202 = sphi 0, %s200
    %s203 = sphi 0, %s202
    %s217 = sphi 0, %s203
    %s221 = sphi 0, %s221
    %s223 = sphi 0, %s221
    %s224 = sphi 0, %s223
    %s238 = sphi 0, %s224
    %s242 = sphi 0, %s242
    %s244 = sphi 0, %s242
    %s245 = sphi 0, %s244
    %s259 = sphi 0, %s245
    %s263 = sphi 0, %s263
    %s265 = sphi 0, %s263
    %s266 = sphi 0, %s265
    %s280 = sphi 0, %s266
    %s284 = sphi 0, %s284
    %s286 = sphi 0, %s284
    %s287 = sphi 0, %s286
    %s301 = sphi 0, %s287
    %s307 = sphi 0, %s309
    %s310 = sphi 0, %s307
    %s311 = sphi 0, %s310
    %s327 = sphi 0, %s311
  $region4: #{bottleneck_forward.1} parent=0 // loop_header_branch
    %22 = sbr.rel (%p20) target = $region8
  $region5: #{bottleneck_forward.1} parent=0 // loop_body
    %s24 = ssub.s32 %s19, 1
    %s25 = ssub.s32 %s19, 2
    %s26 = sadd.s32 %s19, 1
    %s27 = ssub.s32 %s19, %s26
    %p28 = scmp.eq.s32.totalorder %s27, 0
    %s30 = sadd.s32 %s29, 1
    %s31 = scalar_select %p28, %s29, %s30
    %p34 = pneg %p28
    %p35 = scmp.eq.s32.totalorder %s19, 1
    %p36 = por %p34, %p35
    %p37 = scmp.ne.s32.totalorder %s29, %s32
    %p38 = scmp.eq.s32.totalorder %s19, 0
    %p39 = por %p37, %p38
    %p40 = scmp.ne.s32.totalorder %s29, %s32
    %p41 = scmp.eq.s32.totalorder %s24, 1
    %p42 = por %p40, %p41
    %p43 = scmp.ne.s32.totalorder %s32, %s33
    %p44 = scmp.eq.s32.totalorder %s24, 0
    %p45 = por %p43, %p44
    %p46 = scmp.ne.s32.totalorder %s32, %s33
    %p47 = scmp.eq.s32.totalorder %s25, 1
    %p48 = por %p46, %p47
    %p50 = scmp.ne.s32.totalorder %s33, %s49
    %p51 = scmp.eq.s32.totalorder %s25, 0
    %p52 = por %p50, %p51
    %s54 = sadd.s32 %s53, 1
    %p57 = scmp.eq.s32.totalorder %s19, 1
    %p58 = scmp.ne.s32.totalorder %s53, %s55
    %p59 = scmp.eq.s32.totalorder %s19, 0
    %p60 = por %p58, %p59
    %p61 = scmp.ne.s32.totalorder %s53, %s55
    %p62 = scmp.eq.s32.totalorder %s24, 1
    %p63 = por %p61, %p62
    %p64 = scmp.ne.s32.totalorder %s55, %s56
    %p65 = scmp.eq.s32.totalorder %s24, 0
    %p66 = por %p64, %p65
    %p67 = scmp.ne.s32.totalorder %s55, %s56
    %p68 = scmp.eq.s32.totalorder %s25, 1
    %p69 = por %p67, %p68
    %p71 = scmp.ne.s32.totalorder %s56, %s70
    %p72 = scmp.eq.s32.totalorder %s25, 0
    %p73 = por %p71, %p72
    %s75 = sadd.s32 %s74, 1
    %p78 = scmp.eq.s32.totalorder %s19, 1
    %p79 = scmp.ne.s32.totalorder %s74, %s76
    %p80 = scmp.eq.s32.totalorder %s19, 0
    %p81 = por %p79, %p80
    %p82 = scmp.ne.s32.totalorder %s74, %s76
    %p83 = scmp.eq.s32.totalorder %s24, 1
    %p84 = por %p82, %p83
    %p85 = scmp.ne.s32.totalorder %s76, %s77
    %p86 = scmp.eq.s32.totalorder %s24, 0
    %p87 = por %p85, %p86
    %p88 = scmp.ne.s32.totalorder %s76, %s77
    %p89 = scmp.eq.s32.totalorder %s25, 1
    %p90 = por %p88, %p89
    %p92 = scmp.ne.s32.totalorder %s77, %s91
    %p93 = scmp.eq.s32.totalorder %s25, 0
    %p94 = por %p92, %p93
    %s96 = sadd.s32 %s95, 1
    %p99 = scmp.eq.s32.totalorder %s19, 1
    %p100 = scmp.ne.s32.totalorder %s95, %s97
    %p101 = scmp.eq.s32.totalorder %s19, 0
    %p102 = por %p100, %p101
    %p103 = scmp.ne.s32.totalorder %s95, %s97
    %p104 = scmp.eq.s32.totalorder %s24, 1
    %p105 = por %p103, %p104
    %p106 = scmp.ne.s32.totalorder %s97, %s98
    %p107 = scmp.eq.s32.totalorder %s24, 0
    %p108 = por %p106, %p107
    %p109 = scmp.ne.s32.totalorder %s97, %s98
    %p110 = scmp.eq.s32.totalorder %s25, 1
    %p111 = por %p109, %p110
    %p113 = scmp.ne.s32.totalorder %s98, %s112
    %p114 = scmp.eq.s32.totalorder %s25, 0
    %p115 = por %p113, %p114
    %s117 = sadd.s32 %s116, 1
    %p120 = scmp.eq.s32.totalorder %s19, 1
    %p121 = scmp.ne.s32.totalorder %s116, %s118
    %p122 = scmp.eq.s32.totalorder %s19, 0
    %p123 = por %p121, %p122
    %p124 = scmp.ne.s32.totalorder %s116, %s118
    %p125 = scmp.eq.s32.totalorder %s24, 1
    %p126 = por %p124, %p125
    %p127 = scmp.ne.s32.totalorder %s118, %s119
    %p128 = scmp.eq.s32.totalorder %s24, 0
    %p129 = por %p127, %p128
    %p130 = scmp.ne.s32.totalorder %s118, %s119
    %p131 = scmp.eq.s32.totalorder %s25, 1
    %p132 = por %p130, %p131
    %p134 = scmp.ne.s32.totalorder %s119, %s133
    %p135 = scmp.eq.s32.totalorder %s25, 0
    %p136 = por %p134, %p135
    %s138 = sadd.s32 %s137, 1
    %p141 = scmp.eq.s32.totalorder %s19, 1
    %p142 = scmp.ne.s32.totalorder %s137, %s139
    %p143 = scmp.eq.s32.totalorder %s19, 0
    %p144 = por %p142, %p143
    %p145 = scmp.ne.s32.totalorder %s137, %s139
    %p146 = scmp.eq.s32.totalorder %s24, 1
    %p147 = por %p145, %p146
    %p148 = scmp.ne.s32.totalorder %s139, %s140
    %p149 = scmp.eq.s32.totalorder %s24, 0
    %p150 = por %p148, %p149
    %p151 = scmp.ne.s32.totalorder %s139, %s140
    %p152 = scmp.eq.s32.totalorder %s25, 1
    %p153 = por %p151, %p152
    %p155 = scmp.ne.s32.totalorder %s140, %s154
    %p156 = scmp.eq.s32.totalorder %s25, 0
    %p157 = por %p155, %p156
    %s159 = sadd.s32 %s158, 1
    %p162 = scmp.eq.s32.totalorder %s19, 1
    %p163 = scmp.ne.s32.totalorder %s158, %s160
    %p164 = scmp.eq.s32.totalorder %s19, 0
    %p165 = por %p163, %p164
    %p166 = scmp.ne.s32.totalorder %s158, %s160
    %p167 = scmp.eq.s32.totalorder %s24, 1
    %p168 = por %p166, %p167
    %p169 = scmp.ne.s32.totalorder %s160, %s161
    %p170 = scmp.eq.s32.totalorder %s24, 0
    %p171 = por %p169, %p170
    %p172 = scmp.ne.s32.totalorder %s160, %s161
    %p173 = scmp.eq.s32.totalorder %s25, 1
    %p174 = por %p172, %p173
    %p176 = scmp.ne.s32.totalorder %s161, %s175
    %p177 = scmp.eq.s32.totalorder %s25, 0
    %p178 = por %p176, %p177
    %s180 = sadd.s32 %s179, 1
    %p183 = scmp.eq.s32.totalorder %s19, 1
    %p184 = scmp.ne.s32.totalorder %s179, %s181
    %p185 = scmp.eq.s32.totalorder %s19, 0
    %p186 = por %p184, %p185
    %p187 = scmp.ne.s32.totalorder %s179, %s181
    %p188 = scmp.eq.s32.totalorder %s24, 1
    %p189 = por %p187, %p188
    %p190 = scmp.ne.s32.totalorder %s181, %s182
    %p191 = scmp.eq.s32.totalorder %s24, 0
    %p192 = por %p190, %p191
    %p193 = scmp.ne.s32.totalorder %s181, %s182
    %p194 = scmp.eq.s32.totalorder %s25, 1
    %p195 = por %p193, %p194
    %p197 = scmp.ne.s32.totalorder %s182, %s196
    %p198 = scmp.eq.s32.totalorder %s25, 0
    %p199 = por %p197, %p198
    %s201 = sadd.s32 %s200, 1
    %p204 = scmp.eq.s32.totalorder %s19, 1
    %p205 = scmp.ne.s32.totalorder %s200, %s202
    %p206 = scmp.eq.s32.totalorder %s19, 0
    %p207 = por %p205, %p206
    %p208 = scmp.ne.s32.totalorder %s200, %s202
    %p209 = scmp.eq.s32.totalorder %s24, 1
    %p210 = por %p208, %p209
    %p211 = scmp.ne.s32.totalorder %s202, %s203
    %p212 = scmp.eq.s32.totalorder %s24, 0
    %p213 = por %p211, %p212
    %p214 = scmp.ne.s32.totalorder %s202, %s203
    %p215 = scmp.eq.s32.totalorder %s25, 1
    %p216 = por %p214, %p215
    %p218 = scmp.ne.s32.totalorder %s203, %s217
    %p219 = scmp.eq.s32.totalorder %s25, 0
    %p220 = por %p218, %p219
    %s222 = sadd.s32 %s221, 1
    %p225 = scmp.eq.s32.totalorder %s19, 1
    %p226 = scmp.ne.s32.totalorder %s221, %s223
    %p227 = scmp.eq.s32.totalorder %s19, 0
    %p228 = por %p226, %p227
    %p229 = scmp.ne.s32.totalorder %s221, %s223
    %p230 = scmp.eq.s32.totalorder %s24, 1
    %p231 = por %p229, %p230
    %p232 = scmp.ne.s32.totalorder %s223, %s224
    %p233 = scmp.eq.s32.totalorder %s24, 0
    %p234 = por %p232, %p233
    %p235 = scmp.ne.s32.totalorder %s223, %s224
    %p236 = scmp.eq.s32.totalorder %s25, 1
    %p237 = por %p235, %p236
    %p239 = scmp.ne.s32.totalorder %s224, %s238
    %p240 = scmp.eq.s32.totalorder %s25, 0
    %p241 = por %p239, %p240
    %s243 = sadd.s32 %s242, 1
    %p246 = scmp.eq.s32.totalorder %s19, 1
    %p247 = scmp.ne.s32.totalorder %s242, %s244
    %p248 = scmp.eq.s32.totalorder %s19, 0
    %p249 = por %p247, %p248
    %p250 = scmp.ne.s32.totalorder %s242, %s244
    %p251 = scmp.eq.s32.totalorder %s24, 1
    %p252 = por %p250, %p251
    %p253 = scmp.ne.s32.totalorder %s244, %s245
    %p254 = scmp.eq.s32.totalorder %s24, 0
    %p255 = por %p253, %p254
    %p256 = scmp.ne.s32.totalorder %s244, %s245
    %p257 = scmp.eq.s32.totalorder %s25, 1
    %p258 = por %p256, %p257
    %p260 = scmp.ne.s32.totalorder %s245, %s259
    %p261 = scmp.eq.s32.totalorder %s25, 0
    %p262 = por %p260, %p261
    %s264 = sadd.s32 %s263, 1
    %p267 = scmp.eq.s32.totalorder %s19, 1
    %p268 = scmp.ne.s32.totalorder %s263, %s265
    %p269 = scmp.eq.s32.totalorder %s19, 0
    %p270 = por %p268, %p269
    %p271 = scmp.ne.s32.totalorder %s263, %s265
    %p272 = scmp.eq.s32.totalorder %s24, 1
    %p273 = por %p271, %p272
    %p274 = scmp.ne.s32.totalorder %s265, %s266
    %p275 = scmp.eq.s32.totalorder %s24, 0
    %p276 = por %p274, %p275
    %p277 = scmp.ne.s32.totalorder %s265, %s266
    %p278 = scmp.eq.s32.totalorder %s25, 1
    %p279 = por %p277, %p278
    %p281 = scmp.ne.s32.totalorder %s266, %s280
    %p282 = scmp.eq.s32.totalorder %s25, 0
    %p283 = por %p281, %p282
    %s285 = sadd.s32 %s284, 1
    %p288 = scmp.eq.s32.totalorder %s19, 1
    %p289 = scmp.ne.s32.totalorder %s284, %s286
    %p290 = scmp.eq.s32.totalorder %s19, 0
    %p291 = por %p289, %p290
    %p292 = scmp.ne.s32.totalorder %s284, %s286
    %p293 = scmp.eq.s32.totalorder %s24, 1
    %p294 = por %p292, %p293
    %p295 = scmp.ne.s32.totalorder %s286, %s287
    %p296 = scmp.eq.s32.totalorder %s24, 0
    %p297 = por %p295, %p296
    %p298 = scmp.ne.s32.totalorder %s286, %s287
    %p299 = scmp.eq.s32.totalorder %s25, 1
    %p300 = por %p298, %p299
    %p302 = scmp.ne.s32.totalorder %s287, %s301
    %p303 = scmp.eq.s32.totalorder %s25, 0
    %p304 = por %p302, %p303
    %s305 = ssub.s32 %s19, %s26
    %p306 = scmp.eq.s32.totalorder %s305, 0
    %s308 = sadd.s32 %s307, 1
    %s309 = scalar_select %p306, %s307, %s308
    %p312 = pneg %p306
    %p313 = scmp.eq.s32.totalorder %s19, 1
    %p314 = por %p312, %p313
    %p315 = scmp.ne.s32.totalorder %s307, %s310
    %p316 = scmp.eq.s32.totalorder %s19, 0
    %p317 = por %p315, %p316
    %p318 = scmp.ne.s32.totalorder %s307, %s310
    %p319 = scmp.eq.s32.totalorder %s24, 1
    %p320 = por %p318, %p319
    %p321 = scmp.ne.s32.totalorder %s310, %s311
    %p322 = scmp.eq.s32.totalorder %s24, 0
    %p323 = por %p321, %p322
    %p324 = scmp.ne.s32.totalorder %s310, %s311
    %p325 = scmp.eq.s32.totalorder %s25, 1
    %p326 = por %p324, %p325
    %p328 = scmp.ne.s32.totalorder %s311, %s327
    %p329 = scmp.eq.s32.totalorder %s25, 0
    %p330 = por %p328, %p329
    %p331 = scmp.le.s32.totalorder 1, %s19
    %p332 = scmp.lt.s32.totalorder %s19, 3
    %p333 = pnand %p331, %p332
    %p334 = pneg %p333
    // Predicated region
    $region9: #{bottleneck_forward.1} parent=5 // pred_check
      _
    $region10: #{bottleneck_forward.1} parent=5 // pred_check_branch
      %336 = sbr.rel (%p333) target = $region12
    $region11: #{bottleneck_forward.1} parent=5 // pred_region
      %s337 = ssub.s32 %s19, 1
      // Predicated region
      $region13: #{bottleneck_forward.1} parent=11 // pred_check
        %p338 = pneg %p66
      $region14: #{bottleneck_forward.1} parent=11 // pred_check_branch
        %340 = sbr.rel (%p338) target = $region16
      $region15: #{bottleneck_forward.1} parent=11 // pred_region
        _
      $region16: #{bottleneck_forward.1} parent=11 // pred_fallthru
        _
      // Predicated region
      $region17: #{bottleneck_forward.1} parent=11 // pred_check
        %p341 = pneg %p87
      $region18: #{bottleneck_forward.1} parent=11 // pred_check_branch
        %343 = sbr.rel (%p341) target = $region20
      $region19: #{bottleneck_forward.1} parent=11 // pred_region
        _
      $region20: #{bottleneck_forward.1} parent=11 // pred_fallthru
        _
      // Predicated region
      $region21: #{bottleneck_forward.1} parent=11 // pred_check
        %p344 = pneg %p108
      $region22: #{bottleneck_forward.1} parent=11 // pred_check_branch
        %346 = sbr.rel (%p344) target = $region24
      $region23: #{bottleneck_forward.1} parent=11 // pred_region
        _
      $region24: #{bottleneck_forward.1} parent=11 // pred_fallthru
        _
      // Predicated region
      $region25: #{bottleneck_forward.1} parent=11 // pred_check
        %p347 = pneg %p129
      $region26: #{bottleneck_forward.1} parent=11 // pred_check_branch
        %349 = sbr.rel (%p347) target = $region28
      $region27: #{bottleneck_forward.1} parent=11 // pred_region
        _
      $region28: #{bottleneck_forward.1} parent=11 // pred_fallthru
        _
      // Predicated region
      $region29: #{bottleneck_forward.1} parent=11 // pred_check
        %p350 = pneg %p150
      $region30: #{bottleneck_forward.1} parent=11 // pred_check_branch
        %352 = sbr.rel (%p350) target = $region32
      $region31: #{bottleneck_forward.1} parent=11 // pred_region
        _
      $region32: #{bottleneck_forward.1} parent=11 // pred_fallthru
        _
      // Predicated region
      $region33: #{bottleneck_forward.1} parent=11 // pred_check
        %p353 = pneg %p171
      $region34: #{bottleneck_forward.1} parent=11 // pred_check_branch
        %355 = sbr.rel (%p353) target = $region36
      $region35: #{bottleneck_forward.1} parent=11 // pred_region
        _
      $region36: #{bottleneck_forward.1} parent=11 // pred_fallthru
        _
      // Predicated region
      $region37: #{bottleneck_forward.1} parent=11 // pred_check
        %p356 = pneg %p192
      $region38: #{bottleneck_forward.1} parent=11 // pred_check_branch
        %358 = sbr.rel (%p356) target = $region40
      $region39: #{bottleneck_forward.1} parent=11 // pred_region
        _
      $region40: #{bottleneck_forward.1} parent=11 // pred_fallthru
        _
      // Predicated region
      $region41: #{bottleneck_forward.1} parent=11 // pred_check
        %p359 = pneg %p213
      $region42: #{bottleneck_forward.1} parent=11 // pred_check_branch
        %361 = sbr.rel (%p359) target = $region44
      $region43: #{bottleneck_forward.1} parent=11 // pred_region
        _
      $region44: #{bottleneck_forward.1} parent=11 // pred_fallthru
        _
      // Predicated region
      $region45: #{bottleneck_forward.1} parent=11 // pred_check
        %p362 = pneg %p234
      $region46: #{bottleneck_forward.1} parent=11 // pred_check_branch
        %364 = sbr.rel (%p362) target = $region48
      $region47: #{bottleneck_forward.1} parent=11 // pred_region
        _
      $region48: #{bottleneck_forward.1} parent=11 // pred_fallthru
        _
      // Predicated region
      $region49: #{bottleneck_forward.1} parent=11 // pred_check
        %p365 = pneg %p255
      $region50: #{bottleneck_forward.1} parent=11 // pred_check_branch
        %367 = sbr.rel (%p365) target = $region52
      $region51: #{bottleneck_forward.1} parent=11 // pred_region
        _
      $region52: #{bottleneck_forward.1} parent=11 // pred_fallthru
        _
      // Predicated region
      $region53: #{bottleneck_forward.1} parent=11 // pred_check
        %p368 = pneg %p276
      $region54: #{bottleneck_forward.1} parent=11 // pred_check_branch
        %370 = sbr.rel (%p368) target = $region56
      $region55: #{bottleneck_forward.1} parent=11 // pred_region
        _
      $region56: #{bottleneck_forward.1} parent=11 // pred_fallthru
        _
      // Predicated region
      $region57: #{bottleneck_forward.1} parent=11 // pred_check
        %p371 = pneg %p297
      $region58: #{bottleneck_forward.1} parent=11 // pred_check_branch
        %373 = sbr.rel (%p371) target = $region60
      $region59: #{bottleneck_forward.1} parent=11 // pred_region
        _
      $region60: #{bottleneck_forward.1} parent=11 // pred_fallthru
        _
    $region12: #{bottleneck_forward.1} parent=5 // pred_fallthru
      _
    %p374 = scmp.lt.s32.totalorder %s19, 2
    // Predicated region
    $region61: #{bottleneck_forward.1} parent=5 // pred_check
      %p375 = pneg %p374
    $region62: #{bottleneck_forward.1} parent=5 // pred_check_branch
      %377 = sbr.rel (%p375) target = $region64
    $region63: #{bottleneck_forward.1} parent=5 // pred_region
      // Predicated region
      $region65: #{bottleneck_forward.1} parent=63 // pred_check
        %p378 = pneg %p39
      $region66: #{bottleneck_forward.1} parent=63 // pred_check_branch
        %380 = sbr.rel (%p378) target = $region68
      $region67: #{bottleneck_forward.1} parent=63 // pred_region
        %p381 = scmp.lt.s32.totalorder %s19, 1
        %s382 = scalar_select %p381, %s19, 1
        %s383 = smul.addr %s382, 32
        %s384 = smul.addr %s383, 4
        %s385 = scalar_lea.vmem %s0, %s384
      $region68: #{bottleneck_forward.1} parent=63 // pred_fallthru
        _
    $region64: #{bottleneck_forward.1} parent=5 // pred_fallthru
      _
    %p386 = scmp.le.s32.totalorder 1, %s19
    %p387 = scmp.lt.s32.totalorder %s19, 3
    %p388 = pnand %p386, %p387
    %p389 = pneg %p388
    // Predicated region
    $region69: #{bottleneck_forward.1} parent=5 // pred_check
      _
    $region70: #{bottleneck_forward.1} parent=5 // pred_check_branch
      %391 = sbr.rel (%p388) target = $region72
    $region71: #{bottleneck_forward.1} parent=5 // pred_region
      %s392 = ssub.s32 %s19, 1
      %p393 = scmp.lt.s32.totalorder %s24, 1
      %s394 = scalar_select %p393, %s24, 1
      %s395 = smul.addr %s394, 32
      %s396 = smul.addr %s395, 4
      %s397 = scalar_lea.vmem %s0, %s396
      %p398 = pneg %p45
      %p399 = pneg %p42
      %p400 = pneg %p66
      %p401 = pneg %p63
      %p402 = pneg %p87
      %p403 = pneg %p84
      %p404 = pneg %p108
      %p405 = pneg %p105
      %p406 = pneg %p129
      %p407 = pneg %p126
      %p408 = pneg %p150
      %p409 = pneg %p147
      %p410 = pneg %p171
      %p411 = pneg %p168
      %p412 = pneg %p192
      %p413 = pneg %p189
      %p414 = pneg %p213
      %p415 = pneg %p210
      %p416 = pneg %p234
      %p417 = pneg %p231
      %p418 = pneg %p255
      %p419 = pneg %p252
      %p420 = pneg %p276
      %p421 = pneg %p273
      %p422 = pneg %p297
      %p423 = pneg %p294
      %p424 = pneg %p323
      %p425 = pneg %p320
      %p426 = scmp.lt.s32.totalorder %s24, 1
      %s427 = scalar_select %p426, %s24, 1
      %s428 = smul.addr %s427, 32
      %s429 = smul.addr %s428, 4
      %s430 = scalar_lea.vmem %s13, %s429
      %p431 = scmp.lt.s32.totalorder %s24, 1
      %s432 = scalar_select %p431, %s24, 1
      %s433 = smul.addr %s432, 32
      %s434 = smul.addr %s433, 4
      %s435 = scalar_lea.vmem %s0, %s434
      %p436 = scmp.lt.s32.totalorder %s24, 1
      %s437 = scalar_select %p436, %s24, 1
      %s438 = smul.addr %s437, 32
      %s439 = smul.addr %s438, 4
      %s440 = scalar_lea.vmem %s13, %s439
      %v442 = vld [vmem:[%s435] sm:$0xf]
      %v443 = vld [vmem:[%s435 + $0x4] sm:$0xf]
      %v444 = vld [vmem:[%s435 + $0x8] sm:$0xf]
      %v445 = vld [vmem:[%s435 + $0xc] sm:$0xf]
      %v446 = vld [vmem:[%s435 + $0x10] sm:$0xf]
      %v447 = vld [vmem:[%s435 + $0x14] sm:$0xf]
      %v448 = vld [vmem:[%s435 + $0x18] sm:$0xf]
      %v449 = vld [vmem:[%s435 + $0x1c] sm:$0xf]
      %v450 = vld [vmem:[%s435 + $0x20] sm:$0xf]
      %v451 = vld [vmem:[%s435 + $0x24] sm:$0xf]
      %v452 = vld [vmem:[%s435 + $0x28] sm:$0xf]
      %v453 = vld [vmem:[%s435 + $0x2c] sm:$0xf]
      %v454 = vld [vmem:[%s435 + $0x30] sm:$0xf]
      %v455 = vld [vmem:[%s435 + $0x34] sm:$0xf]
      %v456 = vld [vmem:[%s435 + $0x38] sm:$0xf]
      %v457 = vld [vmem:[%s435 + $0x3c] sm:$0xf]
      %v458 = vld [vmem:[%s435 + $0x40] sm:$0xf]
      %v459 = vld [vmem:[%s435 + $0x44] sm:$0xf]
      %v460 = vld [vmem:[%s435 + $0x48] sm:$0xf]
      %v461 = vld [vmem:[%s435 + $0x4c] sm:$0xf]
      %v462 = vld [vmem:[%s435 + $0x50] sm:$0xf]
      %v463 = vld [vmem:[%s435 + $0x54] sm:$0xf]
      %v464 = vld [vmem:[%s435 + $0x58] sm:$0xf]
      %v465 = vld [vmem:[%s435 + $0x5c] sm:$0xf]
      %v466 = vld [vmem:[%s435 + $0x60] sm:$0xf]
      %v467 = vld [vmem:[%s435 + $0x64] sm:$0xf]
      %v468 = vld [vmem:[%s435 + $0x68] sm:$0xf]
      %v469 = vld [vmem:[%s435 + $0x6c] sm:$0xf]
      %v470 = vld [vmem:[%s435 + $0x70] sm:$0xf]
      %v471 = vld [vmem:[%s435 + $0x74] sm:$0xf]
      %v472 = vld [vmem:[%s435 + $0x78] sm:$0xf]
      %v473 = vld [vmem:[%s435 + $0x7c] sm:$0xf]
      %v474 = vld [vmem:[%s10] sm:$0xf]
      %v475 = vld [vmem:[%s10 + $0x4] sm:$0xf]
      %v476 = vld [vmem:[%s10 + $0x8] sm:$0xf]
      %v477 = vld [vmem:[%s10 + $0xc] sm:$0xf]
      %v478 = vld [vmem:[%s10 + $0x10] sm:$0xf]
      %v479 = vld [vmem:[%s10 + $0x14] sm:$0xf]
      %v480 = vld [vmem:[%s10 + $0x18] sm:$0xf]
      %v481 = vld [vmem:[%s10 + $0x1c] sm:$0xf]
      %v482 = vld [vmem:[%s10 + $0x20] sm:$0xf]
      %v483 = vld [vmem:[%s10 + $0x24] sm:$0xf]
      %v484 = vld [vmem:[%s10 + $0x28] sm:$0xf]
      %v485 = vld [vmem:[%s10 + $0x2c] sm:$0xf]
      %v486 = vld [vmem:[%s10 + $0x30] sm:$0xf]
      %v487 = vld [vmem:[%s10 + $0x34] sm:$0xf]
      %v488 = vld [vmem:[%s10 + $0x38] sm:$0xf]
      %v489 = vld [vmem:[%s10 + $0x3c] sm:$0xf]
      %v522 = vunpack.c.l.b16 %v442
      %v523 = vunpack.c.l.b16 %v443
      %v524 = vunpack.c.l.b16 %v444
      %v525 = vunpack.c.l.b16 %v445
      %v526 = vunpack.c.l.b16 %v446
      %v527 = vunpack.c.l.b16 %v447
      %v528 = vunpack.c.l.b16 %v448
      %v529 = vunpack.c.l.b16 %v449
      %v530 = vunpack.c.l.b16 %v450
      %v531 = vunpack.c.l.b16 %v451
      %v532 = vunpack.c.l.b16 %v452
      %v533 = vunpack.c.l.b16 %v453
      %v534 = vunpack.c.l.b16 %v454
      %v535 = vunpack.c.l.b16 %v455
      %v536 = vunpack.c.l.b16 %v456
      %v537 = vunpack.c.l.b16 %v457
      %v538 = vunpack.c.l.b16 %v458
      %v539 = vunpack.c.l.b16 %v459
      %v540 = vunpack.c.l.b16 %v460
      %v541 = vunpack.c.l.b16 %v461
      %v542 = vunpack.c.l.b16 %v462
      %v543 = vunpack.c.l.b16 %v463
      %v544 = vunpack.c.l.b16 %v464
      %v545 = vunpack.c.l.b16 %v465
      %v546 = vunpack.c.l.b16 %v466
      %v547 = vunpack.c.l.b16 %v467
      %v548 = vunpack.c.l.b16 %v468
      %v549 = vunpack.c.l.b16 %v469
      %v550 = vunpack.c.l.b16 %v470
      %v551 = vunpack.c.l.b16 %v471
      %v552 = vunpack.c.l.b16 %v472
      %v553 = vunpack.c.l.b16 %v473
      %v554 = vpack.c.b16 %v523, %v522
      %v555 = vpack.c.b16 %v525, %v524
      %v556 = vpack.c.b16 %v527, %v526
      %v557 = vpack.c.b16 %v529, %v528
      %v558 = vpack.c.b16 %v531, %v530
      %v559 = vpack.c.b16 %v533, %v532
      %v560 = vpack.c.b16 %v535, %v534
      %v561 = vpack.c.b16 %v537, %v536
      %v562 = vpack.c.b16 %v539, %v538
      %v563 = vpack.c.b16 %v541, %v540
      %v564 = vpack.c.b16 %v543, %v542
      %v565 = vpack.c.b16 %v545, %v544
      %v566 = vpack.c.b16 %v547, %v546
      %v567 = vpack.c.b16 %v549, %v548
      %v568 = vpack.c.b16 %v551, %v550
      %v569 = vpack.c.b16 %v553, %v552
      %v602 = vunpack.c.l.b16 %v474
      %v603 = vunpack.c.l.b16 %v475
      %v604 = vunpack.c.l.b16 %v476
      %v605 = vunpack.c.l.b16 %v477
      %v606 = vunpack.c.l.b16 %v478
      %v607 = vunpack.c.l.b16 %v479
      %v608 = vunpack.c.l.b16 %v480
      %v609 = vunpack.c.l.b16 %v481
      %v610 = vunpack.c.l.b16 %v482
      %v611 = vunpack.c.l.b16 %v483
      %v612 = vunpack.c.l.b16 %v484
      %v613 = vunpack.c.l.b16 %v485
      %v614 = vunpack.c.l.b16 %v486
      %v615 = vunpack.c.l.b16 %v487
      %v616 = vunpack.c.l.b16 %v488
      %v617 = vunpack.c.l.b16 %v489
      %v618 = vpack.c.b16 %v603, %v602
      %v619 = vpack.c.b16 %v605, %v604
      %v620 = vpack.c.b16 %v607, %v606
      %v621 = vpack.c.b16 %v609, %v608
      %v622 = vpack.c.b16 %v611, %v610
      %v623 = vpack.c.b16 %v613, %v612
      %v624 = vpack.c.b16 %v615, %v614
      %v625 = vpack.c.b16 %v617, %v616
      %634 = vmatpush.bf16.msra.mxu0 %v625
      %635 = vmatpush.bf16.msra.mxu0 %v624
      %636 = vmatpush.bf16.msra.mxu0 %v623
      %637 = vmatpush.bf16.msra.mxu0 %v622
      %638 = vmatpush.bf16.msra.mxu0 %v621
      %639 = vmatpush.bf16.msra.mxu0 %v620
      %640 = vmatpush.bf16.msra.mxu0 %v619
      %641 = vmatpush.bf16.msra.mxu0 %v618
      %642 = vmatmul.bf16.gmra.mxu0 %v554
      %v643 = vpop.f32.mrf.mxu0
      %v644 = vadd.f32 0.0, %v643
      %v645 = vpop.f32.mrf.mxu0
      %v646 = vadd.f32 0.0, %v645
      %647 = vmatmul.bf16.gmra.mxu0 %v555
      %v648 = vpop.f32.mrf.mxu0
      %v649 = vadd.f32 0.0, %v648
      %v650 = vpop.f32.mrf.mxu0
      %v651 = vadd.f32 0.0, %v650
      %652 = vmatmul.bf16.gmra.mxu0 %v556
      %v653 = vpop.f32.mrf.mxu0
      %v654 = vadd.f32 0.0, %v653
      %v655 = vpop.f32.mrf.mxu0
      %v656 = vadd.f32 0.0, %v655
      %657 = vmatmul.bf16.gmra.mxu0 %v557
      %v658 = vpop.f32.mrf.mxu0
      %v659 = vadd.f32 0.0, %v658
      %v660 = vpop.f32.mrf.mxu0
      %v661 = vadd.f32 0.0, %v660
      %662 = vmatmul.bf16.gmra.mxu0 %v558
      %v663 = vpop.f32.mrf.mxu0
      %v664 = vadd.f32 0.0, %v663
      %v665 = vpop.f32.mrf.mxu0
      %v666 = vadd.f32 0.0, %v665
      %667 = vmatmul.bf16.gmra.mxu0 %v559
      %v668 = vpop.f32.mrf.mxu0
      %v669 = vadd.f32 0.0, %v668
      %v670 = vpop.f32.mrf.mxu0
      %v671 = vadd.f32 0.0, %v670
      %672 = vmatmul.bf16.gmra.mxu0 %v560
      %v673 = vpop.f32.mrf.mxu0
      %v674 = vadd.f32 0.0, %v673
      %v675 = vpop.f32.mrf.mxu0
      %v676 = vadd.f32 0.0, %v675
      %677 = vmatmul.bf16.gmra.mxu0 %v561
      %v678 = vpop.f32.mrf.mxu0
      %v679 = vadd.f32 0.0, %v678
      %v680 = vpop.f32.mrf.mxu0
      %v681 = vadd.f32 0.0, %v680
      %682 = vmatmul.bf16.gmra.mxu0 %v562
      %v683 = vpop.f32.mrf.mxu0
      %v684 = vadd.f32 0.0, %v683
      %v685 = vpop.f32.mrf.mxu0
      %v686 = vadd.f32 0.0, %v685
      %687 = vmatmul.bf16.gmra.mxu0 %v563
      %v688 = vpop.f32.mrf.mxu0
      %v689 = vadd.f32 0.0, %v688
      %v690 = vpop.f32.mrf.mxu0
      %v691 = vadd.f32 0.0, %v690
      %692 = vmatmul.bf16.gmra.mxu0 %v564
      %v693 = vpop.f32.mrf.mxu0
      %v694 = vadd.f32 0.0, %v693
      %v695 = vpop.f32.mrf.mxu0
      %v696 = vadd.f32 0.0, %v695
      %697 = vmatmul.bf16.gmra.mxu0 %v565
      %v698 = vpop.f32.mrf.mxu0
      %v699 = vadd.f32 0.0, %v698
      %v700 = vpop.f32.mrf.mxu0
      %v701 = vadd.f32 0.0, %v700
      %702 = vmatmul.bf16.gmra.mxu0 %v566
      %v703 = vpop.f32.mrf.mxu0
      %v704 = vadd.f32 0.0, %v703
      %v705 = vpop.f32.mrf.mxu0
      %v706 = vadd.f32 0.0, %v705
      %707 = vmatmul.bf16.gmra.mxu0 %v567
      %v708 = vpop.f32.mrf.mxu0
      %v709 = vadd.f32 0.0, %v708
      %v710 = vpop.f32.mrf.mxu0
      %v711 = vadd.f32 0.0, %v710
      %712 = vmatmul.bf16.gmra.mxu0 %v568
      %v713 = vpop.f32.mrf.mxu0
      %v714 = vadd.f32 0.0, %v713
      %v715 = vpop.f32.mrf.mxu0
      %v716 = vadd.f32 0.0, %v715
      %717 = vmatmul.bf16.gmra.mxu0 %v569
      %v718 = vpop.f32.mrf.mxu0
      %v719 = vadd.f32 0.0, %v718
      %v720 = vpop.f32.mrf.mxu0
      %v721 = vadd.f32 0.0, %v720
      %722 = vdwg.mxu0
      %v723 = vld [vmem:[%s11] sm:$0x1]
      %v725 = vperm.slane %v723, 0
      %v727 = vmul.f32 %v644, %v725
      %v728 = vmul.f32 %v646, %v725
      %v729 = vmul.f32 %v649, %v725
      %v730 = vmul.f32 %v651, %v725
      %v731 = vmul.f32 %v654, %v725
      %v732 = vmul.f32 %v656, %v725
      %v733 = vmul.f32 %v659, %v725
      %v734 = vmul.f32 %v661, %v725
      %v735 = vmul.f32 %v664, %v725
      %v736 = vmul.f32 %v666, %v725
      %v737 = vmul.f32 %v669, %v725
      %v738 = vmul.f32 %v671, %v725
      %v739 = vmul.f32 %v674, %v725
      %v740 = vmul.f32 %v676, %v725
      %v741 = vmul.f32 %v679, %v725
      %v742 = vmul.f32 %v681, %v725
      %v743 = vmul.f32 %v684, %v725
      %v744 = vmul.f32 %v686, %v725
      %v745 = vmul.f32 %v689, %v725
      %v746 = vmul.f32 %v691, %v725
      %v747 = vmul.f32 %v694, %v725
      %v748 = vmul.f32 %v696, %v725
      %v749 = vmul.f32 %v699, %v725
      %v750 = vmul.f32 %v701, %v725
      %v751 = vmul.f32 %v704, %v725
      %v752 = vmul.f32 %v706, %v725
      %v753 = vmul.f32 %v709, %v725
      %v754 = vmul.f32 %v711, %v725
      %v755 = vmul.f32 %v714, %v725
      %v756 = vmul.f32 %v716, %v725
      %v757 = vmul.f32 %v719, %v725
      %v758 = vmul.f32 %v721, %v725
      %v759 = vld [vmem:[%s12] sm:$0x1]
      %v761 = vperm.slane %v759, 0
      %v763 = vadd.f32 %v727, %v761
      %v764 = vadd.f32 %v728, %v761
      %v765 = vadd.f32 %v729, %v761
      %v766 = vadd.f32 %v730, %v761
      %v767 = vadd.f32 %v731, %v761
      %v768 = vadd.f32 %v732, %v761
      %v769 = vadd.f32 %v733, %v761
      %v770 = vadd.f32 %v734, %v761
      %v771 = vadd.f32 %v735, %v761
      %v772 = vadd.f32 %v736, %v761
      %v773 = vadd.f32 %v737, %v761
      %v774 = vadd.f32 %v738, %v761
      %v775 = vadd.f32 %v739, %v761
      %v776 = vadd.f32 %v740, %v761
      %v777 = vadd.f32 %v741, %v761
      %v778 = vadd.f32 %v742, %v761
      %v779 = vadd.f32 %v743, %v761
      %v780 = vadd.f32 %v744, %v761
      %v781 = vadd.f32 %v745, %v761
      %v782 = vadd.f32 %v746, %v761
      %v783 = vadd.f32 %v747, %v761
      %v784 = vadd.f32 %v748, %v761
      %v785 = vadd.f32 %v749, %v761
      %v786 = vadd.f32 %v750, %v761
      %v787 = vadd.f32 %v751, %v761
      %v788 = vadd.f32 %v752, %v761
      %v789 = vadd.f32 %v753, %v761
      %v790 = vadd.f32 %v754, %v761
      %v791 = vadd.f32 %v755, %v761
      %v792 = vadd.f32 %v756, %v761
      %v793 = vadd.f32 %v757, %v761
      %v794 = vadd.f32 %v758, %v761
      %v795 = vld [vmem:[%s1] sm:$0xf]
      %v796 = vld [vmem:[%s1 + $0x4] sm:$0xf]
      %v797 = vld [vmem:[%s1 + $0x8] sm:$0xf]
      %v798 = vld [vmem:[%s1 + $0xc] sm:$0xf]
      %v799 = vld [vmem:[%s1 + $0x10] sm:$0xf]
      %v800 = vld [vmem:[%s1 + $0x14] sm:$0xf]
      %v801 = vld [vmem:[%s1 + $0x18] sm:$0xf]
      %v802 = vld [vmem:[%s1 + $0x1c] sm:$0xf]
      %v803 = vld [vmem:[%s1 + $0x20] sm:$0xf]
      %v804 = vld [vmem:[%s1 + $0x24] sm:$0xf]
      %v805 = vld [vmem:[%s1 + $0x28] sm:$0xf]
      %v806 = vld [vmem:[%s1 + $0x2c] sm:$0xf]
      %v807 = vld [vmem:[%s1 + $0x30] sm:$0xf]
      %v808 = vld [vmem:[%s1 + $0x34] sm:$0xf]
      %v809 = vld [vmem:[%s1 + $0x38] sm:$0xf]
      %v810 = vld [vmem:[%s1 + $0x3c] sm:$0xf]
      %v827 = vunpack.c.l.b16 %v795
      %v828 = vunpack.c.l.b16 %v796
      %v829 = vunpack.c.l.b16 %v797
      %v830 = vunpack.c.l.b16 %v798
      %v831 = vunpack.c.l.b16 %v799
      %v832 = vunpack.c.l.b16 %v800
      %v833 = vunpack.c.l.b16 %v801
      %v834 = vunpack.c.l.b16 %v802
      %v835 = vunpack.c.l.b16 %v803
      %v836 = vunpack.c.l.b16 %v804
      %v837 = vunpack.c.l.b16 %v805
      %v838 = vunpack.c.l.b16 %v806
      %v839 = vunpack.c.l.b16 %v807
      %v840 = vunpack.c.l.b16 %v808
      %v841 = vunpack.c.l.b16 %v809
      %v842 = vunpack.c.l.b16 %v810
      %v843 = vpack.c.b16 %v828, %v827
      %v844 = vpack.c.b16 %v830, %v829
      %v845 = vpack.c.b16 %v832, %v831
      %v846 = vpack.c.b16 %v834, %v833
      %v847 = vpack.c.b16 %v836, %v835
      %v848 = vpack.c.b16 %v838, %v837
      %v849 = vpack.c.b16 %v840, %v839
      %v850 = vpack.c.b16 %v842, %v841
      %859 = vmatpush.bf16.msra.mxu0 %v850
      %860 = vmatpush.bf16.msra.mxu0 %v849
      %861 = vmatpush.bf16.msra.mxu0 %v848
      %862 = vmatpush.bf16.msra.mxu0 %v847
      %863 = vmatpush.bf16.msra.mxu0 %v846
      %864 = vmatpush.bf16.msra.mxu0 %v845
      %865 = vmatpush.bf16.msra.mxu0 %v844
      %866 = vmatpush.bf16.msra.mxu0 %v843
      %867 = vmatmul.bf16.gmra.mxu0 %v554
      %v868 = vpop.f32.mrf.mxu0
      %v869 = vadd.f32 0.0, %v868
      %v870 = vpop.f32.mrf.mxu0
      %v871 = vadd.f32 0.0, %v870
      %872 = vmatmul.bf16.gmra.mxu0 %v555
      %v873 = vpop.f32.mrf.mxu0
      %v874 = vadd.f32 0.0, %v873
      %v875 = vpop.f32.mrf.mxu0
      %v876 = vadd.f32 0.0, %v875
      %877 = vmatmul.bf16.gmra.mxu0 %v556
      %v878 = vpop.f32.mrf.mxu0
      %v879 = vadd.f32 0.0, %v878
      %v880 = vpop.f32.mrf.mxu0
      %v881 = vadd.f32 0.0, %v880
      %882 = vmatmul.bf16.gmra.mxu0 %v557
      %v883 = vpop.f32.mrf.mxu0
      %v884 = vadd.f32 0.0, %v883
      %v885 = vpop.f32.mrf.mxu0
      %v886 = vadd.f32 0.0, %v885
      %887 = vmatmul.bf16.gmra.mxu0 %v558
      %v888 = vpop.f32.mrf.mxu0
      %v889 = vadd.f32 0.0, %v888
      %v890 = vpop.f32.mrf.mxu0
      %v891 = vadd.f32 0.0, %v890
      %892 = vmatmul.bf16.gmra.mxu0 %v559
      %v893 = vpop.f32.mrf.mxu0
      %v894 = vadd.f32 0.0, %v893
      %v895 = vpop.f32.mrf.mxu0
      %v896 = vadd.f32 0.0, %v895
      %897 = vmatmul.bf16.gmra.mxu0 %v560
      %v898 = vpop.f32.mrf.mxu0
      %v899 = vadd.f32 0.0, %v898
      %v900 = vpop.f32.mrf.mxu0
      %v901 = vadd.f32 0.0, %v900
      %902 = vmatmul.bf16.gmra.mxu0 %v561
      %v903 = vpop.f32.mrf.mxu0
      %v904 = vadd.f32 0.0, %v903
      %v905 = vpop.f32.mrf.mxu0
      %v906 = vadd.f32 0.0, %v905
      %907 = vmatmul.bf16.gmra.mxu0 %v562
      %v908 = vpop.f32.mrf.mxu0
      %v909 = vadd.f32 0.0, %v908
      %v910 = vpop.f32.mrf.mxu0
      %v911 = vadd.f32 0.0, %v910
      %912 = vmatmul.bf16.gmra.mxu0 %v563
      %v913 = vpop.f32.mrf.mxu0
      %v914 = vadd.f32 0.0, %v913
      %v915 = vpop.f32.mrf.mxu0
      %v916 = vadd.f32 0.0, %v915
      %917 = vmatmul.bf16.gmra.mxu0 %v564
      %v918 = vpop.f32.mrf.mxu0
      %v919 = vadd.f32 0.0, %v918
      %v920 = vpop.f32.mrf.mxu0
      %v921 = vadd.f32 0.0, %v920
      %922 = vmatmul.bf16.gmra.mxu0 %v565
      %v923 = vpop.f32.mrf.mxu0
      %v924 = vadd.f32 0.0, %v923
      %v925 = vpop.f32.mrf.mxu0
      %v926 = vadd.f32 0.0, %v925
      %927 = vmatmul.bf16.gmra.mxu0 %v566
      %v928 = vpop.f32.mrf.mxu0
      %v929 = vadd.f32 0.0, %v928
      %v930 = vpop.f32.mrf.mxu0
      %v931 = vadd.f32 0.0, %v930
      %932 = vmatmul.bf16.gmra.mxu0 %v567
      %v933 = vpop.f32.mrf.mxu0
      %v934 = vadd.f32 0.0, %v933
      %v935 = vpop.f32.mrf.mxu0
      %v936 = vadd.f32 0.0, %v935
      %937 = vmatmul.bf16.gmra.mxu0 %v568
      %v938 = vpop.f32.mrf.mxu0
      %v939 = vadd.f32 0.0, %v938
      %v940 = vpop.f32.mrf.mxu0
      %v941 = vadd.f32 0.0, %v940
      %942 = vmatmul.bf16.gmra.mxu0 %v569
      %v943 = vpop.f32.mrf.mxu0
      %v944 = vadd.f32 0.0, %v943
      %v945 = vpop.f32.mrf.mxu0
      %v946 = vadd.f32 0.0, %v945
      %947 = vdwg.mxu0
      %v948 = vld [vmem:[%s2] sm:$0x1]
      %v950 = vperm.slane %v948, 0
      %v952 = vmul.f32 %v869, %v950
      %v953 = vmul.f32 %v871, %v950
      %v954 = vmul.f32 %v874, %v950
      %v955 = vmul.f32 %v876, %v950
      %v956 = vmul.f32 %v879, %v950
      %v957 = vmul.f32 %v881, %v950
      %v958 = vmul.f32 %v884, %v950
      %v959 = vmul.f32 %v886, %v950
      %v960 = vmul.f32 %v889, %v950
      %v961 = vmul.f32 %v891, %v950
      %v962 = vmul.f32 %v894, %v950
      %v963 = vmul.f32 %v896, %v950
      %v964 = vmul.f32 %v899, %v950
      %v965 = vmul.f32 %v901, %v950
      %v966 = vmul.f32 %v904, %v950
      %v967 = vmul.f32 %v906, %v950
      %v968 = vmul.f32 %v909, %v950
      %v969 = vmul.f32 %v911, %v950
      %v970 = vmul.f32 %v914, %v950
      %v971 = vmul.f32 %v916, %v950
      %v972 = vmul.f32 %v919, %v950
      %v973 = vmul.f32 %v921, %v950
      %v974 = vmul.f32 %v924, %v950
      %v975 = vmul.f32 %v926, %v950
      %v976 = vmul.f32 %v929, %v950
      %v977 = vmul.f32 %v931, %v950
      %v978 = vmul.f32 %v934, %v950
      %v979 = vmul.f32 %v936, %v950
      %v980 = vmul.f32 %v939, %v950
      %v981 = vmul.f32 %v941, %v950
      %v982 = vmul.f32 %v944, %v950
      %v983 = vmul.f32 %v946, %v950
      %v984 = vld [vmem:[%s3] sm:$0x1]
      %v986 = vperm.slane %v984, 0
      %v988 = vadd.f32 %v952, %v986
      %v989 = vadd.f32 %v953, %v986
      %v990 = vadd.f32 %v954, %v986
      %v991 = vadd.f32 %v955, %v986
      %v992 = vadd.f32 %v956, %v986
      %v993 = vadd.f32 %v957, %v986
      %v994 = vadd.f32 %v958, %v986
      %v995 = vadd.f32 %v959, %v986
      %v996 = vadd.f32 %v960, %v986
      %v997 = vadd.f32 %v961, %v986
      %v998 = vadd.f32 %v962, %v986
      %v999 = vadd.f32 %v963, %v986
      %v1000 = vadd.f32 %v964, %v986
      %v1001 = vadd.f32 %v965, %v986
      %v1002 = vadd.f32 %v966, %v986
      %v1003 = vadd.f32 %v967, %v986
      %v1004 = vadd.f32 %v968, %v986
      %v1005 = vadd.f32 %v969, %v986
      %v1006 = vadd.f32 %v970, %v986
      %v1007 = vadd.f32 %v971, %v986
      %v1008 = vadd.f32 %v972, %v986
      %v1009 = vadd.f32 %v973, %v986
      %v1010 = vadd.f32 %v974, %v986
      %v1011 = vadd.f32 %v975, %v986
      %v1012 = vadd.f32 %v976, %v986
      %v1013 = vadd.f32 %v977, %v986
      %v1014 = vadd.f32 %v978, %v986
      %v1015 = vadd.f32 %v979, %v986
      %v1016 = vadd.f32 %v980, %v986
      %v1017 = vadd.f32 %v981, %v986
      %v1018 = vadd.f32 %v982, %v986
      %v1019 = vadd.f32 %v983, %v986
      %v1020 = vmax.f32 %v988, 0.0
      %v1021 = vmax.f32 %v989, 0.0
      %v1022 = vmax.f32 %v990, 0.0
      %v1023 = vmax.f32 %v991, 0.0
      %v1024 = vmax.f32 %v992, 0.0
      %v1025 = vmax.f32 %v993, 0.0
      %v1026 = vmax.f32 %v994, 0.0
      %v1027 = vmax.f32 %v995, 0.0
      %v1028 = vmax.f32 %v996, 0.0
      %v1029 = vmax.f32 %v997, 0.0
      %v1030 = vmax.f32 %v998, 0.0
      %v1031 = vmax.f32 %v999, 0.0
      %v1032 = vmax.f32 %v1000, 0.0
      %v1033 = vmax.f32 %v1001, 0.0
      %v1034 = vmax.f32 %v1002, 0.0
      %v1035 = vmax.f32 %v1003, 0.0
      %v1036 = vmax.f32 %v1004, 0.0
      %v1037 = vmax.f32 %v1005, 0.0
      %v1038 = vmax.f32 %v1006, 0.0
      %v1039 = vmax.f32 %v1007, 0.0
      %v1040 = vmax.f32 %v1008, 0.0
      %v1041 = vmax.f32 %v1009, 0.0
      %v1042 = vmax.f32 %v1010, 0.0
      %v1043 = vmax.f32 %v1011, 0.0
      %v1044 = vmax.f32 %v1012, 0.0
      %v1045 = vmax.f32 %v1013, 0.0
      %v1046 = vmax.f32 %v1014, 0.0
      %v1047 = vmax.f32 %v1015, 0.0
      %v1048 = vmax.f32 %v1016, 0.0
      %v1049 = vmax.f32 %v1017, 0.0
      %v1050 = vmax.f32 %v1018, 0.0
      %v1051 = vmax.f32 %v1019, 0.0
      %1052 = vst [vmem:[#allocation2] sm:$0xf] 0
      %1053 = vst [vmem:[#allocation2 + $0x4] sm:$0xf] 0
      %1054 = vst [vmem:[#allocation2 + $0x8] sm:$0x1] 0
      %1055 = vst [vmem:[#allocation2 + $0xc] sm:$0xf] 0
      %1056 = vst [vmem:[#allocation2 + $0x10] sm:$0xf] 0
      %1057 = vst [vmem:[#allocation2 + $0x14] sm:$0x1] 0
      %1058 = vst [vmem:[#allocation2 + $0x18] sm:$0xf] 0
      %1059 = vst [vmem:[#allocation2 + $0x1c] sm:$0xf] 0
      %1060 = vst [vmem:[#allocation2 + $0x20] sm:$0x1] 0
      %1061 = vst [vmem:[#allocation2 + $0x24] sm:$0xf] 0
      %1062 = vst [vmem:[#allocation2 + $0x28] sm:$0xf] 0
      %1063 = vst [vmem:[#allocation2 + $0x2c] sm:$0x1] 0
      %1064 = vst [vmem:[#allocation2 + $0x30] sm:$0xf] 0
      %1065 = vst [vmem:[#allocation2 + $0x34] sm:$0xf] 0
      %1066 = vst [vmem:[#allocation2 + $0x38] sm:$0x1] 0
      %1067 = vst [vmem:[#allocation2 + $0x3c] sm:$0xf] 0
      %1068 = vst [vmem:[#allocation2 + $0x40] sm:$0xf] 0
      %1069 = vst [vmem:[#allocation2 + $0x44] sm:$0x1] 0
      %1070 = vst [vmem:[#allocation2 + $0x48] sm:$0xf] 0
      %1071 = vst [vmem:[#allocation2 + $0x4c] sm:$0xf] 0
      %1072 = vst [vmem:[#allocation2 + $0x50] sm:$0x1] 0
      %1073 = vst [vmem:[#allocation2 + $0x54] sm:$0xf] 0
      %1074 = vst [vmem:[#allocation2 + $0x58] sm:$0xf] 0
      %1075 = vst [vmem:[#allocation2 + $0x5c] sm:$0x1] 0
      %1076 = vst [vmem:[#allocation2 + $0x60] sm:$0xf] 0
      %1077 = vst [vmem:[#allocation2 + $0x64] sm:$0xf] 0
      %1078 = vst [vmem:[#allocation2 + $0x68] sm:$0x1] 0
      %1079 = vst [vmem:[#allocation2 + $0x6c] sm:$0xf] 0
      %1080 = vst [vmem:[#allocation2 + $0x70] sm:$0xf] 0
      %1081 = vst [vmem:[#allocation2 + $0x74] sm:$0x1] 0
      %1082 = vst [vmem:[#allocation2 + $0x78] sm:$0xf] 0
      %1083 = vst [vmem:[#allocation2 + $0x7c] sm:$0xf] 0
      %1084 = vst [vmem:[#allocation2 + $0x80] sm:$0x1] 0
      %1085 = vst [vmem:[#allocation2 + $0x84] sm:$0xf] 0
      %1086 = vst [vmem:[#allocation2 + $0x88] sm:$0xf] 0
      %1087 = vst [vmem:[#allocation2 + $0x8c] sm:$0x1] 0
      %1088 = vst [vmem:[#allocation2 + $0x90] sm:$0xf] 0
      %1089 = vst [vmem:[#allocation2 + $0x94] sm:$0xf] 0
      %1090 = vst [vmem:[#allocation2 + $0x98] sm:$0x1] 0
      %1091 = vst [vmem:[#allocation2 + $0x9c] sm:$0xf] 0
      %1092 = vst [vmem:[#allocation2 + $0xa0] sm:$0xf] 0
      %1093 = vst [vmem:[#allocation2 + $0xa4] sm:$0x1] 0
      %1094 = vst [vmem:[#allocation2 + $0xa8] sm:$0xf] 0
      %1095 = vst [vmem:[#allocation2 + $0xac] sm:$0xf] 0
      %1096 = vst [vmem:[#allocation2 + $0xb0] sm:$0x1] 0
      %1097 = vst [vmem:[#allocation2 + $0xb4] sm:$0xf] 0
      %1098 = vst [vmem:[#allocation2 + $0xb8] sm:$0xf] 0
      %1099 = vst [vmem:[#allocation2 + $0xbc] sm:$0x1] 0
      %1100 = vst [vmem:[#allocation2 + $0xc0] sm:$0xf] 0
      %1101 = vst [vmem:[#allocation2 + $0xc4] sm:$0xf] 0
      %1102 = vst [vmem:[#allocation2 + $0xc8] sm:$0x1] 0
      %1103 = vst [vmem:[#allocation2 + $0xcc] sm:$0xf] 0
      %1104 = vst [vmem:[#allocation2 + $0xd0] sm:$0xf] 0
      %1105 = vst [vmem:[#allocation2 + $0xd4] sm:$0x1] 0
      %v1106 = vpack.c.bf16 %v1020, %v1020
      %v1107 = vpack.c.bf16 %v1021, %v1021
      %v1108 = vpack.c.bf16 %v1022, %v1022
      %v1109 = vpack.c.bf16 %v1023, %v1023
      %v1110 = vpack.c.bf16 %v1024, %v1024
      %v1111 = vpack.c.bf16 %v1025, %v1025
      %v1112 = vpack.c.bf16 %v1026, %v1026
      %v1113 = vpack.c.bf16 %v1027, %v1027
      %v1114 = vpack.c.bf16 %v1028, %v1028
      %v1115 = vpack.c.bf16 %v1029, %v1029
      %v1116 = vpack.c.bf16 %v1030, %v1030
      %v1117 = vpack.c.bf16 %v1031, %v1031
      %v1118 = vpack.c.bf16 %v1032, %v1032
      %v1119 = vpack.c.bf16 %v1033, %v1033
      %v1120 = vpack.c.bf16 %v1034, %v1034
      %v1121 = vpack.c.bf16 %v1035, %v1035
      %v1122 = vpack.c.bf16 %v1036, %v1036
      %v1123 = vpack.c.bf16 %v1037, %v1037
      %v1124 = vpack.c.bf16 %v1038, %v1038
      %v1125 = vpack.c.bf16 %v1039, %v1039
      %v1126 = vpack.c.bf16 %v1040, %v1040
      %v1127 = vpack.c.bf16 %v1041, %v1041
      %v1128 = vpack.c.bf16 %v1042, %v1042
      %v1129 = vpack.c.bf16 %v1043, %v1043
      %v1130 = vpack.c.bf16 %v1044, %v1044
      %v1131 = vpack.c.bf16 %v1045, %v1045
      %v1132 = vpack.c.bf16 %v1046, %v1046
      %v1133 = vpack.c.bf16 %v1047, %v1047
      %v1134 = vpack.c.bf16 %v1048, %v1048
      %v1135 = vpack.c.bf16 %v1049, %v1049
      %v1136 = vpack.c.bf16 %v1050, %v1050
      %v1137 = vpack.c.bf16 %v1051, %v1051
      %vm1138 = vsmask.f32 256
      %vm1139 = vsmask.f32 4368
      %vm1140 = vmor %vm1138, %vm1139
      %v1142 = vshrl.u32 %v1106, 16
      %v1144 = vrot.slane %v1142, 7
      %v1145 = vshll.u32 %v1106, 16
      %v1147 = vor.u32 %v1144, %v1145
      %v1148 = vrot.slane %v1144, 4
      %v1150 = vshrl.u32 %v1107, 16
      %v1152 = vrot.slane %v1150, 7
      %v1153 = vshll.u32 %v1107, 16
      %v1155 = vor.u32 %v1152, %v1153
      %v1156 = vsel %vm1140, %v1148, %v1155
      %v1157 = vrot.slane %v1152, 4
      %v1159 = vshrl.u32 %v1108, 16
      %v1161 = vrot.slane %v1159, 7
      %v1162 = vshll.u32 %v1108, 16
      %v1164 = vor.u32 %v1161, %v1162
      %v1165 = vrot.slane %v1161, 4
      %v1167 = vshrl.u32 %v1109, 16
      %v1169 = vrot.slane %v1167, 7
      %v1170 = vshll.u32 %v1109, 16
      %v1172 = vor.u32 %v1169, %v1170
      %v1173 = vsel %vm1140, %v1165, %v1172
      %v1174 = vrot.slane %v1169, 4
      %v1176 = vshrl.u32 %v1110, 16
      %v1178 = vrot.slane %v1176, 7
      %v1179 = vshll.u32 %v1110, 16
      %v1181 = vor.u32 %v1178, %v1179
      %v1182 = vrot.slane %v1178, 4
      %v1184 = vshrl.u32 %v1111, 16
      %v1186 = vrot.slane %v1184, 7
      %v1187 = vshll.u32 %v1111, 16
      %v1189 = vor.u32 %v1186, %v1187
      %v1190 = vsel %vm1140, %v1182, %v1189
      %v1191 = vrot.slane %v1186, 4
      %v1193 = vshrl.u32 %v1112, 16
      %v1195 = vrot.slane %v1193, 7
      %v1196 = vshll.u32 %v1112, 16
      %v1198 = vor.u32 %v1195, %v1196
      %v1199 = vrot.slane %v1195, 4
      %v1201 = vshrl.u32 %v1113, 16
      %v1203 = vrot.slane %v1201, 7
      %v1204 = vshll.u32 %v1113, 16
      %v1206 = vor.u32 %v1203, %v1204
      %v1207 = vsel %vm1140, %v1199, %v1206
      %v1208 = vrot.slane %v1203, 4
      %v1210 = vshrl.u32 %v1114, 16
      %v1212 = vrot.slane %v1210, 7
      %v1213 = vshll.u32 %v1114, 16
      %v1215 = vor.u32 %v1212, %v1213
      %v1216 = vrot.slane %v1212, 4
      %v1218 = vshrl.u32 %v1115, 16
      %v1220 = vrot.slane %v1218, 7
      %v1221 = vshll.u32 %v1115, 16
      %v1223 = vor.u32 %v1220, %v1221
      %v1224 = vsel %vm1140, %v1216, %v1223
      %v1225 = vrot.slane %v1220, 4
      %v1227 = vshrl.u32 %v1116, 16
      %v1229 = vrot.slane %v1227, 7
      %v1230 = vshll.u32 %v1116, 16
      %v1232 = vor.u32 %v1229, %v1230
      %v1233 = vrot.slane %v1229, 4
      %v1235 = vshrl.u32 %v1117, 16
      %v1237 = vrot.slane %v1235, 7
      %v1238 = vshll.u32 %v1117, 16
      %v1240 = vor.u32 %v1237, %v1238
      %v1241 = vsel %vm1140, %v1233, %v1240
      %v1242 = vrot.slane %v1237, 4
      %v1244 = vshrl.u32 %v1118, 16
      %v1246 = vrot.slane %v1244, 7
      %v1247 = vshll.u32 %v1118, 16
      %v1249 = vor.u32 %v1246, %v1247
      %v1250 = vrot.slane %v1246, 4
      %v1252 = vshrl.u32 %v1119, 16
      %v1254 = vrot.slane %v1252, 7
      %v1255 = vshll.u32 %v1119, 16
      %v1257 = vor.u32 %v1254, %v1255
      %v1258 = vsel %vm1140, %v1250, %v1257
      %v1259 = vrot.slane %v1254, 4
      %v1261 = vshrl.u32 %v1120, 16
      %v1263 = vrot.slane %v1261, 7
      %v1264 = vshll.u32 %v1120, 16
      %v1266 = vor.u32 %v1263, %v1264
      %v1267 = vrot.slane %v1263, 4
      %v1269 = vshrl.u32 %v1121, 16
      %v1271 = vrot.slane %v1269, 7
      %v1272 = vshll.u32 %v1121, 16
      %v1274 = vor.u32 %v1271, %v1272
      %v1275 = vsel %vm1140, %v1267, %v1274
      %v1276 = vrot.slane %v1271, 4
      %v1278 = vshrl.u32 %v1122, 16
      %v1280 = vrot.slane %v1278, 7
      %v1281 = vshll.u32 %v1122, 16
      %v1283 = vor.u32 %v1280, %v1281
      %v1284 = vrot.slane %v1280, 4
      %v1286 = vshrl.u32 %v1123, 16
      %v1288 = vrot.slane %v1286, 7
      %v1289 = vshll.u32 %v1123, 16
      %v1291 = vor.u32 %v1288, %v1289
      %v1292 = vsel %vm1140, %v1284, %v1291
      %v1293 = vrot.slane %v1288, 4
      %v1295 = vshrl.u32 %v1124, 16
      %v1297 = vrot.slane %v1295, 7
      %v1298 = vshll.u32 %v1124, 16
      %v1300 = vor.u32 %v1297, %v1298
      %v1301 = vrot.slane %v1297, 4
      %v1303 = vshrl.u32 %v1125, 16
      %v1305 = vrot.slane %v1303, 7
      %v1306 = vshll.u32 %v1125, 16
      %v1308 = vor.u32 %v1305, %v1306
      %v1309 = vsel %vm1140, %v1301, %v1308
      %v1310 = vrot.slane %v1305, 4
      %v1312 = vshrl.u32 %v1126, 16
      %v1314 = vrot.slane %v1312, 7
      %v1315 = vshll.u32 %v1126, 16
      %v1317 = vor.u32 %v1314, %v1315
      %v1318 = vrot.slane %v1314, 4
      %v1320 = vshrl.u32 %v1127, 16
      %v1322 = vrot.slane %v1320, 7
      %v1323 = vshll.u32 %v1127, 16
      %v1325 = vor.u32 %v1322, %v1323
      %v1326 = vsel %vm1140, %v1318, %v1325
      %v1327 = vrot.slane %v1322, 4
      %v1329 = vshrl.u32 %v1128, 16
      %v1331 = vrot.slane %v1329, 7
      %v1332 = vshll.u32 %v1128, 16
      %v1334 = vor.u32 %v1331, %v1332
      %v1335 = vrot.slane %v1331, 4
      %v1337 = vshrl.u32 %v1129, 16
      %v1339 = vrot.slane %v1337, 7
      %v1340 = vshll.u32 %v1129, 16
      %v1342 = vor.u32 %v1339, %v1340
      %v1343 = vsel %vm1140, %v1335, %v1342
      %v1344 = vrot.slane %v1339, 4
      %v1346 = vshrl.u32 %v1130, 16
      %v1348 = vrot.slane %v1346, 7
      %v1349 = vshll.u32 %v1130, 16
      %v1351 = vor.u32 %v1348, %v1349
      %v1352 = vrot.slane %v1348, 4
      %v1354 = vshrl.u32 %v1131, 16
      %v1356 = vrot.slane %v1354, 7
      %v1357 = vshll.u32 %v1131, 16
      %v1359 = vor.u32 %v1356, %v1357
      %v1360 = vsel %vm1140, %v1352, %v1359
      %v1361 = vrot.slane %v1356, 4
      %v1363 = vshrl.u32 %v1132, 16
      %v1365 = vrot.slane %v1363, 7
      %v1366 = vshll.u32 %v1132, 16
      %v1368 = vor.u32 %v1365, %v1366
      %v1369 = vrot.slane %v1365, 4
      %v1371 = vshrl.u32 %v1133, 16
      %v1373 = vrot.slane %v1371, 7
      %v1374 = vshll.u32 %v1133, 16
      %v1376 = vor.u32 %v1373, %v1374
      %v1377 = vsel %vm1140, %v1369, %v1376
      %v1378 = vrot.slane %v1373, 4
      %v1380 = vshrl.u32 %v1134, 16
      %v1382 = vrot.slane %v1380, 7
      %v1383 = vshll.u32 %v1134, 16
      %v1385 = vor.u32 %v1382, %v1383
      %v1386 = vrot.slane %v1382, 4
      %v1388 = vshrl.u32 %v1135, 16
      %v1390 = vrot.slane %v1388, 7
      %v1391 = vshll.u32 %v1135, 16
      %v1393 = vor.u32 %v1390, %v1391
      %v1394 = vsel %vm1140, %v1386, %v1393
      %v1395 = vrot.slane %v1390, 4
      %v1397 = vshrl.u32 %v1136, 16
      %v1399 = vrot.slane %v1397, 7
      %v1400 = vshll.u32 %v1136, 16
      %v1402 = vor.u32 %v1399, %v1400
      %v1403 = vrot.slane %v1399, 4
      %v1405 = vshrl.u32 %v1137, 16
      %v1407 = vrot.slane %v1405, 7
      %v1408 = vshll.u32 %v1137, 16
      %v1410 = vor.u32 %v1407, %v1408
      %v1411 = vsel %vm1140, %v1403, %v1410
      %v1412 = vrot.slane %v1407, 4
      %s1461 = scalar_lea.vmem [#allocation2], 12
      %vm1462 = vcmask 1043456
      %vm1463 = vsmask.f32 7938
      %vm1464 = vmand %vm1462, %vm1463
      %v1465 = vld [vmem:[%s1461] sm:$0xf]
      %v1466 = vsel %vm1464, %v1147, %v1465
      %1467 = vst [vmem:[%s1461] sm:$0xf] %v1466
      %1468 = vst [vmem:[%s1461 + $0x4] sm:$0xf] %v1156
      %vm1469 = vcmask 1040384
      %vm1470 = vmand %vm1469, %vm1138
      %v1471 = vld [vmem:[%s1461 + $0x8] sm:$0x1]
      %v1472 = vsel %vm1470, %v1157, %v1471
      %1473 = vst [vmem:[%s1461 + $0x8] sm:$0x1] %v1472
      %v1474 = vld [vmem:[%s1461 + $0xc] sm:$0xf]
      %v1475 = vsel %vm1464, %v1164, %v1474
      %1476 = vst [vmem:[%s1461 + $0xc] sm:$0xf] %v1475
      %1477 = vst [vmem:[%s1461 + $0x10] sm:$0xf] %v1173
      %v1478 = vld [vmem:[%s1461 + $0x14] sm:$0x1]
      %v1479 = vsel %vm1470, %v1174, %v1478
      %1480 = vst [vmem:[%s1461 + $0x14] sm:$0x1] %v1479
      %v1481 = vld [vmem:[%s1461 + $0x18] sm:$0xf]
      %v1482 = vsel %vm1464, %v1181, %v1481
      %1483 = vst [vmem:[%s1461 + $0x18] sm:$0xf] %v1482
      %1484 = vst [vmem:[%s1461 + $0x1c] sm:$0xf] %v1190
      %v1485 = vld [vmem:[%s1461 + $0x20] sm:$0x1]
      %v1486 = vsel %vm1470, %v1191, %v1485
      %1487 = vst [vmem:[%s1461 + $0x20] sm:$0x1] %v1486
      %v1488 = vld [vmem:[%s1461 + $0x24] sm:$0xf]
      %v1489 = vsel %vm1464, %v1198, %v1488
      %1490 = vst [vmem:[%s1461 + $0x24] sm:$0xf] %v1489
      %1491 = vst [vmem:[%s1461 + $0x28] sm:$0xf] %v1207
      %v1492 = vld [vmem:[%s1461 + $0x2c] sm:$0x1]
      %v1493 = vsel %vm1470, %v1208, %v1492
      %1494 = vst [vmem:[%s1461 + $0x2c] sm:$0x1] %v1493
      %v1495 = vld [vmem:[%s1461 + $0x30] sm:$0xf]
      %v1496 = vsel %vm1464, %v1215, %v1495
      %1497 = vst [vmem:[%s1461 + $0x30] sm:$0xf] %v1496
      %1498 = vst [vmem:[%s1461 + $0x34] sm:$0xf] %v1224
      %v1499 = vld [vmem:[%s1461 + $0x38] sm:$0x1]
      %v1500 = vsel %vm1470, %v1225, %v1499
      %1501 = vst [vmem:[%s1461 + $0x38] sm:$0x1] %v1500
      %v1502 = vld [vmem:[%s1461 + $0x3c] sm:$0xf]
      %v1503 = vsel %vm1464, %v1232, %v1502
      %1504 = vst [vmem:[%s1461 + $0x3c] sm:$0xf] %v1503
      %1505 = vst [vmem:[%s1461 + $0x40] sm:$0xf] %v1241
      %v1506 = vld [vmem:[%s1461 + $0x44] sm:$0x1]
      %v1507 = vsel %vm1470, %v1242, %v1506
      %1508 = vst [vmem:[%s1461 + $0x44] sm:$0x1] %v1507
      %v1509 = vld [vmem:[%s1461 + $0x48] sm:$0xf]
      %v1510 = vsel %vm1464, %v1249, %v1509
      %1511 = vst [vmem:[%s1461 + $0x48] sm:$0xf] %v1510
      %1512 = vst [vmem:[%s1461 + $0x4c] sm:$0xf] %v1258
      %v1513 = vld [vmem:[%s1461 + $0x50] sm:$0x1]
      %v1514 = vsel %vm1470, %v1259, %v1513
      %1515 = vst [vmem:[%s1461 + $0x50] sm:$0x1] %v1514
      %v1516 = vld [vmem:[%s1461 + $0x54] sm:$0xf]
      %v1517 = vsel %vm1464, %v1266, %v1516
      %1518 = vst [vmem:[%s1461 + $0x54] sm:$0xf] %v1517
      %1519 = vst [vmem:[%s1461 + $0x58] sm:$0xf] %v1275
      %v1520 = vld [vmem:[%s1461 + $0x5c] sm:$0x1]
      %v1521 = vsel %vm1470, %v1276, %v1520
      %1522 = vst [vmem:[%s1461 + $0x5c] sm:$0x1] %v1521
      %v1523 = vld [vmem:[%s1461 + $0x60] sm:$0xf]
      %v1524 = vsel %vm1464, %v1283, %v1523
      %1525 = vst [vmem:[%s1461 + $0x60] sm:$0xf] %v1524
      %1526 = vst [vmem:[%s1461 + $0x64] sm:$0xf] %v1292
      %v1527 = vld [vmem:[%s1461 + $0x68] sm:$0x1]
      %v1528 = vsel %vm1470, %v1293, %v1527
      %1529 = vst [vmem:[%s1461 + $0x68] sm:$0x1] %v1528
      %v1530 = vld [vmem:[%s1461 + $0x6c] sm:$0xf]
      %v1531 = vsel %vm1464, %v1300, %v1530
      %1532 = vst [vmem:[%s1461 + $0x6c] sm:$0xf] %v1531
      %1533 = vst [vmem:[%s1461 + $0x70] sm:$0xf] %v1309
      %v1534 = vld [vmem:[%s1461 + $0x74] sm:$0x1]
      %v1535 = vsel %vm1470, %v1310, %v1534
      %1536 = vst [vmem:[%s1461 + $0x74] sm:$0x1] %v1535
      %v1537 = vld [vmem:[%s1461 + $0x78] sm:$0xf]
      %v1538 = vsel %vm1464, %v1317, %v1537
      %1539 = vst [vmem:[%s1461 + $0x78] sm:$0xf] %v1538
      %1540 = vst [vmem:[%s1461 + $0x7c] sm:$0xf] %v1326
      %v1541 = vld [vmem:[%s1461 + $0x80] sm:$0x1]
      %v1542 = vsel %vm1470, %v1327, %v1541
      %1543 = vst [vmem:[%s1461 + $0x80] sm:$0x1] %v1542
      %v1544 = vld [vmem:[%s1461 + $0x84] sm:$0xf]
      %v1545 = vsel %vm1464, %v1334, %v1544
      %1546 = vst [vmem:[%s1461 + $0x84] sm:$0xf] %v1545
      %1547 = vst [vmem:[%s1461 + $0x88] sm:$0xf] %v1343
      %v1548 = vld [vmem:[%s1461 + $0x8c] sm:$0x1]
      %v1549 = vsel %vm1470, %v1344, %v1548
      %1550 = vst [vmem:[%s1461 + $0x8c] sm:$0x1] %v1549
      %v1551 = vld [vmem:[%s1461 + $0x90] sm:$0xf]
      %v1552 = vsel %vm1464, %v1351, %v1551
      %1553 = vst [vmem:[%s1461 + $0x90] sm:$0xf] %v1552
      %1554 = vst [vmem:[%s1461 + $0x94] sm:$0xf] %v1360
      %v1555 = vld [vmem:[%s1461 + $0x98] sm:$0x1]
      %v1556 = vsel %vm1470, %v1361, %v1555
      %1557 = vst [vmem:[%s1461 + $0x98] sm:$0x1] %v1556
      %v1558 = vld [vmem:[%s1461 + $0x9c] sm:$0xf]
      %v1559 = vsel %vm1464, %v1368, %v1558
      %1560 = vst [vmem:[%s1461 + $0x9c] sm:$0xf] %v1559
      %1561 = vst [vmem:[%s1461 + $0xa0] sm:$0xf] %v1377
      %v1562 = vld [vmem:[%s1461 + $0xa4] sm:$0x1]
      %v1563 = vsel %vm1470, %v1378, %v1562
      %1564 = vst [vmem:[%s1461 + $0xa4] sm:$0x1] %v1563
      %v1565 = vld [vmem:[%s1461 + $0xa8] sm:$0xf]
      %v1566 = vsel %vm1464, %v1385, %v1565
      %1567 = vst [vmem:[%s1461 + $0xa8] sm:$0xf] %v1566
      %1568 = vst [vmem:[%s1461 + $0xac] sm:$0xf] %v1394
      %v1569 = vld [vmem:[%s1461 + $0xb0] sm:$0x1]
      %v1570 = vsel %vm1470, %v1395, %v1569
      %1571 = vst [vmem:[%s1461 + $0xb0] sm:$0x1] %v1570
      %v1572 = vld [vmem:[%s1461 + $0xb4] sm:$0xf]
      %v1573 = vsel %vm1464, %v1402, %v1572
      %1574 = vst [vmem:[%s1461 + $0xb4] sm:$0xf] %v1573
      %1575 = vst [vmem:[%s1461 + $0xb8] sm:$0xf] %v1411
      %v1576 = vld [vmem:[%s1461 + $0xbc] sm:$0x1]
      %v1577 = vsel %vm1470, %v1412, %v1576
      %1578 = vst [vmem:[%s1461 + $0xbc] sm:$0x1] %v1577
      %v1579 = vld [vmem:[#allocation2] sm:$0xf]
      %v1580 = vld [vmem:[#allocation2 + $0x4] sm:$0xf]
      %v1581 = vld [vmem:[#allocation2 + $0xc] sm:$0xf]
      %v1582 = vld [vmem:[#allocation2 + $0x10] sm:$0xf]
      %v1583 = vld [vmem:[#allocation2 + $0x18] sm:$0xf]
      %v1584 = vld [vmem:[#allocation2 + $0x1c] sm:$0xf]
      %v1585 = vld [vmem:[#allocation2 + $0x24] sm:$0xf]
      %v1586 = vld [vmem:[#allocation2 + $0x28] sm:$0xf]
      %v1587 = vld [vmem:[#allocation2 + $0x30] sm:$0xf]
      %v1588 = vld [vmem:[#allocation2 + $0x34] sm:$0xf]
      %v1589 = vld [vmem:[#allocation2 + $0x3c] sm:$0xf]
      %v1590 = vld [vmem:[#allocation2 + $0x40] sm:$0xf]
      %v1591 = vld [vmem:[#allocation2 + $0x48] sm:$0xf]
      %v1592 = vld [vmem:[#allocation2 + $0x4c] sm:$0xf]
      %v1593 = vld [vmem:[#allocation2 + $0x54] sm:$0xf]
      %v1594 = vld [vmem:[#allocation2 + $0x58] sm:$0xf]
      %v1595 = vld [vmem:[#allocation2 + $0x60] sm:$0xf]
      %v1596 = vld [vmem:[#allocation2 + $0x64] sm:$0xf]
      %v1597 = vld [vmem:[#allocation2 + $0x6c] sm:$0xf]
      %v1598 = vld [vmem:[#allocation2 + $0x70] sm:$0xf]
      %v1599 = vld [vmem:[#allocation2 + $0x78] sm:$0xf]
      %v1600 = vld [vmem:[#allocation2 + $0x7c] sm:$0xf]
      %v1601 = vld [vmem:[#allocation2 + $0x84] sm:$0xf]
      %v1602 = vld [vmem:[#allocation2 + $0x88] sm:$0xf]
      %v1603 = vld [vmem:[#allocation2 + $0x90] sm:$0xf]
      %v1604 = vld [vmem:[#allocation2 + $0x94] sm:$0xf]
      %v1605 = vld [vmem:[#allocation2 + $0x9c] sm:$0xf]
      %v1606 = vld [vmem:[#allocation2 + $0xa0] sm:$0xf]
      %v1607 = vld [vmem:[#allocation2 + $0xa8] sm:$0xf]
      %v1608 = vld [vmem:[#allocation2 + $0xac] sm:$0xf]
      %v1609 = vld [vmem:[#allocation2 + $0xb4] sm:$0xf]
      %v1610 = vld [vmem:[#allocation2 + $0xb8] sm:$0xf]
      %1611 = vst [vmem:[#allocation3] sm:$0xf] %v1579
      %1612 = vst [vmem:[#allocation3 + $0x24] sm:$0xf] %v1580
      %1613 = vst [vmem:[#allocation3 + $0x48] sm:$0xf] %v1581
      %1614 = vst [vmem:[#allocation3 + $0x6c] sm:$0xf] %v1582
      %1615 = vst [vmem:[#allocation3 + $0x90] sm:$0xf] %v1583
      %1616 = vst [vmem:[#allocation3 + $0xb4] sm:$0xf] %v1584
      %1617 = vst [vmem:[#allocation3 + $0xd8] sm:$0xf] %v1585
      %1618 = vst [vmem:[#allocation3 + $0xfc] sm:$0xf] %v1586
      %1619 = vst [vmem:[#allocation3 + $0x120] sm:$0xf] %v1587
      %1620 = vst [vmem:[#allocation3 + $0x144] sm:$0xf] %v1588
      %1621 = vst [vmem:[#allocation3 + $0x168] sm:$0xf] %v1589
      %1622 = vst [vmem:[#allocation3 + $0x18c] sm:$0xf] %v1590
      %1623 = vst [vmem:[#allocation3 + $0x1b0] sm:$0xf] %v1591
      %1624 = vst [vmem:[#allocation3 + $0x1d4] sm:$0xf] %v1592
      %1625 = vst [vmem:[#allocation3 + $0x1f8] sm:$0xf] %v1593
      %1626 = vst [vmem:[#allocation3 + $0x21c] sm:$0xf] %v1594
      %1627 = vst [vmem:[#allocation3 + $0x240] sm:$0xf] %v1595
      %1628 = vst [vmem:[#allocation3 + $0x264] sm:$0xf] %v1596
      %1629 = vst [vmem:[#allocation3 + $0x288] sm:$0xf] %v1597
      %1630 = vst [vmem:[#allocation3 + $0x2ac] sm:$0xf] %v1598
      %1631 = vst [vmem:[#allocation3 + $0x2d0] sm:$0xf] %v1599
      %1632 = vst [vmem:[#allocation3 + $0x2f4] sm:$0xf] %v1600
      %1633 = vst [vmem:[#allocation3 + $0x318] sm:$0xf] %v1601
      %1634 = vst [vmem:[#allocation3 + $0x33c] sm:$0xf] %v1602
      %1635 = vst [vmem:[#allocation3 + $0x360] sm:$0xf] %v1603
      %1636 = vst [vmem:[#allocation3 + $0x384] sm:$0xf] %v1604
      %1637 = vst [vmem:[#allocation3 + $0x3a8] sm:$0xf] %v1605
      %1638 = vst [vmem:[#allocation3 + $0x3cc] sm:$0xf] %v1606
      %1639 = vst [vmem:[#allocation3 + $0x3f0] sm:$0xf] %v1607
      %1640 = vst [vmem:[#allocation3 + $0x414] sm:$0xf] %v1608
      %1641 = vst [vmem:[#allocation3 + $0x438] sm:$0xf] %v1609
      %1642 = vst [vmem:[#allocation3 + $0x45c] sm:$0xf] %v1610
      %v1643 = vld [vmem:[#allocation2] sm:$0xf]
      %v1644 = vld [vmem:[#allocation2 + $0x4] sm:$0xf]
      %v1645 = vld [vmem:[#allocation2 + $0x8] sm:$0x1]
      %v1646 = vld [vmem:[#allocation2 + $0xc] sm:$0xf]
      %v1647 = vld [vmem:[#allocation2 + $0x10] sm:$0xf]
      %v1648 = vld [vmem:[#allocation2 + $0x14] sm:$0x1]
      %v1649 = vld [vmem:[#allocation2 + $0x18] sm:$0xf]
      %v1650 = vld [vmem:[#allocation2 + $0x1c] sm:$0xf]
      %v1651 = vld [vmem:[#allocation2 + $0x20] sm:$0x1]
      %v1652 = vld [vmem:[#allocation2 + $0x24] sm:$0xf]
      %v1653 = vld [vmem:[#allocation2 + $0x28] sm:$0xf]
      %v1654 = vld [vmem:[#allocation2 + $0x2c] sm:$0x1]
      %v1655 = vld [vmem:[#allocation2 + $0x30] sm:$0xf]
      %v1656 = vld [vmem:[#allocation2 + $0x34] sm:$0xf]
      %v1657 = vld [vmem:[#allocation2 + $0x38] sm:$0x1]
      %v1658 = vld [vmem:[#allocation2 + $0x3c] sm:$0xf]
      %v1659 = vld [vmem:[#allocation2 + $0x40] sm:$0xf]
      %v1660 = vld [vmem:[#allocation2 + $0x44] sm:$0x1]
      %v1661 = vld [vmem:[#allocation2 + $0x48] sm:$0xf]
      %v1662 = vld [vmem:[#allocation2 + $0x4c] sm:$0xf]
      %v1663 = vld [vmem:[#allocation2 + $0x50] sm:$0x1]
      %v1664 = vld [vmem:[#allocation2 + $0x54] sm:$0xf]
      %v1665 = vld [vmem:[#allocation2 + $0x58] sm:$0xf]
      %v1666 = vld [vmem:[#allocation2 + $0x5c] sm:$0x1]
      %v1667 = vld [vmem:[#allocation2 + $0x60] sm:$0xf]
      %v1668 = vld [vmem:[#allocation2 + $0x64] sm:$0xf]
      %v1669 = vld [vmem:[#allocation2 + $0x68] sm:$0x1]
      %v1670 = vld [vmem:[#allocation2 + $0x6c] sm:$0xf]
      %v1671 = vld [vmem:[#allocation2 + $0x70] sm:$0xf]
      %v1672 = vld [vmem:[#allocation2 + $0x74] sm:$0x1]
      %v1673 = vld [vmem:[#allocation2 + $0x78] sm:$0xf]
      %v1674 = vld [vmem:[#allocation2 + $0x7c] sm:$0xf]
      %v1675 = vld [vmem:[#allocation2 + $0x80] sm:$0x1]
      %v1676 = vld [vmem:[#allocation2 + $0x84] sm:$0xf]
      %v1677 = vld [vmem:[#allocation2 + $0x88] sm:$0xf]
      %v1678 = vld [vmem:[#allocation2 + $0x8c] sm:$0x1]
      %v1679 = vld [vmem:[#allocation2 + $0x90] sm:$0xf]
      %v1680 = vld [vmem:[#allocation2 + $0x94] sm:$0xf]
      %v1681 = vld [vmem:[#allocation2 + $0x98] sm:$0x1]
      %v1682 = vld [vmem:[#allocation2 + $0x9c] sm:$0xf]
      %v1683 = vld [vmem:[#allocation2 + $0xa0] sm:$0xf]
      %v1684 = vld [vmem:[#allocation2 + $0xa4] sm:$0x1]
      %v1685 = vld [vmem:[#allocation2 + $0xa8] sm:$0xf]
      %v1686 = vld [vmem:[#allocation2 + $0xac] sm:$0xf]
      %v1687 = vld [vmem:[#allocation2 + $0xb0] sm:$0x1]
      %v1688 = vld [vmem:[#allocation2 + $0xb4] sm:$0xf]
      %v1689 = vld [vmem:[#allocation2 + $0xb8] sm:$0xf]
      %v1690 = vld [vmem:[#allocation2 + $0xbc] sm:$0x1]
      %vm1691 = vsmask.f32 3328
      %vm1692 = vsmask.f32 7440
      %vm1693 = vmor %vm1691, %vm1692
      %v1695 = vshrl.u32 %v1643, 16
      %v1697 = vrot.slane %v1695, 4
      %v1698 = vshll.u32 %v1643, 16
      %v1700 = vrot.slane %v1698, 5
      %v1701 = vor.u32 %v1697, %v1700
      %v1702 = vrot.slane %v1701, 4
      %v1704 = vshll.u32 %v1644, 16
      %v1706 = vrot.slane %v1704, 5
      %v1707 = vsel %vm1693, %v1702, %v1706
      %v1708 = vshrl.u32 %v1644, 16
      %v1710 = vrot.slane %v1708, 4
      %v1711 = vor.u32 %v1710, %v1706
      %v1712 = vrot.slane %v1711, 4
      %v1714 = vshll.u32 %v1645, 16
      %v1716 = vrot.slane %v1714, 5
      %v1717 = vsel %vm1693, %v1712, %v1716
      %v1719 = vshrl.u32 %v1646, 16
      %v1721 = vrot.slane %v1719, 4
      %v1722 = vshll.u32 %v1646, 16
      %v1724 = vrot.slane %v1722, 5
      %v1725 = vor.u32 %v1721, %v1724
      %v1726 = vrot.slane %v1725, 4
      %v1728 = vshll.u32 %v1647, 16
      %v1730 = vrot.slane %v1728, 5
      %v1731 = vsel %vm1693, %v1726, %v1730
      %v1732 = vshrl.u32 %v1647, 16
      %v1734 = vrot.slane %v1732, 4
      %v1735 = vor.u32 %v1734, %v1730
      %v1736 = vrot.slane %v1735, 4
      %v1738 = vshll.u32 %v1648, 16
      %v1740 = vrot.slane %v1738, 5
      %v1741 = vsel %vm1693, %v1736, %v1740
      %v1743 = vshrl.u32 %v1649, 16
      %v1745 = vrot.slane %v1743, 4
      %v1746 = vshll.u32 %v1649, 16
      %v1748 = vrot.slane %v1746, 5
      %v1749 = vor.u32 %v1745, %v1748
      %v1750 = vrot.slane %v1749, 4
      %v1752 = vshll.u32 %v1650, 16
      %v1754 = vrot.slane %v1752, 5
      %v1755 = vsel %vm1693, %v1750, %v1754
      %v1756 = vshrl.u32 %v1650, 16
      %v1758 = vrot.slane %v1756, 4
      %v1759 = vor.u32 %v1758, %v1754
      %v1760 = vrot.slane %v1759, 4
      %v1762 = vshll.u32 %v1651, 16
      %v1764 = vrot.slane %v1762, 5
      %v1765 = vsel %vm1693, %v1760, %v1764
      %v1767 = vshrl.u32 %v1652, 16
      %v1769 = vrot.slane %v1767, 4
      %v1770 = vshll.u32 %v1652, 16
      %v1772 = vrot.slane %v1770, 5
      %v1773 = vor.u32 %v1769, %v1772
      %v1774 = vrot.slane %v1773, 4
      %v1776 = vshll.u32 %v1653, 16
      %v1778 = vrot.slane %v1776, 5
      %v1779 = vsel %vm1693, %v1774, %v1778
      %v1780 = vshrl.u32 %v1653, 16
      %v1782 = vrot.slane %v1780, 4
      %v1783 = vor.u32 %v1782, %v1778
      %v1784 = vrot.slane %v1783, 4
      %v1786 = vshll.u32 %v1654, 16
      %v1788 = vrot.slane %v1786, 5
      %v1789 = vsel %vm1693, %v1784, %v1788
      %v1791 = vshrl.u32 %v1655, 16
      %v1793 = vrot.slane %v1791, 4
      %v1794 = vshll.u32 %v1655, 16
      %v1796 = vrot.slane %v1794, 5
      %v1797 = vor.u32 %v1793, %v1796
      %v1798 = vrot.slane %v1797, 4
      %v1800 = vshll.u32 %v1656, 16
      %v1802 = vrot.slane %v1800, 5
      %v1803 = vsel %vm1693, %v1798, %v1802
      %v1804 = vshrl.u32 %v1656, 16
      %v1806 = vrot.slane %v1804, 4
      %v1807 = vor.u32 %v1806, %v1802
      %v1808 = vrot.slane %v1807, 4
      %v1810 = vshll.u32 %v1657, 16
      %v1812 = vrot.slane %v1810, 5
      %v1813 = vsel %vm1693, %v1808, %v1812
      %v1815 = vshrl.u32 %v1658, 16
      %v1817 = vrot.slane %v1815, 4
      %v1818 = vshll.u32 %v1658, 16
      %v1820 = vrot.slane %v1818, 5
      %v1821 = vor.u32 %v1817, %v1820
      %v1822 = vrot.slane %v1821, 4
      %v1824 = vshll.u32 %v1659, 16
      %v1826 = vrot.slane %v1824, 5
      %v1827 = vsel %vm1693, %v1822, %v1826
      %v1828 = vshrl.u32 %v1659, 16
      %v1830 = vrot.slane %v1828, 4
      %v1831 = vor.u32 %v1830, %v1826
      %v1832 = vrot.slane %v1831, 4
      %v1834 = vshll.u32 %v1660, 16
      %v1836 = vrot.slane %v1834, 5
      %v1837 = vsel %vm1693, %v1832, %v1836
      %v1839 = vshrl.u32 %v1661, 16
      %v1841 = vrot.slane %v1839, 4
      %v1842 = vshll.u32 %v1661, 16
      %v1844 = vrot.slane %v1842, 5
      %v1845 = vor.u32 %v1841, %v1844
      %v1846 = vrot.slane %v1845, 4
      %v1848 = vshll.u32 %v1662, 16
      %v1850 = vrot.slane %v1848, 5
      %v1851 = vsel %vm1693, %v1846, %v1850
      %v1852 = vshrl.u32 %v1662, 16
      %v1854 = vrot.slane %v1852, 4
      %v1855 = vor.u32 %v1854, %v1850
      %v1856 = vrot.slane %v1855, 4
      %v1858 = vshll.u32 %v1663, 16
      %v1860 = vrot.slane %v1858, 5
      %v1861 = vsel %vm1693, %v1856, %v1860
      %v1863 = vshrl.u32 %v1664, 16
      %v1865 = vrot.slane %v1863, 4
      %v1866 = vshll.u32 %v1664, 16
      %v1868 = vrot.slane %v1866, 5
      %v1869 = vor.u32 %v1865, %v1868
      %v1870 = vrot.slane %v1869, 4
      %v1872 = vshll.u32 %v1665, 16
      %v1874 = vrot.slane %v1872, 5
      %v1875 = vsel %vm1693, %v1870, %v1874
      %v1876 = vshrl.u32 %v1665, 16
      %v1878 = vrot.slane %v1876, 4
      %v1879 = vor.u32 %v1878, %v1874
      %v1880 = vrot.slane %v1879, 4
      %v1882 = vshll.u32 %v1666, 16
      %v1884 = vrot.slane %v1882, 5
      %v1885 = vsel %vm1693, %v1880, %v1884
      %v1887 = vshrl.u32 %v1667, 16
      %v1889 = vrot.slane %v1887, 4
      %v1890 = vshll.u32 %v1667, 16
      %v1892 = vrot.slane %v1890, 5
      %v1893 = vor.u32 %v1889, %v1892
      %v1894 = vrot.slane %v1893, 4
      %v1896 = vshll.u32 %v1668, 16
      %v1898 = vrot.slane %v1896, 5
      %v1899 = vsel %vm1693, %v1894, %v1898
      %v1900 = vshrl.u32 %v1668, 16
      %v1902 = vrot.slane %v1900, 4
      %v1903 = vor.u32 %v1902, %v1898
      %v1904 = vrot.slane %v1903, 4
      %v1906 = vshll.u32 %v1669, 16
      %v1908 = vrot.slane %v1906, 5
      %v1909 = vsel %vm1693, %v1904, %v1908
      %v1911 = vshrl.u32 %v1670, 16
      %v1913 = vrot.slane %v1911, 4
      %v1914 = vshll.u32 %v1670, 16
      %v1916 = vrot.slane %v1914, 5
      %v1917 = vor.u32 %v1913, %v1916
      %v1918 = vrot.slane %v1917, 4
      %v1920 = vshll.u32 %v1671, 16
      %v1922 = vrot.slane %v1920, 5
      %v1923 = vsel %vm1693, %v1918, %v1922
      %v1924 = vshrl.u32 %v1671, 16
      %v1926 = vrot.slane %v1924, 4
      %v1927 = vor.u32 %v1926, %v1922
      %v1928 = vrot.slane %v1927, 4
      %v1930 = vshll.u32 %v1672, 16
      %v1932 = vrot.slane %v1930, 5
      %v1933 = vsel %vm1693, %v1928, %v1932
      %v1935 = vshrl.u32 %v1673, 16
      %v1937 = vrot.slane %v1935, 4
      %v1938 = vshll.u32 %v1673, 16
      %v1940 = vrot.slane %v1938, 5
      %v1941 = vor.u32 %v1937, %v1940
      %v1942 = vrot.slane %v1941, 4
      %v1944 = vshll.u32 %v1674, 16
      %v1946 = vrot.slane %v1944, 5
      %v1947 = vsel %vm1693, %v1942, %v1946
      %v1948 = vshrl.u32 %v1674, 16
      %v1950 = vrot.slane %v1948, 4
      %v1951 = vor.u32 %v1950, %v1946
      %v1952 = vrot.slane %v1951, 4
      %v1954 = vshll.u32 %v1675, 16
      %v1956 = vrot.slane %v1954, 5
      %v1957 = vsel %vm1693, %v1952, %v1956
      %v1959 = vshrl.u32 %v1676, 16
      %v1961 = vrot.slane %v1959, 4
      %v1962 = vshll.u32 %v1676, 16
      %v1964 = vrot.slane %v1962, 5
      %v1965 = vor.u32 %v1961, %v1964
      %v1966 = vrot.slane %v1965, 4
      %v1968 = vshll.u32 %v1677, 16
      %v1970 = vrot.slane %v1968, 5
      %v1971 = vsel %vm1693, %v1966, %v1970
      %v1972 = vshrl.u32 %v1677, 16
      %v1974 = vrot.slane %v1972, 4
      %v1975 = vor.u32 %v1974, %v1970
      %v1976 = vrot.slane %v1975, 4
      %v1978 = vshll.u32 %v1678, 16
      %v1980 = vrot.slane %v1978, 5
      %v1981 = vsel %vm1693, %v1976, %v1980
      %v1983 = vshrl.u32 %v1679, 16
      %v1985 = vrot.slane %v1983, 4
      %v1986 = vshll.u32 %v1679, 16
      %v1988 = vrot.slane %v1986, 5
      %v1989 = vor.u32 %v1985, %v1988
      %v1990 = vrot.slane %v1989, 4
      %v1992 = vshll.u32 %v1680, 16
      %v1994 = vrot.slane %v1992, 5
      %v1995 = vsel %vm1693, %v1990, %v1994
      %v1996 = vshrl.u32 %v1680, 16
      %v1998 = vrot.slane %v1996, 4
      %v1999 = vor.u32 %v1998, %v1994
      %v2000 = vrot.slane %v1999, 4
      %v2002 = vshll.u32 %v1681, 16
      %v2004 = vrot.slane %v2002, 5
      %v2005 = vsel %vm1693, %v2000, %v2004
      %v2007 = vshrl.u32 %v1682, 16
      %v2009 = vrot.slane %v2007, 4
      %v2010 = vshll.u32 %v1682, 16
      %v2012 = vrot.slane %v2010, 5
      %v2013 = vor.u32 %v2009, %v2012
      %v2014 = vrot.slane %v2013, 4
      %v2016 = vshll.u32 %v1683, 16
      %v2018 = vrot.slane %v2016, 5
      %v2019 = vsel %vm1693, %v2014, %v2018
      %v2020 = vshrl.u32 %v1683, 16
      %v2022 = vrot.slane %v2020, 4
      %v2023 = vor.u32 %v2022, %v2018
      %v2024 = vrot.slane %v2023, 4
      %v2026 = vshll.u32 %v1684, 16
      %v2028 = vrot.slane %v2026, 5
      %v2029 = vsel %vm1693, %v2024, %v2028
      %v2031 = vshrl.u32 %v1685, 16
      %v2033 = vrot.slane %v2031, 4
      %v2034 = vshll.u32 %v1685, 16
      %v2036 = vrot.slane %v2034, 5
      %v2037 = vor.u32 %v2033, %v2036
      %v2038 = vrot.slane %v2037, 4
      %v2040 = vshll.u32 %v1686, 16
      %v2042 = vrot.slane %v2040, 5
      %v2043 = vsel %vm1693, %v2038, %v2042
      %v2044 = vshrl.u32 %v1686, 16
      %v2046 = vrot.slane %v2044, 4
      %v2047 = vor.u32 %v2046, %v2042
      %v2048 = vrot.slane %v2047, 4
      %v2050 = vshll.u32 %v1687, 16
      %v2052 = vrot.slane %v2050, 5
      %v2053 = vsel %vm1693, %v2048, %v2052
      %v2055 = vshrl.u32 %v1688, 16
      %v2057 = vrot.slane %v2055, 4
      %v2058 = vshll.u32 %v1688, 16
      %v2060 = vrot.slane %v2058, 5
      %v2061 = vor.u32 %v2057, %v2060
      %v2062 = vrot.slane %v2061, 4
      %v2064 = vshll.u32 %v1689, 16
      %v2066 = vrot.slane %v2064, 5
      %v2067 = vsel %vm1693, %v2062, %v2066
      %v2068 = vshrl.u32 %v1689, 16
      %v2070 = vrot.slane %v2068, 4
      %v2071 = vor.u32 %v2070, %v2066
      %v2072 = vrot.slane %v2071, 4
      %v2074 = vshll.u32 %v1690, 16
      %v2076 = vrot.slane %v2074, 5
      %v2077 = vsel %vm1693, %v2072, %v2076
      %2110 = vst [vmem:[#allocation3 + $0x4] sm:$0xf] %v1707
      %2111 = vst [vmem:[#allocation3 + $0x28] sm:$0xf] %v1717
      %2112 = vst [vmem:[#allocation3 + $0x4c] sm:$0xf] %v1731
      %2113 = vst [vmem:[#allocation3 + $0x70] sm:$0xf] %v1741
      %2114 = vst [vmem:[#allocation3 + $0x94] sm:$0xf] %v1755
      %2115 = vst [vmem:[#allocation3 + $0xb8] sm:$0xf] %v1765
      %2116 = vst [vmem:[#allocation3 + $0xdc] sm:$0xf] %v1779
      %2117 = vst [vmem:[#allocation3 + $0x100] sm:$0xf] %v1789
      %2118 = vst [vmem:[#allocation3 + $0x124] sm:$0xf] %v1803
      %2119 = vst [vmem:[#allocation3 + $0x148] sm:$0xf] %v1813
      %2120 = vst [vmem:[#allocation3 + $0x16c] sm:$0xf] %v1827
      %2121 = vst [vmem:[#allocation3 + $0x190] sm:$0xf] %v1837
      %2122 = vst [vmem:[#allocation3 + $0x1b4] sm:$0xf] %v1851
      %2123 = vst [vmem:[#allocation3 + $0x1d8] sm:$0xf] %v1861
      %2124 = vst [vmem:[#allocation3 + $0x1fc] sm:$0xf] %v1875
      %2125 = vst [vmem:[#allocation3 + $0x220] sm:$0xf] %v1885
      %2126 = vst [vmem:[#allocation3 + $0x244] sm:$0xf] %v1899
      %2127 = vst [vmem:[#allocation3 + $0x268] sm:$0xf] %v1909
      %2128 = vst [vmem:[#allocation3 + $0x28c] sm:$0xf] %v1923
      %2129 = vst [vmem:[#allocation3 + $0x2b0] sm:$0xf] %v1933
      %2130 = vst [vmem:[#allocation3 + $0x2d4] sm:$0xf] %v1947
      %2131 = vst [vmem:[#allocation3 + $0x2f8] sm:$0xf] %v1957
      %2132 = vst [vmem:[#allocation3 + $0x31c] sm:$0xf] %v1971
      %2133 = vst [vmem:[#allocation3 + $0x340] sm:$0xf] %v1981
      %2134 = vst [vmem:[#allocation3 + $0x364] sm:$0xf] %v1995
      %2135 = vst [vmem:[#allocation3 + $0x388] sm:$0xf] %v2005
      %2136 = vst [vmem:[#allocation3 + $0x3ac] sm:$0xf] %v2019
      %2137 = vst [vmem:[#allocation3 + $0x3d0] sm:$0xf] %v2029
      %2138 = vst [vmem:[#allocation3 + $0x3f4] sm:$0xf] %v2043
      %2139 = vst [vmem:[#allocation3 + $0x418] sm:$0xf] %v2053
      %2140 = vst [vmem:[#allocation3 + $0x43c] sm:$0xf] %v2067
      %2141 = vst [vmem:[#allocation3 + $0x460] sm:$0xf] %v2077
      %v2142 = vld [vmem:[#allocation2] sm:$0xe]
      %v2143 = vld [vmem:[#allocation2 + $0x4] sm:$0xf]
      %v2144 = vld [vmem:[#allocation2 + $0x8] sm:$0x1]
      %v2145 = vld [vmem:[#allocation2 + $0xc] sm:$0xe]
      %v2146 = vld [vmem:[#allocation2 + $0x10] sm:$0xf]
      %v2147 = vld [vmem:[#allocation2 + $0x14] sm:$0x1]
      %v2148 = vld [vmem:[#allocation2 + $0x18] sm:$0xe]
      %v2149 = vld [vmem:[#allocation2 + $0x1c] sm:$0xf]
      %v2150 = vld [vmem:[#allocation2 + $0x20] sm:$0x1]
      %v2151 = vld [vmem:[#allocation2 + $0x24] sm:$0xe]
      %v2152 = vld [vmem:[#allocation2 + $0x28] sm:$0xf]
      %v2153 = vld [vmem:[#allocation2 + $0x2c] sm:$0x1]
      %v2154 = vld [vmem:[#allocation2 + $0x30] sm:$0xe]
      %v2155 = vld [vmem:[#allocation2 + $0x34] sm:$0xf]
      %v2156 = vld [vmem:[#allocation2 + $0x38] sm:$0x1]
      %v2157 = vld [vmem:[#allocation2 + $0x3c] sm:$0xe]
      %v2158 = vld [vmem:[#allocation2 + $0x40] sm:$0xf]
      %v2159 = vld [vmem:[#allocation2 + $0x44] sm:$0x1]
      %v2160 = vld [vmem:[#allocation2 + $0x48] sm:$0xe]
      %v2161 = vld [vmem:[#allocation2 + $0x4c] sm:$0xf]
      %v2162 = vld [vmem:[#allocation2 + $0x50] sm:$0x1]
      %v2163 = vld [vmem:[#allocation2 + $0x54] sm:$0xe]
      %v2164 = vld [vmem:[#allocation2 + $0x58] sm:$0xf]
      %v2165 = vld [vmem:[#allocation2 + $0x5c] sm:$0x1]
      %v2166 = vld [vmem:[#allocation2 + $0x60] sm:$0xe]
      %v2167 = vld [vmem:[#allocation2 + $0x64] sm:$0xf]
      %v2168 = vld [vmem:[#allocation2 + $0x68] sm:$0x1]
      %v2169 = vld [vmem:[#allocation2 + $0x6c] sm:$0xe]
      %v2170 = vld [vmem:[#allocation2 + $0x70] sm:$0xf]
      %v2171 = vld [vmem:[#allocation2 + $0x74] sm:$0x1]
      %v2172 = vld [vmem:[#allocation2 + $0x78] sm:$0xe]
      %v2173 = vld [vmem:[#allocation2 + $0x7c] sm:$0xf]
      %v2174 = vld [vmem:[#allocation2 + $0x80] sm:$0x1]
      %v2175 = vld [vmem:[#allocation2 + $0x84] sm:$0xe]
      %v2176 = vld [vmem:[#allocation2 + $0x88] sm:$0xf]
      %v2177 = vld [vmem:[#allocation2 + $0x8c] sm:$0x1]
      %v2178 = vld [vmem:[#allocation2 + $0x90] sm:$0xe]
      %v2179 = vld [vmem:[#allocation2 + $0x94] sm:$0xf]
      %v2180 = vld [vmem:[#allocation2 + $0x98] sm:$0x1]
      %v2181 = vld [vmem:[#allocation2 + $0x9c] sm:$0xe]
      %v2182 = vld [vmem:[#allocation2 + $0xa0] sm:$0xf]
      %v2183 = vld [vmem:[#allocation2 + $0xa4] sm:$0x1]
      %v2184 = vld [vmem:[#allocation2 + $0xa8] sm:$0xe]
      %v2185 = vld [vmem:[#allocation2 + $0xac] sm:$0xf]
      %v2186 = vld [vmem:[#allocation2 + $0xb0] sm:$0x1]
      %v2187 = vld [vmem:[#allocation2 + $0xb4] sm:$0xe]
      %v2188 = vld [vmem:[#allocation2 + $0xb8] sm:$0xf]
      %v2189 = vld [vmem:[#allocation2 + $0xbc] sm:$0x1]
      %vm2238 = vcmask 1042432
      %vm2239 = vcmask 1046532
      %vm2240 = vmor %vm2238, %vm2239
      %v2241 = vrot.slane %v2142, 5
      %v2242 = vrot.slane %v2241, 4
      %v2243 = vrot.slane %v2143, 5
      %v2244 = vsel %vm2240, %v2242, %v2243
      %v2245 = vrot.slane %v2243, 4
      %v2246 = vrot.slane %v2144, 5
      %v2247 = vsel %vm2240, %v2245, %v2246
      %v2248 = vrot.slane %v2145, 5
      %v2249 = vrot.slane %v2248, 4
      %v2250 = vrot.slane %v2146, 5
      %v2251 = vsel %vm2240, %v2249, %v2250
      %v2252 = vrot.slane %v2250, 4
      %v2253 = vrot.slane %v2147, 5
      %v2254 = vsel %vm2240, %v2252, %v2253
      %v2255 = vrot.slane %v2148, 5
      %v2256 = vrot.slane %v2255, 4
      %v2257 = vrot.slane %v2149, 5
      %v2258 = vsel %vm2240, %v2256, %v2257
      %v2259 = vrot.slane %v2257, 4
      %v2260 = vrot.slane %v2150, 5
      %v2261 = vsel %vm2240, %v2259, %v2260
      %v2262 = vrot.slane %v2151, 5
      %v2263 = vrot.slane %v2262, 4
      %v2264 = vrot.slane %v2152, 5
      %v2265 = vsel %vm2240, %v2263, %v2264
      %v2266 = vrot.slane %v2264, 4
      %v2267 = vrot.slane %v2153, 5
      %v2268 = vsel %vm2240, %v2266, %v2267
      %v2269 = vrot.slane %v2154, 5
      %v2270 = vrot.slane %v2269, 4
      %v2271 = vrot.slane %v2155, 5
      %v2272 = vsel %vm2240, %v2270, %v2271
      %v2273 = vrot.slane %v2271, 4
      %v2274 = vrot.slane %v2156, 5
      %v2275 = vsel %vm2240, %v2273, %v2274
      %v2276 = vrot.slane %v2157, 5
      %v2277 = vrot.slane %v2276, 4
      %v2278 = vrot.slane %v2158, 5
      %v2279 = vsel %vm2240, %v2277, %v2278
      %v2280 = vrot.slane %v2278, 4
      %v2281 = vrot.slane %v2159, 5
      %v2282 = vsel %vm2240, %v2280, %v2281
      %v2283 = vrot.slane %v2160, 5
      %v2284 = vrot.slane %v2283, 4
      %v2285 = vrot.slane %v2161, 5
      %v2286 = vsel %vm2240, %v2284, %v2285
      %v2287 = vrot.slane %v2285, 4
      %v2288 = vrot.slane %v2162, 5
      %v2289 = vsel %vm2240, %v2287, %v2288
      %v2290 = vrot.slane %v2163, 5
      %v2291 = vrot.slane %v2290, 4
      %v2292 = vrot.slane %v2164, 5
      %v2293 = vsel %vm2240, %v2291, %v2292
      %v2294 = vrot.slane %v2292, 4
      %v2295 = vrot.slane %v2165, 5
      %v2296 = vsel %vm2240, %v2294, %v2295
      %v2297 = vrot.slane %v2166, 5
      %v2298 = vrot.slane %v2297, 4
      %v2299 = vrot.slane %v2167, 5
      %v2300 = vsel %vm2240, %v2298, %v2299
      %v2301 = vrot.slane %v2299, 4
      %v2302 = vrot.slane %v2168, 5
      %v2303 = vsel %vm2240, %v2301, %v2302
      %v2304 = vrot.slane %v2169, 5
      %v2305 = vrot.slane %v2304, 4
      %v2306 = vrot.slane %v2170, 5
      %v2307 = vsel %vm2240, %v2305, %v2306
      %v2308 = vrot.slane %v2306, 4
      %v2309 = vrot.slane %v2171, 5
      %v2310 = vsel %vm2240, %v2308, %v2309
      %v2311 = vrot.slane %v2172, 5
      %v2312 = vrot.slane %v2311, 4
      %v2313 = vrot.slane %v2173, 5
      %v2314 = vsel %vm2240, %v2312, %v2313
      %v2315 = vrot.slane %v2313, 4
      %v2316 = vrot.slane %v2174, 5
      %v2317 = vsel %vm2240, %v2315, %v2316
      %v2318 = vrot.slane %v2175, 5
      %v2319 = vrot.slane %v2318, 4
      %v2320 = vrot.slane %v2176, 5
      %v2321 = vsel %vm2240, %v2319, %v2320
      %v2322 = vrot.slane %v2320, 4
      %v2323 = vrot.slane %v2177, 5
      %v2324 = vsel %vm2240, %v2322, %v2323
      %v2325 = vrot.slane %v2178, 5
      %v2326 = vrot.slane %v2325, 4
      %v2327 = vrot.slane %v2179, 5
      %v2328 = vsel %vm2240, %v2326, %v2327
      %v2329 = vrot.slane %v2327, 4
      %v2330 = vrot.slane %v2180, 5
      %v2331 = vsel %vm2240, %v2329, %v2330
      %v2332 = vrot.slane %v2181, 5
      %v2333 = vrot.slane %v2332, 4
      %v2334 = vrot.slane %v2182, 5
      %v2335 = vsel %vm2240, %v2333, %v2334
      %v2336 = vrot.slane %v2334, 4
      %v2337 = vrot.slane %v2183, 5
      %v2338 = vsel %vm2240, %v2336, %v2337
      %v2339 = vrot.slane %v2184, 5
      %v2340 = vrot.slane %v2339, 4
      %v2341 = vrot.slane %v2185, 5
      %v2342 = vsel %vm2240, %v2340, %v2341
      %v2343 = vrot.slane %v2341, 4
      %v2344 = vrot.slane %v2186, 5
      %v2345 = vsel %vm2240, %v2343, %v2344
      %v2346 = vrot.slane %v2187, 5
      %v2347 = vrot.slane %v2346, 4
      %v2348 = vrot.slane %v2188, 5
      %v2349 = vsel %vm2240, %v2347, %v2348
      %v2350 = vrot.slane %v2348, 4
      %v2351 = vrot.slane %v2189, 5
      %v2352 = vsel %vm2240, %v2350, %v2351
      %2385 = vst [vmem:[#allocation3 + $0x8] sm:$0xf] %v2244
      %2386 = vst [vmem:[#allocation3 + $0x2c] sm:$0xf] %v2247
      %2387 = vst [vmem:[#allocation3 + $0x50] sm:$0xf] %v2251
      %2388 = vst [vmem:[#allocation3 + $0x74] sm:$0xf] %v2254
      %2389 = vst [vmem:[#allocation3 + $0x98] sm:$0xf] %v2258
      %2390 = vst [vmem:[#allocation3 + $0xbc] sm:$0xf] %v2261
      %2391 = vst [vmem:[#allocation3 + $0xe0] sm:$0xf] %v2265
      %2392 = vst [vmem:[#allocation3 + $0x104] sm:$0xf] %v2268
      %2393 = vst [vmem:[#allocation3 + $0x128] sm:$0xf] %v2272
      %2394 = vst [vmem:[#allocation3 + $0x14c] sm:$0xf] %v2275
      %2395 = vst [vmem:[#allocation3 + $0x170] sm:$0xf] %v2279
      %2396 = vst [vmem:[#allocation3 + $0x194] sm:$0xf] %v2282
      %2397 = vst [vmem:[#allocation3 + $0x1b8] sm:$0xf] %v2286
      %2398 = vst [vmem:[#allocation3 + $0x1dc] sm:$0xf] %v2289
      %2399 = vst [vmem:[#allocation3 + $0x200] sm:$0xf] %v2293
      %2400 = vst [vmem:[#allocation3 + $0x224] sm:$0xf] %v2296
      %2401 = vst [vmem:[#allocation3 + $0x248] sm:$0xf] %v2300
      %2402 = vst [vmem:[#allocation3 + $0x26c] sm:$0xf] %v2303
      %2403 = vst [vmem:[#allocation3 + $0x290] sm:$0xf] %v2307
      %2404 = vst [vmem:[#allocation3 + $0x2b4] sm:$0xf] %v2310
      %2405 = vst [vmem:[#allocation3 + $0x2d8] sm:$0xf] %v2314
      %2406 = vst [vmem:[#allocation3 + $0x2fc] sm:$0xf] %v2317
      %2407 = vst [vmem:[#allocation3 + $0x320] sm:$0xf] %v2321
      %2408 = vst [vmem:[#allocation3 + $0x344] sm:$0xf] %v2324
      %2409 = vst [vmem:[#allocation3 + $0x368] sm:$0xf] %v2328
      %2410 = vst [vmem:[#allocation3 + $0x38c] sm:$0xf] %v2331
      %2411 = vst [vmem:[#allocation3 + $0x3b0] sm:$0xf] %v2335
      %2412 = vst [vmem:[#allocation3 + $0x3d4] sm:$0xf] %v2338
      %2413 = vst [vmem:[#allocation3 + $0x3f8] sm:$0xf] %v2342
      %2414 = vst [vmem:[#allocation3 + $0x41c] sm:$0xf] %v2345
      %2415 = vst [vmem:[#allocation3 + $0x440] sm:$0xf] %v2349
      %2416 = vst [vmem:[#allocation3 + $0x464] sm:$0xf] %v2352
      %v2417 = vld [vmem:[%s1461] sm:$0xf]
      %v2418 = vld [vmem:[%s1461 + $0x4] sm:$0xf]
      %v2419 = vld [vmem:[%s1461 + $0xc] sm:$0xf]
      %v2420 = vld [vmem:[%s1461 + $0x10] sm:$0xf]
      %v2421 = vld [vmem:[%s1461 + $0x18] sm:$0xf]
      %v2422 = vld [vmem:[%s1461 + $0x1c] sm:$0xf]
      %v2423 = vld [vmem:[%s1461 + $0x24] sm:$0xf]
      %v2424 = vld [vmem:[%s1461 + $0x28] sm:$0xf]
      %v2425 = vld [vmem:[%s1461 + $0x30] sm:$0xf]
      %v2426 = vld [vmem:[%s1461 + $0x34] sm:$0xf]
      %v2427 = vld [vmem:[%s1461 + $0x3c] sm:$0xf]
      %v2428 = vld [vmem:[%s1461 + $0x40] sm:$0xf]
      %v2429 = vld [vmem:[%s1461 + $0x48] sm:$0xf]
      %v2430 = vld [vmem:[%s1461 + $0x4c] sm:$0xf]
      %v2431 = vld [vmem:[%s1461 + $0x54] sm:$0xf]
      %v2432 = vld [vmem:[%s1461 + $0x58] sm:$0xf]
      %v2433 = vld [vmem:[%s1461 + $0x60] sm:$0xf]
      %v2434 = vld [vmem:[%s1461 + $0x64] sm:$0xf]
      %v2435 = vld [vmem:[%s1461 + $0x6c] sm:$0xf]
      %v2436 = vld [vmem:[%s1461 + $0x70] sm:$0xf]
      %v2437 = vld [vmem:[%s1461 + $0x78] sm:$0xf]
      %v2438 = vld [vmem:[%s1461 + $0x7c] sm:$0xf]
      %v2439 = vld [vmem:[%s1461 + $0x84] sm:$0xf]
      %v2440 = vld [vmem:[%s1461 + $0x88] sm:$0xf]
      %v2441 = vld [vmem:[%s1461 + $0x90] sm:$0xf]
      %v2442 = vld [vmem:[%s1461 + $0x94] sm:$0xf]
      %v2443 = vld [vmem:[%s1461 + $0x9c] sm:$0xf]
      %v2444 = vld [vmem:[%s1461 + $0xa0] sm:$0xf]
      %v2445 = vld [vmem:[%s1461 + $0xa8] sm:$0xf]
      %v2446 = vld [vmem:[%s1461 + $0xac] sm:$0xf]
      %v2447 = vld [vmem:[%s1461 + $0xb4] sm:$0xf]
      %v2448 = vld [vmem:[%s1461 + $0xb8] sm:$0xf]
      %2449 = vst [vmem:[#allocation3 + $0xc] sm:$0xf] %v2417
      %2450 = vst [vmem:[#allocation3 + $0x30] sm:$0xf] %v2418
      %2451 = vst [vmem:[#allocation3 + $0x54] sm:$0xf] %v2419
      %2452 = vst [vmem:[#allocation3 + $0x78] sm:$0xf] %v2420
      %2453 = vst [vmem:[#allocation3 + $0x9c] sm:$0xf] %v2421
      %2454 = vst [vmem:[#allocation3 + $0xc0] sm:$0xf] %v2422
      %2455 = vst [vmem:[#allocation3 + $0xe4] sm:$0xf] %v2423
      %2456 = vst [vmem:[#allocation3 + $0x108] sm:$0xf] %v2424
      %2457 = vst [vmem:[#allocation3 + $0x12c] sm:$0xf] %v2425
      %2458 = vst [vmem:[#allocation3 + $0x150] sm:$0xf] %v2426
      %2459 = vst [vmem:[#allocation3 + $0x174] sm:$0xf] %v2427
      %2460 = vst [vmem:[#allocation3 + $0x198] sm:$0xf] %v2428
      %2461 = vst [vmem:[#allocation3 + $0x1bc] sm:$0xf] %v2429
      %2462 = vst [vmem:[#allocation3 + $0x1e0] sm:$0xf] %v2430
      %2463 = vst [vmem:[#allocation3 + $0x204] sm:$0xf] %v2431
      %2464 = vst [vmem:[#allocation3 + $0x228] sm:$0xf] %v2432
      %2465 = vst [vmem:[#allocation3 + $0x24c] sm:$0xf] %v2433
      %2466 = vst [vmem:[#allocation3 + $0x270] sm:$0xf] %v2434
      %2467 = vst [vmem:[#allocation3 + $0x294] sm:$0xf] %v2435
      %2468 = vst [vmem:[#allocation3 + $0x2b8] sm:$0xf] %v2436
      %2469 = vst [vmem:[#allocation3 + $0x2dc] sm:$0xf] %v2437
      %2470 = vst [vmem:[#allocation3 + $0x300] sm:$0xf] %v2438
      %2471 = vst [vmem:[#allocation3 + $0x324] sm:$0xf] %v2439
      %2472 = vst [vmem:[#allocation3 + $0x348] sm:$0xf] %v2440
      %2473 = vst [vmem:[#allocation3 + $0x36c] sm:$0xf] %v2441
      %2474 = vst [vmem:[#allocation3 + $0x390] sm:$0xf] %v2442
      %2475 = vst [vmem:[#allocation3 + $0x3b4] sm:$0xf] %v2443
      %2476 = vst [vmem:[#allocation3 + $0x3d8] sm:$0xf] %v2444
      %2477 = vst [vmem:[#allocation3 + $0x3fc] sm:$0xf] %v2445
      %2478 = vst [vmem:[#allocation3 + $0x420] sm:$0xf] %v2446
      %2479 = vst [vmem:[#allocation3 + $0x444] sm:$0xf] %v2447
      %2480 = vst [vmem:[#allocation3 + $0x468] sm:$0xf] %v2448
      %v2481 = vld [vmem:[%s1461] sm:$0xf]
      %v2482 = vld [vmem:[%s1461 + $0x4] sm:$0xf]
      %v2483 = vld [vmem:[%s1461 + $0x8] sm:$0x1]
      %v2484 = vld [vmem:[%s1461 + $0xc] sm:$0xf]
      %v2485 = vld [vmem:[%s1461 + $0x10] sm:$0xf]
      %v2486 = vld [vmem:[%s1461 + $0x14] sm:$0x1]
      %v2487 = vld [vmem:[%s1461 + $0x18] sm:$0xf]
      %v2488 = vld [vmem:[%s1461 + $0x1c] sm:$0xf]
      %v2489 = vld [vmem:[%s1461 + $0x20] sm:$0x1]
      %v2490 = vld [vmem:[%s1461 + $0x24] sm:$0xf]
      %v2491 = vld [vmem:[%s1461 + $0x28] sm:$0xf]
      %v2492 = vld [vmem:[%s1461 + $0x2c] sm:$0x1]
      %v2493 = vld [vmem:[%s1461 + $0x30] sm:$0xf]
      %v2494 = vld [vmem:[%s1461 + $0x34] sm:$0xf]
      %v2495 = vld [vmem:[%s1461 + $0x38] sm:$0x1]
      %v2496 = vld [vmem:[%s1461 + $0x3c] sm:$0xf]
      %v2497 = vld [vmem:[%s1461 + $0x40] sm:$0xf]
      %v2498 = vld [vmem:[%s1461 + $0x44] sm:$0x1]
      %v2499 = vld [vmem:[%s1461 + $0x48] sm:$0xf]
      %v2500 = vld [vmem:[%s1461 + $0x4c] sm:$0xf]
      %v2501 = vld [vmem:[%s1461 + $0x50] sm:$0x1]
      %v2502 = vld [vmem:[%s1461 + $0x54] sm:$0xf]
      %v2503 = vld [vmem:[%s1461 + $0x58] sm:$0xf]
      %v2504 = vld [vmem:[%s1461 + $0x5c] sm:$0x1]
      %v2505 = vld [vmem:[%s1461 + $0x60] sm:$0xf]
      %v2506 = vld [vmem:[%s1461 + $0x64] sm:$0xf]
      %v2507 = vld [vmem:[%s1461 + $0x68] sm:$0x1]
      %v2508 = vld [vmem:[%s1461 + $0x6c] sm:$0xf]
      %v2509 = vld [vmem:[%s1461 + $0x70] sm:$0xf]
      %v2510 = vld [vmem:[%s1461 + $0x74] sm:$0x1]
      %v2511 = vld [vmem:[%s1461 + $0x78] sm:$0xf]
      %v2512 = vld [vmem:[%s1461 + $0x7c] sm:$0xf]
      %v2513 = vld [vmem:[%s1461 + $0x80] sm:$0x1]
      %v2514 = vld [vmem:[%s1461 + $0x84] sm:$0xf]
      %v2515 = vld [vmem:[%s1461 + $0x88] sm:$0xf]
      %v2516 = vld [vmem:[%s1461 + $0x8c] sm:$0x1]
      %v2517 = vld [vmem:[%s1461 + $0x90] sm:$0xf]
      %v2518 = vld [vmem:[%s1461 + $0x94] sm:$0xf]
      %v2519 = vld [vmem:[%s1461 + $0x98] sm:$0x1]
      %v2520 = vld [vmem:[%s1461 + $0x9c] sm:$0xf]
      %v2521 = vld [vmem:[%s1461 + $0xa0] sm:$0xf]
      %v2522 = vld [vmem:[%s1461 + $0xa4] sm:$0x1]
      %v2523 = vld [vmem:[%s1461 + $0xa8] sm:$0xf]
      %v2524 = vld [vmem:[%s1461 + $0xac] sm:$0xf]
      %v2525 = vld [vmem:[%s1461 + $0xb0] sm:$0x1]
      %v2526 = vld [vmem:[%s1461 + $0xb4] sm:$0xf]
      %v2527 = vld [vmem:[%s1461 + $0xb8] sm:$0xf]
      %v2528 = vld [vmem:[%s1461 + $0xbc] sm:$0x1]
      %v2530 = vshrl.u32 %v2481, 16
      %v2532 = vrot.slane %v2530, 4
      %v2533 = vshll.u32 %v2481, 16
      %v2535 = vrot.slane %v2533, 5
      %v2536 = vor.u32 %v2532, %v2535
      %v2537 = vrot.slane %v2536, 4
      %v2539 = vshll.u32 %v2482, 16
      %v2541 = vrot.slane %v2539, 5
      %v2542 = vsel %vm1693, %v2537, %v2541
      %v2543 = vshrl.u32 %v2482, 16
      %v2545 = vrot.slane %v2543, 4
      %v2546 = vor.u32 %v2545, %v2541
      %v2547 = vrot.slane %v2546, 4
      %v2549 = vshll.u32 %v2483, 16
      %v2551 = vrot.slane %v2549, 5
      %v2552 = vsel %vm1693, %v2547, %v2551
      %v2554 = vshrl.u32 %v2484, 16
      %v2556 = vrot.slane %v2554, 4
      %v2557 = vshll.u32 %v2484, 16
      %v2559 = vrot.slane %v2557, 5
      %v2560 = vor.u32 %v2556, %v2559
      %v2561 = vrot.slane %v2560, 4
      %v2563 = vshll.u32 %v2485, 16
      %v2565 = vrot.slane %v2563, 5
      %v2566 = vsel %vm1693, %v2561, %v2565
      %v2567 = vshrl.u32 %v2485, 16
      %v2569 = vrot.slane %v2567, 4
      %v2570 = vor.u32 %v2569, %v2565
      %v2571 = vrot.slane %v2570, 4
      %v2573 = vshll.u32 %v2486, 16
      %v2575 = vrot.slane %v2573, 5
      %v2576 = vsel %vm1693, %v2571, %v2575
      %v2578 = vshrl.u32 %v2487, 16
      %v2580 = vrot.slane %v2578, 4
      %v2581 = vshll.u32 %v2487, 16
      %v2583 = vrot.slane %v2581, 5
      %v2584 = vor.u32 %v2580, %v2583
      %v2585 = vrot.slane %v2584, 4
      %v2587 = vshll.u32 %v2488, 16
      %v2589 = vrot.slane %v2587, 5
      %v2590 = vsel %vm1693, %v2585, %v2589
      %v2591 = vshrl.u32 %v2488, 16
      %v2593 = vrot.slane %v2591, 4
      %v2594 = vor.u32 %v2593, %v2589
      %v2595 = vrot.slane %v2594, 4
      %v2597 = vshll.u32 %v2489, 16
      %v2599 = vrot.slane %v2597, 5
      %v2600 = vsel %vm1693, %v2595, %v2599
      %v2602 = vshrl.u32 %v2490, 16
      %v2604 = vrot.slane %v2602, 4
      %v2605 = vshll.u32 %v2490, 16
      %v2607 = vrot.slane %v2605, 5
      %v2608 = vor.u32 %v2604, %v2607
      %v2609 = vrot.slane %v2608, 4
      %v2611 = vshll.u32 %v2491, 16
      %v2613 = vrot.slane %v2611, 5
      %v2614 = vsel %vm1693, %v2609, %v2613
      %v2615 = vshrl.u32 %v2491, 16
      %v2617 = vrot.slane %v2615, 4
      %v2618 = vor.u32 %v2617, %v2613
      %v2619 = vrot.slane %v2618, 4
      %v2621 = vshll.u32 %v2492, 16
      %v2623 = vrot.slane %v2621, 5
      %v2624 = vsel %vm1693, %v2619, %v2623
      %v2626 = vshrl.u32 %v2493, 16
      %v2628 = vrot.slane %v2626, 4
      %v2629 = vshll.u32 %v2493, 16
      %v2631 = vrot.slane %v2629, 5
      %v2632 = vor.u32 %v2628, %v2631
      %v2633 = vrot.slane %v2632, 4
      %v2635 = vshll.u32 %v2494, 16
      %v2637 = vrot.slane %v2635, 5
      %v2638 = vsel %vm1693, %v2633, %v2637
      %v2639 = vshrl.u32 %v2494, 16
      %v2641 = vrot.slane %v2639, 4
      %v2642 = vor.u32 %v2641, %v2637
      %v2643 = vrot.slane %v2642, 4
      %v2645 = vshll.u32 %v2495, 16
      %v2647 = vrot.slane %v2645, 5
      %v2648 = vsel %vm1693, %v2643, %v2647
      %v2650 = vshrl.u32 %v2496, 16
      %v2652 = vrot.slane %v2650, 4
      %v2653 = vshll.u32 %v2496, 16
      %v2655 = vrot.slane %v2653, 5
      %v2656 = vor.u32 %v2652, %v2655
      %v2657 = vrot.slane %v2656, 4
      %v2659 = vshll.u32 %v2497, 16
      %v2661 = vrot.slane %v2659, 5
      %v2662 = vsel %vm1693, %v2657, %v2661
      %v2663 = vshrl.u32 %v2497, 16
      %v2665 = vrot.slane %v2663, 4
      %v2666 = vor.u32 %v2665, %v2661
      %v2667 = vrot.slane %v2666, 4
      %v2669 = vshll.u32 %v2498, 16
      %v2671 = vrot.slane %v2669, 5
      %v2672 = vsel %vm1693, %v2667, %v2671
      %v2674 = vshrl.u32 %v2499, 16
      %v2676 = vrot.slane %v2674, 4
      %v2677 = vshll.u32 %v2499, 16
      %v2679 = vrot.slane %v2677, 5
      %v2680 = vor.u32 %v2676, %v2679
      %v2681 = vrot.slane %v2680, 4
      %v2683 = vshll.u32 %v2500, 16
      %v2685 = vrot.slane %v2683, 5
      %v2686 = vsel %vm1693, %v2681, %v2685
      %v2687 = vshrl.u32 %v2500, 16
      %v2689 = vrot.slane %v2687, 4
      %v2690 = vor.u32 %v2689, %v2685
      %v2691 = vrot.slane %v2690, 4
      %v2693 = vshll.u32 %v2501, 16
      %v2695 = vrot.slane %v2693, 5
      %v2696 = vsel %vm1693, %v2691, %v2695
      %v2698 = vshrl.u32 %v2502, 16
      %v2700 = vrot.slane %v2698, 4
      %v2701 = vshll.u32 %v2502, 16
      %v2703 = vrot.slane %v2701, 5
      %v2704 = vor.u32 %v2700, %v2703
      %v2705 = vrot.slane %v2704, 4
      %v2707 = vshll.u32 %v2503, 16
      %v2709 = vrot.slane %v2707, 5
      %v2710 = vsel %vm1693, %v2705, %v2709
      %v2711 = vshrl.u32 %v2503, 16
      %v2713 = vrot.slane %v2711, 4
      %v2714 = vor.u32 %v2713, %v2709
      %v2715 = vrot.slane %v2714, 4
      %v2717 = vshll.u32 %v2504, 16
      %v2719 = vrot.slane %v2717, 5
      %v2720 = vsel %vm1693, %v2715, %v2719
      %v2722 = vshrl.u32 %v2505, 16
      %v2724 = vrot.slane %v2722, 4
      %v2725 = vshll.u32 %v2505, 16
      %v2727 = vrot.slane %v2725, 5
      %v2728 = vor.u32 %v2724, %v2727
      %v2729 = vrot.slane %v2728, 4
      %v2731 = vshll.u32 %v2506, 16
      %v2733 = vrot.slane %v2731, 5
      %v2734 = vsel %vm1693, %v2729, %v2733
      %v2735 = vshrl.u32 %v2506, 16
      %v2737 = vrot.slane %v2735, 4
      %v2738 = vor.u32 %v2737, %v2733
      %v2739 = vrot.slane %v2738, 4
      %v2741 = vshll.u32 %v2507, 16
      %v2743 = vrot.slane %v2741, 5
      %v2744 = vsel %vm1693, %v2739, %v2743
      %v2746 = vshrl.u32 %v2508, 16
      %v2748 = vrot.slane %v2746, 4
      %v2749 = vshll.u32 %v2508, 16
      %v2751 = vrot.slane %v2749, 5
      %v2752 = vor.u32 %v2748, %v2751
      %v2753 = vrot.slane %v2752, 4
      %v2755 = vshll.u32 %v2509, 16
      %v2757 = vrot.slane %v2755, 5
      %v2758 = vsel %vm1693, %v2753, %v2757
      %v2759 = vshrl.u32 %v2509, 16
      %v2761 = vrot.slane %v2759, 4
      %v2762 = vor.u32 %v2761, %v2757
      %v2763 = vrot.slane %v2762, 4
      %v2765 = vshll.u32 %v2510, 16
      %v2767 = vrot.slane %v2765, 5
      %v2768 = vsel %vm1693, %v2763, %v2767
      %v2770 = vshrl.u32 %v2511, 16
      %v2772 = vrot.slane %v2770, 4
      %v2773 = vshll.u32 %v2511, 16
      %v2775 = vrot.slane %v2773, 5
      %v2776 = vor.u32 %v2772, %v2775
      %v2777 = vrot.slane %v2776, 4
      %v2779 = vshll.u32 %v2512, 16
      %v2781 = vrot.slane %v2779, 5
      %v2782 = vsel %vm1693, %v2777, %v2781
      %v2783 = vshrl.u32 %v2512, 16
      %v2785 = vrot.slane %v2783, 4
      %v2786 = vor.u32 %v2785, %v2781
      %v2787 = vrot.slane %v2786, 4
      %v2789 = vshll.u32 %v2513, 16
      %v2791 = vrot.slane %v2789, 5
      %v2792 = vsel %vm1693, %v2787, %v2791
      %v2794 = vshrl.u32 %v2514, 16
      %v2796 = vrot.slane %v2794, 4
      %v2797 = vshll.u32 %v2514, 16
      %v2799 = vrot.slane %v2797, 5
      %v2800 = vor.u32 %v2796, %v2799
      %v2801 = vrot.slane %v2800, 4
      %v2803 = vshll.u32 %v2515, 16
      %v2805 = vrot.slane %v2803, 5
      %v2806 = vsel %vm1693, %v2801, %v2805
      %v2807 = vshrl.u32 %v2515, 16
      %v2809 = vrot.slane %v2807, 4
      %v2810 = vor.u32 %v2809, %v2805
      %v2811 = vrot.slane %v2810, 4
      %v2813 = vshll.u32 %v2516, 16
      %v2815 = vrot.slane %v2813, 5
      %v2816 = vsel %vm1693, %v2811, %v2815
      %v2818 = vshrl.u32 %v2517, 16
      %v2820 = vrot.slane %v2818, 4
      %v2821 = vshll.u32 %v2517, 16
      %v2823 = vrot.slane %v2821, 5
      %v2824 = vor.u32 %v2820, %v2823
      %v2825 = vrot.slane %v2824, 4
      %v2827 = vshll.u32 %v2518, 16
      %v2829 = vrot.slane %v2827, 5
      %v2830 = vsel %vm1693, %v2825, %v2829
      %v2831 = vshrl.u32 %v2518, 16
      %v2833 = vrot.slane %v2831, 4
      %v2834 = vor.u32 %v2833, %v2829
      %v2835 = vrot.slane %v2834, 4
      %v2837 = vshll.u32 %v2519, 16
      %v2839 = vrot.slane %v2837, 5
      %v2840 = vsel %vm1693, %v2835, %v2839
      %v2842 = vshrl.u32 %v2520, 16
      %v2844 = vrot.slane %v2842, 4
      %v2845 = vshll.u32 %v2520, 16
      %v2847 = vrot.slane %v2845, 5
      %v2848 = vor.u32 %v2844, %v2847
      %v2849 = vrot.slane %v2848, 4
      %v2851 = vshll.u32 %v2521, 16
      %v2853 = vrot.slane %v2851, 5
      %v2854 = vsel %vm1693, %v2849, %v2853
      %v2855 = vshrl.u32 %v2521, 16
      %v2857 = vrot.slane %v2855, 4
      %v2858 = vor.u32 %v2857, %v2853
      %v2859 = vrot.slane %v2858, 4
      %v2861 = vshll.u32 %v2522, 16
      %v2863 = vrot.slane %v2861, 5
      %v2864 = vsel %vm1693, %v2859, %v2863
      %v2866 = vshrl.u32 %v2523, 16
      %v2868 = vrot.slane %v2866, 4
      %v2869 = vshll.u32 %v2523, 16
      %v2871 = vrot.slane %v2869, 5
      %v2872 = vor.u32 %v2868, %v2871
      %v2873 = vrot.slane %v2872, 4
      %v2875 = vshll.u32 %v2524, 16
      %v2877 = vrot.slane %v2875, 5
      %v2878 = vsel %vm1693, %v2873, %v2877
      %v2879 = vshrl.u32 %v2524, 16
      %v2881 = vrot.slane %v2879, 4
      %v2882 = vor.u32 %v2881, %v2877
      %v2883 = vrot.slane %v2882, 4
      %v2885 = vshll.u32 %v2525, 16
      %v2887 = vrot.slane %v2885, 5
      %v2888 = vsel %vm1693, %v2883, %v2887
      %v2890 = vshrl.u32 %v2526, 16
      %v2892 = vrot.slane %v2890, 4
      %v2893 = vshll.u32 %v2526, 16
      %v2895 = vrot.slane %v2893, 5
      %v2896 = vor.u32 %v2892, %v2895
      %v2897 = vrot.slane %v2896, 4
      %v2899 = vshll.u32 %v2527, 16
      %v2901 = vrot.slane %v2899, 5
      %v2902 = vsel %vm1693, %v2897, %v2901
      %v2903 = vshrl.u32 %v2527, 16
      %v2905 = vrot.slane %v2903, 4
      %v2906 = vor.u32 %v2905, %v2901
      %v2907 = vrot.slane %v2906, 4
      %v2909 = vshll.u32 %v2528, 16
      %v2911 = vrot.slane %v2909, 5
      %v2912 = vsel %vm1693, %v2907, %v2911
      %2945 = vst [vmem:[#allocation3 + $0x10] sm:$0xf] %v2542
      %2946 = vst [vmem:[#allocation3 + $0x34] sm:$0xf] %v2552
      %2947 = vst [vmem:[#allocation3 + $0x58] sm:$0xf] %v2566
      %2948 = vst [vmem:[#allocation3 + $0x7c] sm:$0xf] %v2576
      %2949 = vst [vmem:[#allocation3 + $0xa0] sm:$0xf] %v2590
      %2950 = vst [vmem:[#allocation3 + $0xc4] sm:$0xf] %v2600
      %2951 = vst [vmem:[#allocation3 + $0xe8] sm:$0xf] %v2614
      %2952 = vst [vmem:[#allocation3 + $0x10c] sm:$0xf] %v2624
      %2953 = vst [vmem:[#allocation3 + $0x130] sm:$0xf] %v2638
      %2954 = vst [vmem:[#allocation3 + $0x154] sm:$0xf] %v2648
      %2955 = vst [vmem:[#allocation3 + $0x178] sm:$0xf] %v2662
      %2956 = vst [vmem:[#allocation3 + $0x19c] sm:$0xf] %v2672
      %2957 = vst [vmem:[#allocation3 + $0x1c0] sm:$0xf] %v2686
      %2958 = vst [vmem:[#allocation3 + $0x1e4] sm:$0xf] %v2696
      %2959 = vst [vmem:[#allocation3 + $0x208] sm:$0xf] %v2710
      %2960 = vst [vmem:[#allocation3 + $0x22c] sm:$0xf] %v2720
      %2961 = vst [vmem:[#allocation3 + $0x250] sm:$0xf] %v2734
      %2962 = vst [vmem:[#allocation3 + $0x274] sm:$0xf] %v2744
      %2963 = vst [vmem:[#allocation3 + $0x298] sm:$0xf] %v2758
      %2964 = vst [vmem:[#allocation3 + $0x2bc] sm:$0xf] %v2768
      %2965 = vst [vmem:[#allocation3 + $0x2e0] sm:$0xf] %v2782
      %2966 = vst [vmem:[#allocation3 + $0x304] sm:$0xf] %v2792
      %2967 = vst [vmem:[#allocation3 + $0x328] sm:$0xf] %v2806
      %2968 = vst [vmem:[#allocation3 + $0x34c] sm:$0xf] %v2816
      %2969 = vst [vmem:[#allocation3 + $0x370] sm:$0xf] %v2830
      %2970 = vst [vmem:[#allocation3 + $0x394] sm:$0xf] %v2840
      %2971 = vst [vmem:[#allocation3 + $0x3b8] sm:$0xf] %v2854
      %2972 = vst [vmem:[#allocation3 + $0x3dc] sm:$0xf] %v2864
      %2973 = vst [vmem:[#allocation3 + $0x400] sm:$0xf] %v2878
      %2974 = vst [vmem:[#allocation3 + $0x424] sm:$0xf] %v2888
      %2975 = vst [vmem:[#allocation3 + $0x448] sm:$0xf] %v2902
      %2976 = vst [vmem:[#allocation3 + $0x46c] sm:$0xf] %v2912
      %v2977 = vld [vmem:[%s1461] sm:$0xe]
      %v2978 = vld [vmem:[%s1461 + $0x4] sm:$0xf]
      %v2979 = vld [vmem:[%s1461 + $0x8] sm:$0x1]
      %v2980 = vld [vmem:[%s1461 + $0xc] sm:$0xe]
      %v2981 = vld [vmem:[%s1461 + $0x10] sm:$0xf]
      %v2982 = vld [vmem:[%s1461 + $0x14] sm:$0x1]
      %v2983 = vld [vmem:[%s1461 + $0x18] sm:$0xe]
      %v2984 = vld [vmem:[%s1461 + $0x1c] sm:$0xf]
      %v2985 = vld [vmem:[%s1461 + $0x20] sm:$0x1]
      %v2986 = vld [vmem:[%s1461 + $0x24] sm:$0xe]
      %v2987 = vld [vmem:[%s1461 + $0x28] sm:$0xf]
      %v2988 = vld [vmem:[%s1461 + $0x2c] sm:$0x1]
      %v2989 = vld [vmem:[%s1461 + $0x30] sm:$0xe]
      %v2990 = vld [vmem:[%s1461 + $0x34] sm:$0xf]
      %v2991 = vld [vmem:[%s1461 + $0x38] sm:$0x1]
      %v2992 = vld [vmem:[%s1461 + $0x3c] sm:$0xe]
      %v2993 = vld [vmem:[%s1461 + $0x40] sm:$0xf]
      %v2994 = vld [vmem:[%s1461 + $0x44] sm:$0x1]
      %v2995 = vld [vmem:[%s1461 + $0x48] sm:$0xe]
      %v2996 = vld [vmem:[%s1461 + $0x4c] sm:$0xf]
      %v2997 = vld [vmem:[%s1461 + $0x50] sm:$0x1]
      %v2998 = vld [vmem:[%s1461 + $0x54] sm:$0xe]
      %v2999 = vld [vmem:[%s1461 + $0x58] sm:$0xf]
      %v3000 = vld [vmem:[%s1461 + $0x5c] sm:$0x1]
      %v3001 = vld [vmem:[%s1461 + $0x60] sm:$0xe]
      %v3002 = vld [vmem:[%s1461 + $0x64] sm:$0xf]
      %v3003 = vld [vmem:[%s1461 + $0x68] sm:$0x1]
      %v3004 = vld [vmem:[%s1461 + $0x6c] sm:$0xe]
      %v3005 = vld [vmem:[%s1461 + $0x70] sm:$0xf]
      %v3006 = vld [vmem:[%s1461 + $0x74] sm:$0x1]
      %v3007 = vld [vmem:[%s1461 + $0x78] sm:$0xe]
      %v3008 = vld [vmem:[%s1461 + $0x7c] sm:$0xf]
      %v3009 = vld [vmem:[%s1461 + $0x80] sm:$0x1]
      %v3010 = vld [vmem:[%s1461 + $0x84] sm:$0xe]
      %v3011 = vld [vmem:[%s1461 + $0x88] sm:$0xf]
      %v3012 = vld [vmem:[%s1461 + $0x8c] sm:$0x1]
      %v3013 = vld [vmem:[%s1461 + $0x90] sm:$0xe]
      %v3014 = vld [vmem:[%s1461 + $0x94] sm:$0xf]
      %v3015 = vld [vmem:[%s1461 + $0x98] sm:$0x1]
      %v3016 = vld [vmem:[%s1461 + $0x9c] sm:$0xe]
      %v3017 = vld [vmem:[%s1461 + $0xa0] sm:$0xf]
      %v3018 = vld [vmem:[%s1461 + $0xa4] sm:$0x1]
      %v3019 = vld [vmem:[%s1461 + $0xa8] sm:$0xe]
      %v3020 = vld [vmem:[%s1461 + $0xac] sm:$0xf]
      %v3021 = vld [vmem:[%s1461 + $0xb0] sm:$0x1]
      %v3022 = vld [vmem:[%s1461 + $0xb4] sm:$0xe]
      %v3023 = vld [vmem:[%s1461 + $0xb8] sm:$0xf]
      %v3024 = vld [vmem:[%s1461 + $0xbc] sm:$0x1]
      %v3073 = vrot.slane %v2977, 5
      %v3074 = vrot.slane %v3073, 4
      %v3075 = vrot.slane %v2978, 5
      %v3076 = vsel %vm2240, %v3074, %v3075
      %v3077 = vrot.slane %v3075, 4
      %v3078 = vrot.slane %v2979, 5
      %v3079 = vsel %vm2240, %v3077, %v3078
      %v3080 = vrot.slane %v2980, 5
      %v3081 = vrot.slane %v3080, 4
      %v3082 = vrot.slane %v2981, 5
      %v3083 = vsel %vm2240, %v3081, %v3082
      %v3084 = vrot.slane %v3082, 4
      %v3085 = vrot.slane %v2982, 5
      %v3086 = vsel %vm2240, %v3084, %v3085
      %v3087 = vrot.slane %v2983, 5
      %v3088 = vrot.slane %v3087, 4
      %v3089 = vrot.slane %v2984, 5
      %v3090 = vsel %vm2240, %v3088, %v3089
      %v3091 = vrot.slane %v3089, 4
      %v3092 = vrot.slane %v2985, 5
      %v3093 = vsel %vm2240, %v3091, %v3092
      %v3094 = vrot.slane %v2986, 5
      %v3095 = vrot.slane %v3094, 4
      %v3096 = vrot.slane %v2987, 5
      %v3097 = vsel %vm2240, %v3095, %v3096
      %v3098 = vrot.slane %v3096, 4
      %v3099 = vrot.slane %v2988, 5
      %v3100 = vsel %vm2240, %v3098, %v3099
      %v3101 = vrot.slane %v2989, 5
      %v3102 = vrot.slane %v3101, 4
      %v3103 = vrot.slane %v2990, 5
      %v3104 = vsel %vm2240, %v3102, %v3103
      %v3105 = vrot.slane %v3103, 4
      %v3106 = vrot.slane %v2991, 5
      %v3107 = vsel %vm2240, %v3105, %v3106
      %v3108 = vrot.slane %v2992, 5
      %v3109 = vrot.slane %v3108, 4
      %v3110 = vrot.slane %v2993, 5
      %v3111 = vsel %vm2240, %v3109, %v3110
      %v3112 = vrot.slane %v3110, 4
      %v3113 = vrot.slane %v2994, 5
      %v3114 = vsel %vm2240, %v3112, %v3113
      %v3115 = vrot.slane %v2995, 5
      %v3116 = vrot.slane %v3115, 4
      %v3117 = vrot.slane %v2996, 5
      %v3118 = vsel %vm2240, %v3116, %v3117
      %v3119 = vrot.slane %v3117, 4
      %v3120 = vrot.slane %v2997, 5
      %v3121 = vsel %vm2240, %v3119, %v3120
      %v3122 = vrot.slane %v2998, 5
      %v3123 = vrot.slane %v3122, 4
      %v3124 = vrot.slane %v2999, 5
      %v3125 = vsel %vm2240, %v3123, %v3124
      %v3126 = vrot.slane %v3124, 4
      %v3127 = vrot.slane %v3000, 5
      %v3128 = vsel %vm2240, %v3126, %v3127
      %v3129 = vrot.slane %v3001, 5
      %v3130 = vrot.slane %v3129, 4
      %v3131 = vrot.slane %v3002, 5
      %v3132 = vsel %vm2240, %v3130, %v3131
      %v3133 = vrot.slane %v3131, 4
      %v3134 = vrot.slane %v3003, 5
      %v3135 = vsel %vm2240, %v3133, %v3134
      %v3136 = vrot.slane %v3004, 5
      %v3137 = vrot.slane %v3136, 4
      %v3138 = vrot.slane %v3005, 5
      %v3139 = vsel %vm2240, %v3137, %v3138
      %v3140 = vrot.slane %v3138, 4
      %v3141 = vrot.slane %v3006, 5
      %v3142 = vsel %vm2240, %v3140, %v3141
      %v3143 = vrot.slane %v3007, 5
      %v3144 = vrot.slane %v3143, 4
      %v3145 = vrot.slane %v3008, 5
      %v3146 = vsel %vm2240, %v3144, %v3145
      %v3147 = vrot.slane %v3145, 4
      %v3148 = vrot.slane %v3009, 5
      %v3149 = vsel %vm2240, %v3147, %v3148
      %v3150 = vrot.slane %v3010, 5
      %v3151 = vrot.slane %v3150, 4
      %v3152 = vrot.slane %v3011, 5
      %v3153 = vsel %vm2240, %v3151, %v3152
      %v3154 = vrot.slane %v3152, 4
      %v3155 = vrot.slane %v3012, 5
      %v3156 = vsel %vm2240, %v3154, %v3155
      %v3157 = vrot.slane %v3013, 5
      %v3158 = vrot.slane %v3157, 4
      %v3159 = vrot.slane %v3014, 5
      %v3160 = vsel %vm2240, %v3158, %v3159
      %v3161 = vrot.slane %v3159, 4
      %v3162 = vrot.slane %v3015, 5
      %v3163 = vsel %vm2240, %v3161, %v3162
      %v3164 = vrot.slane %v3016, 5
      %v3165 = vrot.slane %v3164, 4
      %v3166 = vrot.slane %v3017, 5
      %v3167 = vsel %vm2240, %v3165, %v3166
      %v3168 = vrot.slane %v3166, 4
      %v3169 = vrot.slane %v3018, 5
      %v3170 = vsel %vm2240, %v3168, %v3169
      %v3171 = vrot.slane %v3019, 5
      %v3172 = vrot.slane %v3171, 4
      %v3173 = vrot.slane %v3020, 5
      %v3174 = vsel %vm2240, %v3172, %v3173
      %v3175 = vrot.slane %v3173, 4
      %v3176 = vrot.slane %v3021, 5
      %v3177 = vsel %vm2240, %v3175, %v3176
      %v3178 = vrot.slane %v3022, 5
      %v3179 = vrot.slane %v3178, 4
      %v3180 = vrot.slane %v3023, 5
      %v3181 = vsel %vm2240, %v3179, %v3180
      %v3182 = vrot.slane %v3180, 4
      %v3183 = vrot.slane %v3024, 5
      %v3184 = vsel %vm2240, %v3182, %v3183
      %3217 = vst [vmem:[#allocation3 + $0x14] sm:$0xf] %v3076
      %3218 = vst [vmem:[#allocation3 + $0x38] sm:$0xf] %v3079
      %3219 = vst [vmem:[#allocation3 + $0x5c] sm:$0xf] %v3083
      %3220 = vst [vmem:[#allocation3 + $0x80] sm:$0xf] %v3086
      %3221 = vst [vmem:[#allocation3 + $0xa4] sm:$0xf] %v3090
      %3222 = vst [vmem:[#allocation3 + $0xc8] sm:$0xf] %v3093
      %3223 = vst [vmem:[#allocation3 + $0xec] sm:$0xf] %v3097
      %3224 = vst [vmem:[#allocation3 + $0x110] sm:$0xf] %v3100
      %3225 = vst [vmem:[#allocation3 + $0x134] sm:$0xf] %v3104
      %3226 = vst [vmem:[#allocation3 + $0x158] sm:$0xf] %v3107
      %3227 = vst [vmem:[#allocation3 + $0x17c] sm:$0xf] %v3111
      %3228 = vst [vmem:[#allocation3 + $0x1a0] sm:$0xf] %v3114
      %3229 = vst [vmem:[#allocation3 + $0x1c4] sm:$0xf] %v3118
      %3230 = vst [vmem:[#allocation3 + $0x1e8] sm:$0xf] %v3121
      %3231 = vst [vmem:[#allocation3 + $0x20c] sm:$0xf] %v3125
      %3232 = vst [vmem:[#allocation3 + $0x230] sm:$0xf] %v3128
      %3233 = vst [vmem:[#allocation3 + $0x254] sm:$0xf] %v3132
      %3234 = vst [vmem:[#allocation3 + $0x278] sm:$0xf] %v3135
      %3235 = vst [vmem:[#allocation3 + $0x29c] sm:$0xf] %v3139
      %3236 = vst [vmem:[#allocation3 + $0x2c0] sm:$0xf] %v3142
      %3237 = vst [vmem:[#allocation3 + $0x2e4] sm:$0xf] %v3146
      %3238 = vst [vmem:[#allocation3 + $0x308] sm:$0xf] %v3149
      %3239 = vst [vmem:[#allocation3 + $0x32c] sm:$0xf] %v3153
      %3240 = vst [vmem:[#allocation3 + $0x350] sm:$0xf] %v3156
      %3241 = vst [vmem:[#allocation3 + $0x374] sm:$0xf] %v3160
      %3242 = vst [vmem:[#allocation3 + $0x398] sm:$0xf] %v3163
      %3243 = vst [vmem:[#allocation3 + $0x3bc] sm:$0xf] %v3167
      %3244 = vst [vmem:[#allocation3 + $0x3e0] sm:$0xf] %v3170
      %3245 = vst [vmem:[#allocation3 + $0x404] sm:$0xf] %v3174
      %3246 = vst [vmem:[#allocation3 + $0x428] sm:$0xf] %v3177
      %3247 = vst [vmem:[#allocation3 + $0x44c] sm:$0xf] %v3181
      %3248 = vst [vmem:[#allocation3 + $0x470] sm:$0xf] %v3184
      %s3249 = scalar_lea.vmem [#allocation2], 24
      %v3250 = vld [vmem:[%s3249] sm:$0xf]
      %v3251 = vld [vmem:[%s3249 + $0x4] sm:$0xf]
      %v3252 = vld [vmem:[%s3249 + $0xc] sm:$0xf]
      %v3253 = vld [vmem:[%s3249 + $0x10] sm:$0xf]
      %v3254 = vld [vmem:[%s3249 + $0x18] sm:$0xf]
      %v3255 = vld [vmem:[%s3249 + $0x1c] sm:$0xf]
      %v3256 = vld [vmem:[%s3249 + $0x24] sm:$0xf]
      %v3257 = vld [vmem:[%s3249 + $0x28] sm:$0xf]
      %v3258 = vld [vmem:[%s3249 + $0x30] sm:$0xf]
      %v3259 = vld [vmem:[%s3249 + $0x34] sm:$0xf]
      %v3260 = vld [vmem:[%s3249 + $0x3c] sm:$0xf]
      %v3261 = vld [vmem:[%s3249 + $0x40] sm:$0xf]
      %v3262 = vld [vmem:[%s3249 + $0x48] sm:$0xf]
      %v3263 = vld [vmem:[%s3249 + $0x4c] sm:$0xf]
      %v3264 = vld [vmem:[%s3249 + $0x54] sm:$0xf]
      %v3265 = vld [vmem:[%s3249 + $0x58] sm:$0xf]
      %v3266 = vld [vmem:[%s3249 + $0x60] sm:$0xf]
      %v3267 = vld [vmem:[%s3249 + $0x64] sm:$0xf]
      %v3268 = vld [vmem:[%s3249 + $0x6c] sm:$0xf]
      %v3269 = vld [vmem:[%s3249 + $0x70] sm:$0xf]
      %v3270 = vld [vmem:[%s3249 + $0x78] sm:$0xf]
      %v3271 = vld [vmem:[%s3249 + $0x7c] sm:$0xf]
      %v3272 = vld [vmem:[%s3249 + $0x84] sm:$0xf]
      %v3273 = vld [vmem:[%s3249 + $0x88] sm:$0xf]
      %v3274 = vld [vmem:[%s3249 + $0x90] sm:$0xf]
      %v3275 = vld [vmem:[%s3249 + $0x94] sm:$0xf]
      %v3276 = vld [vmem:[%s3249 + $0x9c] sm:$0xf]
      %v3277 = vld [vmem:[%s3249 + $0xa0] sm:$0xf]
      %v3278 = vld [vmem:[%s3249 + $0xa8] sm:$0xf]
      %v3279 = vld [vmem:[%s3249 + $0xac] sm:$0xf]
      %v3280 = vld [vmem:[%s3249 + $0xb4] sm:$0xf]
      %v3281 = vld [vmem:[%s3249 + $0xb8] sm:$0xf]
      %3282 = vst [vmem:[#allocation3 + $0x18] sm:$0xf] %v3250
      %3283 = vst [vmem:[#allocation3 + $0x3c] sm:$0xf] %v3251
      %3284 = vst [vmem:[#allocation3 + $0x60] sm:$0xf] %v3252
      %3285 = vst [vmem:[#allocation3 + $0x84] sm:$0xf] %v3253
      %3286 = vst [vmem:[#allocation3 + $0xa8] sm:$0xf] %v3254
      %3287 = vst [vmem:[#allocation3 + $0xcc] sm:$0xf] %v3255
      %3288 = vst [vmem:[#allocation3 + $0xf0] sm:$0xf] %v3256
      %3289 = vst [vmem:[#allocation3 + $0x114] sm:$0xf] %v3257
      %3290 = vst [vmem:[#allocation3 + $0x138] sm:$0xf] %v3258
      %3291 = vst [vmem:[#allocation3 + $0x15c] sm:$0xf] %v3259
      %3292 = vst [vmem:[#allocation3 + $0x180] sm:$0xf] %v3260
      %3293 = vst [vmem:[#allocation3 + $0x1a4] sm:$0xf] %v3261
      %3294 = vst [vmem:[#allocation3 + $0x1c8] sm:$0xf] %v3262
      %3295 = vst [vmem:[#allocation3 + $0x1ec] sm:$0xf] %v3263
      %3296 = vst [vmem:[#allocation3 + $0x210] sm:$0xf] %v3264
      %3297 = vst [vmem:[#allocation3 + $0x234] sm:$0xf] %v3265
      %3298 = vst [vmem:[#allocation3 + $0x258] sm:$0xf] %v3266
      %3299 = vst [vmem:[#allocation3 + $0x27c] sm:$0xf] %v3267
      %3300 = vst [vmem:[#allocation3 + $0x2a0] sm:$0xf] %v3268
      %3301 = vst [vmem:[#allocation3 + $0x2c4] sm:$0xf] %v3269
      %3302 = vst [vmem:[#allocation3 + $0x2e8] sm:$0xf] %v3270
      %3303 = vst [vmem:[#allocation3 + $0x30c] sm:$0xf] %v3271
      %3304 = vst [vmem:[#allocation3 + $0x330] sm:$0xf] %v3272
      %3305 = vst [vmem:[#allocation3 + $0x354] sm:$0xf] %v3273
      %3306 = vst [vmem:[#allocation3 + $0x378] sm:$0xf] %v3274
      %3307 = vst [vmem:[#allocation3 + $0x39c] sm:$0xf] %v3275
      %3308 = vst [vmem:[#allocation3 + $0x3c0] sm:$0xf] %v3276
      %3309 = vst [vmem:[#allocation3 + $0x3e4] sm:$0xf] %v3277
      %3310 = vst [vmem:[#allocation3 + $0x408] sm:$0xf] %v3278
      %3311 = vst [vmem:[#allocation3 + $0x42c] sm:$0xf] %v3279
      %3312 = vst [vmem:[#allocation3 + $0x450] sm:$0xf] %v3280
      %3313 = vst [vmem:[#allocation3 + $0x474] sm:$0xf] %v3281
      %v3314 = vld [vmem:[%s3249] sm:$0xf]
      %v3315 = vld [vmem:[%s3249 + $0x4] sm:$0xf]
      %v3316 = vld [vmem:[%s3249 + $0x8] sm:$0x1]
      %v3317 = vld [vmem:[%s3249 + $0xc] sm:$0xf]
      %v3318 = vld [vmem:[%s3249 + $0x10] sm:$0xf]
      %v3319 = vld [vmem:[%s3249 + $0x14] sm:$0x1]
      %v3320 = vld [vmem:[%s3249 + $0x18] sm:$0xf]
      %v3321 = vld [vmem:[%s3249 + $0x1c] sm:$0xf]
      %v3322 = vld [vmem:[%s3249 + $0x20] sm:$0x1]
      %v3323 = vld [vmem:[%s3249 + $0x24] sm:$0xf]
      %v3324 = vld [vmem:[%s3249 + $0x28] sm:$0xf]
      %v3325 = vld [vmem:[%s3249 + $0x2c] sm:$0x1]
      %v3326 = vld [vmem:[%s3249 + $0x30] sm:$0xf]
      %v3327 = vld [vmem:[%s3249 + $0x34] sm:$0xf]
      %v3328 = vld [vmem:[%s3249 + $0x38] sm:$0x1]
      %v3329 = vld [vmem:[%s3249 + $0x3c] sm:$0xf]
      %v3330 = vld [vmem:[%s3249 + $0x40] sm:$0xf]
      %v3331 = vld [vmem:[%s3249 + $0x44] sm:$0x1]
      %v3332 = vld [vmem:[%s3249 + $0x48] sm:$0xf]
      %v3333 = vld [vmem:[%s3249 + $0x4c] sm:$0xf]
      %v3334 = vld [vmem:[%s3249 + $0x50] sm:$0x1]
      %v3335 = vld [vmem:[%s3249 + $0x54] sm:$0xf]
      %v3336 = vld [vmem:[%s3249 + $0x58] sm:$0xf]
      %v3337 = vld [vmem:[%s3249 + $0x5c] sm:$0x1]
      %v3338 = vld [vmem:[%s3249 + $0x60] sm:$0xf]
      %v3339 = vld [vmem:[%s3249 + $0x64] sm:$0xf]
      %v3340 = vld [vmem:[%s3249 + $0x68] sm:$0x1]
      %v3341 = vld [vmem:[%s3249 + $0x6c] sm:$0xf]
      %v3342 = vld [vmem:[%s3249 + $0x70] sm:$0xf]
      %v3343 = vld [vmem:[%s3249 + $0x74] sm:$0x1]
      %v3344 = vld [vmem:[%s3249 + $0x78] sm:$0xf]
      %v3345 = vld [vmem:[%s3249 + $0x7c] sm:$0xf]
      %v3346 = vld [vmem:[%s3249 + $0x80] sm:$0x1]
      %v3347 = vld [vmem:[%s3249 + $0x84] sm:$0xf]
      %v3348 = vld [vmem:[%s3249 + $0x88] sm:$0xf]
      %v3349 = vld [vmem:[%s3249 + $0x8c] sm:$0x1]
      %v3350 = vld [vmem:[%s3249 + $0x90] sm:$0xf]
      %v3351 = vld [vmem:[%s3249 + $0x94] sm:$0xf]
      %v3352 = vld [vmem:[%s3249 + $0x98] sm:$0x1]
      %v3353 = vld [vmem:[%s3249 + $0x9c] sm:$0xf]
      %v3354 = vld [vmem:[%s3249 + $0xa0] sm:$0xf]
      %v3355 = vld [vmem:[%s3249 + $0xa4] sm:$0x1]
      %v3356 = vld [vmem:[%s3249 + $0xa8] sm:$0xf]
      %v3357 = vld [vmem:[%s3249 + $0xac] sm:$0xf]
      %v3358 = vld [vmem:[%s3249 + $0xb0] sm:$0x1]
      %v3359 = vld [vmem:[%s3249 + $0xb4] sm:$0xf]
      %v3360 = vld [vmem:[%s3249 + $0xb8] sm:$0xf]
      %v3361 = vld [vmem:[%s3249 + $0xbc] sm:$0x1]
      %v3363 = vshrl.u32 %v3314, 16
      %v3365 = vrot.slane %v3363, 4
      %v3366 = vshll.u32 %v3314, 16
      %v3368 = vrot.slane %v3366, 5
      %v3369 = vor.u32 %v3365, %v3368
      %v3370 = vrot.slane %v3369, 4
      %v3372 = vshll.u32 %v3315, 16
      %v3374 = vrot.slane %v3372, 5
      %v3375 = vsel %vm1693, %v3370, %v3374
      %v3376 = vshrl.u32 %v3315, 16
      %v3378 = vrot.slane %v3376, 4
      %v3379 = vor.u32 %v3378, %v3374
      %v3380 = vrot.slane %v3379, 4
      %v3382 = vshll.u32 %v3316, 16
      %v3384 = vrot.slane %v3382, 5
      %v3385 = vsel %vm1693, %v3380, %v3384
      %v3387 = vshrl.u32 %v3317, 16
      %v3389 = vrot.slane %v3387, 4
      %v3390 = vshll.u32 %v3317, 16
      %v3392 = vrot.slane %v3390, 5
      %v3393 = vor.u32 %v3389, %v3392
      %v3394 = vrot.slane %v3393, 4
      %v3396 = vshll.u32 %v3318, 16
      %v3398 = vrot.slane %v3396, 5
      %v3399 = vsel %vm1693, %v3394, %v3398
      %v3400 = vshrl.u32 %v3318, 16
      %v3402 = vrot.slane %v3400, 4
      %v3403 = vor.u32 %v3402, %v3398
      %v3404 = vrot.slane %v3403, 4
      %v3406 = vshll.u32 %v3319, 16
      %v3408 = vrot.slane %v3406, 5
      %v3409 = vsel %vm1693, %v3404, %v3408
      %v3411 = vshrl.u32 %v3320, 16
      %v3413 = vrot.slane %v3411, 4
      %v3414 = vshll.u32 %v3320, 16
      %v3416 = vrot.slane %v3414, 5
      %v3417 = vor.u32 %v3413, %v3416
      %v3418 = vrot.slane %v3417, 4
      %v3420 = vshll.u32 %v3321, 16
      %v3422 = vrot.slane %v3420, 5
      %v3423 = vsel %vm1693, %v3418, %v3422
      %v3424 = vshrl.u32 %v3321, 16
      %v3426 = vrot.slane %v3424, 4
      %v3427 = vor.u32 %v3426, %v3422
      %v3428 = vrot.slane %v3427, 4
      %v3430 = vshll.u32 %v3322, 16
      %v3432 = vrot.slane %v3430, 5
      %v3433 = vsel %vm1693, %v3428, %v3432
      %v3435 = vshrl.u32 %v3323, 16
      %v3437 = vrot.slane %v3435, 4
      %v3438 = vshll.u32 %v3323, 16
      %v3440 = vrot.slane %v3438, 5
      %v3441 = vor.u32 %v3437, %v3440
      %v3442 = vrot.slane %v3441, 4
      %v3444 = vshll.u32 %v3324, 16
      %v3446 = vrot.slane %v3444, 5
      %v3447 = vsel %vm1693, %v3442, %v3446
      %v3448 = vshrl.u32 %v3324, 16
      %v3450 = vrot.slane %v3448, 4
      %v3451 = vor.u32 %v3450, %v3446
      %v3452 = vrot.slane %v3451, 4
      %v3454 = vshll.u32 %v3325, 16
      %v3456 = vrot.slane %v3454, 5
      %v3457 = vsel %vm1693, %v3452, %v3456
      %v3459 = vshrl.u32 %v3326, 16
      %v3461 = vrot.slane %v3459, 4
      %v3462 = vshll.u32 %v3326, 16
      %v3464 = vrot.slane %v3462, 5
      %v3465 = vor.u32 %v3461, %v3464
      %v3466 = vrot.slane %v3465, 4
      %v3468 = vshll.u32 %v3327, 16
      %v3470 = vrot.slane %v3468, 5
      %v3471 = vsel %vm1693, %v3466, %v3470
      %v3472 = vshrl.u32 %v3327, 16
      %v3474 = vrot.slane %v3472, 4
      %v3475 = vor.u32 %v3474, %v3470
      %v3476 = vrot.slane %v3475, 4
      %v3478 = vshll.u32 %v3328, 16
      %v3480 = vrot.slane %v3478, 5
      %v3481 = vsel %vm1693, %v3476, %v3480
      %v3483 = vshrl.u32 %v3329, 16
      %v3485 = vrot.slane %v3483, 4
      %v3486 = vshll.u32 %v3329, 16
      %v3488 = vrot.slane %v3486, 5
      %v3489 = vor.u32 %v3485, %v3488
      %v3490 = vrot.slane %v3489, 4
      %v3492 = vshll.u32 %v3330, 16
      %v3494 = vrot.slane %v3492, 5
      %v3495 = vsel %vm1693, %v3490, %v3494
      %v3496 = vshrl.u32 %v3330, 16
      %v3498 = vrot.slane %v3496, 4
      %v3499 = vor.u32 %v3498, %v3494
      %v3500 = vrot.slane %v3499, 4
      %v3502 = vshll.u32 %v3331, 16
      %v3504 = vrot.slane %v3502, 5
      %v3505 = vsel %vm1693, %v3500, %v3504
      %v3507 = vshrl.u32 %v3332, 16
      %v3509 = vrot.slane %v3507, 4
      %v3510 = vshll.u32 %v3332, 16
      %v3512 = vrot.slane %v3510, 5
      %v3513 = vor.u32 %v3509, %v3512
      %v3514 = vrot.slane %v3513, 4
      %v3516 = vshll.u32 %v3333, 16
      %v3518 = vrot.slane %v3516, 5
      %v3519 = vsel %vm1693, %v3514, %v3518
      %v3520 = vshrl.u32 %v3333, 16
      %v3522 = vrot.slane %v3520, 4
      %v3523 = vor.u32 %v3522, %v3518
      %v3524 = vrot.slane %v3523, 4
      %v3526 = vshll.u32 %v3334, 16
      %v3528 = vrot.slane %v3526, 5
      %v3529 = vsel %vm1693, %v3524, %v3528
      %v3531 = vshrl.u32 %v3335, 16
      %v3533 = vrot.slane %v3531, 4
      %v3534 = vshll.u32 %v3335, 16
      %v3536 = vrot.slane %v3534, 5
      %v3537 = vor.u32 %v3533, %v3536
      %v3538 = vrot.slane %v3537, 4
      %v3540 = vshll.u32 %v3336, 16
      %v3542 = vrot.slane %v3540, 5
      %v3543 = vsel %vm1693, %v3538, %v3542
      %v3544 = vshrl.u32 %v3336, 16
      %v3546 = vrot.slane %v3544, 4
      %v3547 = vor.u32 %v3546, %v3542
      %v3548 = vrot.slane %v3547, 4
      %v3550 = vshll.u32 %v3337, 16
      %v3552 = vrot.slane %v3550, 5
      %v3553 = vsel %vm1693, %v3548, %v3552
      %v3555 = vshrl.u32 %v3338, 16
      %v3557 = vrot.slane %v3555, 4
      %v3558 = vshll.u32 %v3338, 16
      %v3560 = vrot.slane %v3558, 5
      %v3561 = vor.u32 %v3557, %v3560
      %v3562 = vrot.slane %v3561, 4
      %v3564 = vshll.u32 %v3339, 16
      %v3566 = vrot.slane %v3564, 5
      %v3567 = vsel %vm1693, %v3562, %v3566
      %v3568 = vshrl.u32 %v3339, 16
      %v3570 = vrot.slane %v3568, 4
      %v3571 = vor.u32 %v3570, %v3566
      %v3572 = vrot.slane %v3571, 4
      %v3574 = vshll.u32 %v3340, 16
      %v3576 = vrot.slane %v3574, 5
      %v3577 = vsel %vm1693, %v3572, %v3576
      %v3579 = vshrl.u32 %v3341, 16
      %v3581 = vrot.slane %v3579, 4
      %v3582 = vshll.u32 %v3341, 16
      %v3584 = vrot.slane %v3582, 5
      %v3585 = vor.u32 %v3581, %v3584
      %v3586 = vrot.slane %v3585, 4
      %v3588 = vshll.u32 %v3342, 16
      %v3590 = vrot.slane %v3588, 5
      %v3591 = vsel %vm1693, %v3586, %v3590
      %v3592 = vshrl.u32 %v3342, 16
      %v3594 = vrot.slane %v3592, 4
      %v3595 = vor.u32 %v3594, %v3590
      %v3596 = vrot.slane %v3595, 4
      %v3598 = vshll.u32 %v3343, 16
      %v3600 = vrot.slane %v3598, 5
      %v3601 = vsel %vm1693, %v3596, %v3600
      %v3603 = vshrl.u32 %v3344, 16
      %v3605 = vrot.slane %v3603, 4
      %v3606 = vshll.u32 %v3344, 16
      %v3608 = vrot.slane %v3606, 5
      %v3609 = vor.u32 %v3605, %v3608
      %v3610 = vrot.slane %v3609, 4
      %v3612 = vshll.u32 %v3345, 16
      %v3614 = vrot.slane %v3612, 5
      %v3615 = vsel %vm1693, %v3610, %v3614
      %v3616 = vshrl.u32 %v3345, 16
      %v3618 = vrot.slane %v3616, 4
      %v3619 = vor.u32 %v3618, %v3614
      %v3620 = vrot.slane %v3619, 4
      %v3622 = vshll.u32 %v3346, 16
      %v3624 = vrot.slane %v3622, 5
      %v3625 = vsel %vm1693, %v3620, %v3624
      %v3627 = vshrl.u32 %v3347, 16
      %v3629 = vrot.slane %v3627, 4
      %v3630 = vshll.u32 %v3347, 16
      %v3632 = vrot.slane %v3630, 5
      %v3633 = vor.u32 %v3629, %v3632
      %v3634 = vrot.slane %v3633, 4
      %v3636 = vshll.u32 %v3348, 16
      %v3638 = vrot.slane %v3636, 5
      %v3639 = vsel %vm1693, %v3634, %v3638
      %v3640 = vshrl.u32 %v3348, 16
      %v3642 = vrot.slane %v3640, 4
      %v3643 = vor.u32 %v3642, %v3638
      %v3644 = vrot.slane %v3643, 4
      %v3646 = vshll.u32 %v3349, 16
      %v3648 = vrot.slane %v3646, 5
      %v3649 = vsel %vm1693, %v3644, %v3648
      %v3651 = vshrl.u32 %v3350, 16
      %v3653 = vrot.slane %v3651, 4
      %v3654 = vshll.u32 %v3350, 16
      %v3656 = vrot.slane %v3654, 5
      %v3657 = vor.u32 %v3653, %v3656
      %v3658 = vrot.slane %v3657, 4
      %v3660 = vshll.u32 %v3351, 16
      %v3662 = vrot.slane %v3660, 5
      %v3663 = vsel %vm1693, %v3658, %v3662
      %v3664 = vshrl.u32 %v3351, 16
      %v3666 = vrot.slane %v3664, 4
      %v3667 = vor.u32 %v3666, %v3662
      %v3668 = vrot.slane %v3667, 4
      %v3670 = vshll.u32 %v3352, 16
      %v3672 = vrot.slane %v3670, 5
      %v3673 = vsel %vm1693, %v3668, %v3672
      %v3675 = vshrl.u32 %v3353, 16
      %v3677 = vrot.slane %v3675, 4
      %v3678 = vshll.u32 %v3353, 16
      %v3680 = vrot.slane %v3678, 5
      %v3681 = vor.u32 %v3677, %v3680
      %v3682 = vrot.slane %v3681, 4
      %v3684 = vshll.u32 %v3354, 16
      %v3686 = vrot.slane %v3684, 5
      %v3687 = vsel %vm1693, %v3682, %v3686
      %v3688 = vshrl.u32 %v3354, 16
      %v3690 = vrot.slane %v3688, 4
      %v3691 = vor.u32 %v3690, %v3686
      %v3692 = vrot.slane %v3691, 4
      %v3694 = vshll.u32 %v3355, 16
      %v3696 = vrot.slane %v3694, 5
      %v3697 = vsel %vm1693, %v3692, %v3696
      %v3699 = vshrl.u32 %v3356, 16
      %v3701 = vrot.slane %v3699, 4
      %v3702 = vshll.u32 %v3356, 16
      %v3704 = vrot.slane %v3702, 5
      %v3705 = vor.u32 %v3701, %v3704
      %v3706 = vrot.slane %v3705, 4
      %v3708 = vshll.u32 %v3357, 16
      %v3710 = vrot.slane %v3708, 5
      %v3711 = vsel %vm1693, %v3706, %v3710
      %v3712 = vshrl.u32 %v3357, 16
      %v3714 = vrot.slane %v3712, 4
      %v3715 = vor.u32 %v3714, %v3710
      %v3716 = vrot.slane %v3715, 4
      %v3718 = vshll.u32 %v3358, 16
      %v3720 = vrot.slane %v3718, 5
      %v3721 = vsel %vm1693, %v3716, %v3720
      %v3723 = vshrl.u32 %v3359, 16
      %v3725 = vrot.slane %v3723, 4
      %v3726 = vshll.u32 %v3359, 16
      %v3728 = vrot.slane %v3726, 5
      %v3729 = vor.u32 %v3725, %v3728
      %v3730 = vrot.slane %v3729, 4
      %v3732 = vshll.u32 %v3360, 16
      %v3734 = vrot.slane %v3732, 5
      %v3735 = vsel %vm1693, %v3730, %v3734
      %v3736 = vshrl.u32 %v3360, 16
      %v3738 = vrot.slane %v3736, 4
      %v3739 = vor.u32 %v3738, %v3734
      %v3740 = vrot.slane %v3739, 4
      %v3742 = vshll.u32 %v3361, 16
      %v3744 = vrot.slane %v3742, 5
      %v3745 = vsel %vm1693, %v3740, %v3744
      %3778 = vst [vmem:[#allocation3 + $0x1c] sm:$0xf] %v3375
      %3779 = vst [vmem:[#allocation3 + $0x40] sm:$0xf] %v3385
      %3780 = vst [vmem:[#allocation3 + $0x64] sm:$0xf] %v3399
      %3781 = vst [vmem:[#allocation3 + $0x88] sm:$0xf] %v3409
      %3782 = vst [vmem:[#allocation3 + $0xac] sm:$0xf] %v3423
      %3783 = vst [vmem:[#allocation3 + $0xd0] sm:$0xf] %v3433
      %3784 = vst [vmem:[#allocation3 + $0xf4] sm:$0xf] %v3447
      %3785 = vst [vmem:[#allocation3 + $0x118] sm:$0xf] %v3457
      %3786 = vst [vmem:[#allocation3 + $0x13c] sm:$0xf] %v3471
      %3787 = vst [vmem:[#allocation3 + $0x160] sm:$0xf] %v3481
      %3788 = vst [vmem:[#allocation3 + $0x184] sm:$0xf] %v3495
      %3789 = vst [vmem:[#allocation3 + $0x1a8] sm:$0xf] %v3505
      %3790 = vst [vmem:[#allocation3 + $0x1cc] sm:$0xf] %v3519
      %3791 = vst [vmem:[#allocation3 + $0x1f0] sm:$0xf] %v3529
      %3792 = vst [vmem:[#allocation3 + $0x214] sm:$0xf] %v3543
      %3793 = vst [vmem:[#allocation3 + $0x238] sm:$0xf] %v3553
      %3794 = vst [vmem:[#allocation3 + $0x25c] sm:$0xf] %v3567
      %3795 = vst [vmem:[#allocation3 + $0x280] sm:$0xf] %v3577
      %3796 = vst [vmem:[#allocation3 + $0x2a4] sm:$0xf] %v3591
      %3797 = vst [vmem:[#allocation3 + $0x2c8] sm:$0xf] %v3601
      %3798 = vst [vmem:[#allocation3 + $0x2ec] sm:$0xf] %v3615
      %3799 = vst [vmem:[#allocation3 + $0x310] sm:$0xf] %v3625
      %3800 = vst [vmem:[#allocation3 + $0x334] sm:$0xf] %v3639
      %3801 = vst [vmem:[#allocation3 + $0x358] sm:$0xf] %v3649
      %3802 = vst [vmem:[#allocation3 + $0x37c] sm:$0xf] %v3663
      %3803 = vst [vmem:[#allocation3 + $0x3a0] sm:$0xf] %v3673
      %3804 = vst [vmem:[#allocation3 + $0x3c4] sm:$0xf] %v3687
      %3805 = vst [vmem:[#allocation3 + $0x3e8] sm:$0xf] %v3697
      %3806 = vst [vmem:[#allocation3 + $0x40c] sm:$0xf] %v3711
      %3807 = vst [vmem:[#allocation3 + $0x430] sm:$0xf] %v3721
      %3808 = vst [vmem:[#allocation3 + $0x454] sm:$0xf] %v3735
      %3809 = vst [vmem:[#allocation3 + $0x478] sm:$0xf] %v3745
      %v3810 = vld [vmem:[%s3249] sm:$0xe]
      %v3811 = vld [vmem:[%s3249 + $0x4] sm:$0xf]
      %v3812 = vld [vmem:[%s3249 + $0x8] sm:$0x1]
      %v3813 = vld [vmem:[%s3249 + $0xc] sm:$0xe]
      %v3814 = vld [vmem:[%s3249 + $0x10] sm:$0xf]
      %v3815 = vld [vmem:[%s3249 + $0x14] sm:$0x1]
      %v3816 = vld [vmem:[%s3249 + $0x18] sm:$0xe]
      %v3817 = vld [vmem:[%s3249 + $0x1c] sm:$0xf]
      %v3818 = vld [vmem:[%s3249 + $0x20] sm:$0x1]
      %v3819 = vld [vmem:[%s3249 + $0x24] sm:$0xe]
      %v3820 = vld [vmem:[%s3249 + $0x28] sm:$0xf]
      %v3821 = vld [vmem:[%s3249 + $0x2c] sm:$0x1]
      %v3822 = vld [vmem:[%s3249 + $0x30] sm:$0xe]
      %v3823 = vld [vmem:[%s3249 + $0x34] sm:$0xf]
      %v3824 = vld [vmem:[%s3249 + $0x38] sm:$0x1]
      %v3825 = vld [vmem:[%s3249 + $0x3c] sm:$0xe]
      %v3826 = vld [vmem:[%s3249 + $0x40] sm:$0xf]
      %v3827 = vld [vmem:[%s3249 + $0x44] sm:$0x1]
      %v3828 = vld [vmem:[%s3249 + $0x48] sm:$0xe]
      %v3829 = vld [vmem:[%s3249 + $0x4c] sm:$0xf]
      %v3830 = vld [vmem:[%s3249 + $0x50] sm:$0x1]
      %v3831 = vld [vmem:[%s3249 + $0x54] sm:$0xe]
      %v3832 = vld [vmem:[%s3249 + $0x58] sm:$0xf]
      %v3833 = vld [vmem:[%s3249 + $0x5c] sm:$0x1]
      %v3834 = vld [vmem:[%s3249 + $0x60] sm:$0xe]
      %v3835 = vld [vmem:[%s3249 + $0x64] sm:$0xf]
      %v3836 = vld [vmem:[%s3249 + $0x68] sm:$0x1]
      %v3837 = vld [vmem:[%s3249 + $0x6c] sm:$0xe]
      %v3838 = vld [vmem:[%s3249 + $0x70] sm:$0xf]
      %v3839 = vld [vmem:[%s3249 + $0x74] sm:$0x1]
      %v3840 = vld [vmem:[%s3249 + $0x78] sm:$0xe]
      %v3841 = vld [vmem:[%s3249 + $0x7c] sm:$0xf]
      %v3842 = vld [vmem:[%s3249 + $0x80] sm:$0x1]
      %v3843 = vld [vmem:[%s3249 + $0x84] sm:$0xe]
      %v3844 = vld [vmem:[%s3249 + $0x88] sm:$0xf]
      %v3845 = vld [vmem:[%s3249 + $0x8c] sm:$0x1]
      %v3846 = vld [vmem:[%s3249 + $0x90] sm:$0xe]
      %v3847 = vld [vmem:[%s3249 + $0x94] sm:$0xf]
      %v3848 = vld [vmem:[%s3249 + $0x98] sm:$0x1]
      %v3849 = vld [vmem:[%s3249 + $0x9c] sm:$0xe]
      %v3850 = vld [vmem:[%s3249 + $0xa0] sm:$0xf]
      %v3851 = vld [vmem:[%s3249 + $0xa4] sm:$0x1]
      %v3852 = vld [vmem:[%s3249 + $0xa8] sm:$0xe]
      %v3853 = vld [vmem:[%s3249 + $0xac] sm:$0xf]
      %v3854 = vld [vmem:[%s3249 + $0xb0] sm:$0x1]
      %v3855 = vld [vmem:[%s3249 + $0xb4] sm:$0xe]
      %v3856 = vld [vmem:[%s3249 + $0xb8] sm:$0xf]
      %v3857 = vld [vmem:[%s3249 + $0xbc] sm:$0x1]
      %v3906 = vrot.slane %v3810, 5
      %v3907 = vrot.slane %v3906, 4
      %v3908 = vrot.slane %v3811, 5
      %v3909 = vsel %vm2240, %v3907, %v3908
      %v3910 = vrot.slane %v3908, 4
      %v3911 = vrot.slane %v3812, 5
      %v3912 = vsel %vm2240, %v3910, %v3911
      %v3913 = vrot.slane %v3813, 5
      %v3914 = vrot.slane %v3913, 4
      %v3915 = vrot.slane %v3814, 5
      %v3916 = vsel %vm2240, %v3914, %v3915
      %v3917 = vrot.slane %v3915, 4
      %v3918 = vrot.slane %v3815, 5
      %v3919 = vsel %vm2240, %v3917, %v3918
      %v3920 = vrot.slane %v3816, 5
      %v3921 = vrot.slane %v3920, 4
      %v3922 = vrot.slane %v3817, 5
      %v3923 = vsel %vm2240, %v3921, %v3922
      %v3924 = vrot.slane %v3922, 4
      %v3925 = vrot.slane %v3818, 5
      %v3926 = vsel %vm2240, %v3924, %v3925
      %v3927 = vrot.slane %v3819, 5
      %v3928 = vrot.slane %v3927, 4
      %v3929 = vrot.slane %v3820, 5
      %v3930 = vsel %vm2240, %v3928, %v3929
      %v3931 = vrot.slane %v3929, 4
      %v3932 = vrot.slane %v3821, 5
      %v3933 = vsel %vm2240, %v3931, %v3932
      %v3934 = vrot.slane %v3822, 5
      %v3935 = vrot.slane %v3934, 4
      %v3936 = vrot.slane %v3823, 5
      %v3937 = vsel %vm2240, %v3935, %v3936
      %v3938 = vrot.slane %v3936, 4
      %v3939 = vrot.slane %v3824, 5
      %v3940 = vsel %vm2240, %v3938, %v3939
      %v3941 = vrot.slane %v3825, 5
      %v3942 = vrot.slane %v3941, 4
      %v3943 = vrot.slane %v3826, 5
      %v3944 = vsel %vm2240, %v3942, %v3943
      %v3945 = vrot.slane %v3943, 4
      %v3946 = vrot.slane %v3827, 5
      %v3947 = vsel %vm2240, %v3945, %v3946
      %v3948 = vrot.slane %v3828, 5
      %v3949 = vrot.slane %v3948, 4
      %v3950 = vrot.slane %v3829, 5
      %v3951 = vsel %vm2240, %v3949, %v3950
      %v3952 = vrot.slane %v3950, 4
      %v3953 = vrot.slane %v3830, 5
      %v3954 = vsel %vm2240, %v3952, %v3953
      %v3955 = vrot.slane %v3831, 5
      %v3956 = vrot.slane %v3955, 4
      %v3957 = vrot.slane %v3832, 5
      %v3958 = vsel %vm2240, %v3956, %v3957
      %v3959 = vrot.slane %v3957, 4
      %v3960 = vrot.slane %v3833, 5
      %v3961 = vsel %vm2240, %v3959, %v3960
      %v3962 = vrot.slane %v3834, 5
      %v3963 = vrot.slane %v3962, 4
      %v3964 = vrot.slane %v3835, 5
      %v3965 = vsel %vm2240, %v3963, %v3964
      %v3966 = vrot.slane %v3964, 4
      %v3967 = vrot.slane %v3836, 5
      %v3968 = vsel %vm2240, %v3966, %v3967
      %v3969 = vrot.slane %v3837, 5
      %v3970 = vrot.slane %v3969, 4
      %v3971 = vrot.slane %v3838, 5
      %v3972 = vsel %vm2240, %v3970, %v3971
      %v3973 = vrot.slane %v3971, 4
      %v3974 = vrot.slane %v3839, 5
      %v3975 = vsel %vm2240, %v3973, %v3974
      %v3976 = vrot.slane %v3840, 5
      %v3977 = vrot.slane %v3976, 4
      %v3978 = vrot.slane %v3841, 5
      %v3979 = vsel %vm2240, %v3977, %v3978
      %v3980 = vrot.slane %v3978, 4
      %v3981 = vrot.slane %v3842, 5
      %v3982 = vsel %vm2240, %v3980, %v3981
      %v3983 = vrot.slane %v3843, 5
      %v3984 = vrot.slane %v3983, 4
      %v3985 = vrot.slane %v3844, 5
      %v3986 = vsel %vm2240, %v3984, %v3985
      %v3987 = vrot.slane %v3985, 4
      %v3988 = vrot.slane %v3845, 5
      %v3989 = vsel %vm2240, %v3987, %v3988
      %v3990 = vrot.slane %v3846, 5
      %v3991 = vrot.slane %v3990, 4
      %v3992 = vrot.slane %v3847, 5
      %v3993 = vsel %vm2240, %v3991, %v3992
      %v3994 = vrot.slane %v3992, 4
      %v3995 = vrot.slane %v3848, 5
      %v3996 = vsel %vm2240, %v3994, %v3995
      %v3997 = vrot.slane %v3849, 5
      %v3998 = vrot.slane %v3997, 4
      %v3999 = vrot.slane %v3850, 5
      %v4000 = vsel %vm2240, %v3998, %v3999
      %v4001 = vrot.slane %v3999, 4
      %v4002 = vrot.slane %v3851, 5
      %v4003 = vsel %vm2240, %v4001, %v4002
      %v4004 = vrot.slane %v3852, 5
      %v4005 = vrot.slane %v4004, 4
      %v4006 = vrot.slane %v3853, 5
      %v4007 = vsel %vm2240, %v4005, %v4006
      %v4008 = vrot.slane %v4006, 4
      %v4009 = vrot.slane %v3854, 5
      %v4010 = vsel %vm2240, %v4008, %v4009
      %v4011 = vrot.slane %v3855, 5
      %v4012 = vrot.slane %v4011, 4
      %v4013 = vrot.slane %v3856, 5
      %v4014 = vsel %vm2240, %v4012, %v4013
      %v4015 = vrot.slane %v4013, 4
      %v4016 = vrot.slane %v3857, 5
      %v4017 = vsel %vm2240, %v4015, %v4016
      %4050 = vst [vmem:[#allocation3 + $0x20] sm:$0xf] %v3909
      %4051 = vst [vmem:[#allocation3 + $0x44] sm:$0xf] %v3912
      %4052 = vst [vmem:[#allocation3 + $0x68] sm:$0xf] %v3916
      %4053 = vst [vmem:[#allocation3 + $0x8c] sm:$0xf] %v3919
      %4054 = vst [vmem:[#allocation3 + $0xb0] sm:$0xf] %v3923
      %4055 = vst [vmem:[#allocation3 + $0xd4] sm:$0xf] %v3926
      %4056 = vst [vmem:[#allocation3 + $0xf8] sm:$0xf] %v3930
      %4057 = vst [vmem:[#allocation3 + $0x11c] sm:$0xf] %v3933
      %4058 = vst [vmem:[#allocation3 + $0x140] sm:$0xf] %v3937
      %4059 = vst [vmem:[#allocation3 + $0x164] sm:$0xf] %v3940
      %4060 = vst [vmem:[#allocation3 + $0x188] sm:$0xf] %v3944
      %4061 = vst [vmem:[#allocation3 + $0x1ac] sm:$0xf] %v3947
      %4062 = vst [vmem:[#allocation3 + $0x1d0] sm:$0xf] %v3951
      %4063 = vst [vmem:[#allocation3 + $0x1f4] sm:$0xf] %v3954
      %4064 = vst [vmem:[#allocation3 + $0x218] sm:$0xf] %v3958
      %4065 = vst [vmem:[#allocation3 + $0x23c] sm:$0xf] %v3961
      %4066 = vst [vmem:[#allocation3 + $0x260] sm:$0xf] %v3965
      %4067 = vst [vmem:[#allocation3 + $0x284] sm:$0xf] %v3968
      %4068 = vst [vmem:[#allocation3 + $0x2a8] sm:$0xf] %v3972
      %4069 = vst [vmem:[#allocation3 + $0x2cc] sm:$0xf] %v3975
      %4070 = vst [vmem:[#allocation3 + $0x2f0] sm:$0xf] %v3979
      %4071 = vst [vmem:[#allocation3 + $0x314] sm:$0xf] %v3982
      %4072 = vst [vmem:[#allocation3 + $0x338] sm:$0xf] %v3986
      %4073 = vst [vmem:[#allocation3 + $0x35c] sm:$0xf] %v3989
      %4074 = vst [vmem:[#allocation3 + $0x380] sm:$0xf] %v3993
      %4075 = vst [vmem:[#allocation3 + $0x3a4] sm:$0xf] %v3996
      %4076 = vst [vmem:[#allocation3 + $0x3c8] sm:$0xf] %v4000
      %4077 = vst [vmem:[#allocation3 + $0x3ec] sm:$0xf] %v4003
      %4078 = vst [vmem:[#allocation3 + $0x410] sm:$0xf] %v4007
      %4079 = vst [vmem:[#allocation3 + $0x434] sm:$0xf] %v4010
      %4080 = vst [vmem:[#allocation3 + $0x458] sm:$0xf] %v4014
      %4081 = vst [vmem:[#allocation3 + $0x47c] sm:$0xf] %v4017
      %v4082 = vld [vmem:[#allocation3] sm:$0xff]
      %v4083 = vld [vmem:[#allocation3 + $0x8] sm:$0xff]
      %v4084 = vld [vmem:[#allocation3 + $0x10] sm:$0xff]
      %v4085 = vld [vmem:[#allocation3 + $0x18] sm:$0xff]
      %v4086 = vld [vmem:[#allocation3 + $0x20] sm:$0xf]
      %v4087 = vld [vmem:[#allocation3 + $0x24] sm:$0xff]
      %v4088 = vld [vmem:[#allocation3 + $0x2c] sm:$0xff]
      %v4089 = vld [vmem:[#allocation3 + $0x34] sm:$0xff]
      %v4090 = vld [vmem:[#allocation3 + $0x3c] sm:$0xff]
      %v4091 = vld [vmem:[#allocation3 + $0x44] sm:$0xf]
      %v4092 = vld [vmem:[#allocation3 + $0x48] sm:$0xff]
      %v4093 = vld [vmem:[#allocation3 + $0x50] sm:$0xff]
      %v4094 = vld [vmem:[#allocation3 + $0x58] sm:$0xff]
      %v4095 = vld [vmem:[#allocation3 + $0x60] sm:$0xff]
      %v4096 = vld [vmem:[#allocation3 + $0x68] sm:$0xf]
      %v4097 = vld [vmem:[#allocation3 + $0x6c] sm:$0xff]
      %v4098 = vld [vmem:[#allocation3 + $0x74] sm:$0xff]
      %v4099 = vld [vmem:[#allocation3 + $0x7c] sm:$0xff]
      %v4100 = vld [vmem:[#allocation3 + $0x84] sm:$0xff]
      %v4101 = vld [vmem:[#allocation3 + $0x8c] sm:$0xf]
      %v4102 = vld [vmem:[#allocation3 + $0x90] sm:$0xff]
      %v4103 = vld [vmem:[#allocation3 + $0x98] sm:$0xff]
      %v4104 = vld [vmem:[#allocation3 + $0xa0] sm:$0xff]
      %v4105 = vld [vmem:[#allocation3 + $0xa8] sm:$0xff]
      %v4106 = vld [vmem:[#allocation3 + $0xb0] sm:$0xf]
      %v4107 = vld [vmem:[#allocation3 + $0xb4] sm:$0xff]
      %v4108 = vld [vmem:[#allocation3 + $0xbc] sm:$0xff]
      %v4109 = vld [vmem:[#allocation3 + $0xc4] sm:$0xff]
      %v4110 = vld [vmem:[#allocation3 + $0xcc] sm:$0xff]
      %v4111 = vld [vmem:[#allocation3 + $0xd4] sm:$0xf]
      %v4112 = vld [vmem:[#allocation3 + $0xd8] sm:$0xff]
      %v4113 = vld [vmem:[#allocation3 + $0xe0] sm:$0xff]
      %v4114 = vld [vmem:[#allocation3 + $0xe8] sm:$0xff]
      %v4115 = vld [vmem:[#allocation3 + $0xf0] sm:$0xff]
      %v4116 = vld [vmem:[#allocation3 + $0xf8] sm:$0xf]
      %v4117 = vld [vmem:[#allocation3 + $0xfc] sm:$0xff]
      %v4118 = vld [vmem:[#allocation3 + $0x104] sm:$0xff]
      %v4119 = vld [vmem:[#allocation3 + $0x10c] sm:$0xff]
      %v4120 = vld [vmem:[#allocation3 + $0x114] sm:$0xff]
      %v4121 = vld [vmem:[#allocation3 + $0x11c] sm:$0xf]
      %v4122 = vld [vmem:[#allocation3 + $0x120] sm:$0xff]
      %v4123 = vld [vmem:[#allocation3 + $0x128] sm:$0xff]
      %v4124 = vld [vmem:[#allocation3 + $0x130] sm:$0xff]
      %v4125 = vld [vmem:[#allocation3 + $0x138] sm:$0xff]
      %v4126 = vld [vmem:[#allocation3 + $0x140] sm:$0xf]
      %v4127 = vld [vmem:[#allocation3 + $0x144] sm:$0xff]
      %v4128 = vld [vmem:[#allocation3 + $0x14c] sm:$0xff]
      %v4129 = vld [vmem:[#allocation3 + $0x154] sm:$0xff]
      %v4130 = vld [vmem:[#allocation3 + $0x15c] sm:$0xff]
      %v4131 = vld [vmem:[#allocation3 + $0x164] sm:$0xf]
      %v4132 = vld [vmem:[#allocation3 + $0x168] sm:$0xff]
      %v4133 = vld [vmem:[#allocation3 + $0x170] sm:$0xff]
      %v4134 = vld [vmem:[#allocation3 + $0x178] sm:$0xff]
      %v4135 = vld [vmem:[#allocation3 + $0x180] sm:$0xff]
      %v4136 = vld [vmem:[#allocation3 + $0x188] sm:$0xf]
      %v4137 = vld [vmem:[#allocation3 + $0x18c] sm:$0xff]
      %v4138 = vld [vmem:[#allocation3 + $0x194] sm:$0xff]
      %v4139 = vld [vmem:[#allocation3 + $0x19c] sm:$0xff]
      %v4140 = vld [vmem:[#allocation3 + $0x1a4] sm:$0xff]
      %v4141 = vld [vmem:[#allocation3 + $0x1ac] sm:$0xf]
      %v4142 = vld [vmem:[#allocation3 + $0x1b0] sm:$0xff]
      %v4143 = vld [vmem:[#allocation3 + $0x1b8] sm:$0xff]
      %v4144 = vld [vmem:[#allocation3 + $0x1c0] sm:$0xff]
      %v4145 = vld [vmem:[#allocation3 + $0x1c8] sm:$0xff]
      %v4146 = vld [vmem:[#allocation3 + $0x1d0] sm:$0xf]
      %v4147 = vld [vmem:[#allocation3 + $0x1d4] sm:$0xff]
      %v4148 = vld [vmem:[#allocation3 + $0x1dc] sm:$0xff]
      %v4149 = vld [vmem:[#allocation3 + $0x1e4] sm:$0xff]
      %v4150 = vld [vmem:[#allocation3 + $0x1ec] sm:$0xff]
      %v4151 = vld [vmem:[#allocation3 + $0x1f4] sm:$0xf]
      %v4152 = vld [vmem:[#allocation3 + $0x1f8] sm:$0xff]
      %v4153 = vld [vmem:[#allocation3 + $0x200] sm:$0xff]
      %v4154 = vld [vmem:[#allocation3 + $0x208] sm:$0xff]
      %v4155 = vld [vmem:[#allocation3 + $0x210] sm:$0xff]
      %v4156 = vld [vmem:[#allocation3 + $0x218] sm:$0xf]
      %v4157 = vld [vmem:[#allocation3 + $0x21c] sm:$0xff]
      %v4158 = vld [vmem:[#allocation3 + $0x224] sm:$0xff]
      %v4159 = vld [vmem:[#allocation3 + $0x22c] sm:$0xff]
      %v4160 = vld [vmem:[#allocation3 + $0x234] sm:$0xff]
      %v4161 = vld [vmem:[#allocation3 + $0x23c] sm:$0xf]
      %v4162 = vld [vmem:[#allocation3 + $0x240] sm:$0xff]
      %v4163 = vld [vmem:[#allocation3 + $0x248] sm:$0xff]
      %v4164 = vld [vmem:[#allocation3 + $0x250] sm:$0xff]
      %v4165 = vld [vmem:[#allocation3 + $0x258] sm:$0xff]
      %v4166 = vld [vmem:[#allocation3 + $0x260] sm:$0xf]
      %v4167 = vld [vmem:[#allocation3 + $0x264] sm:$0xff]
      %v4168 = vld [vmem:[#allocation3 + $0x26c] sm:$0xff]
      %v4169 = vld [vmem:[#allocation3 + $0x274] sm:$0xff]
      %v4170 = vld [vmem:[#allocation3 + $0x27c] sm:$0xff]
      %v4171 = vld [vmem:[#allocation3 + $0x284] sm:$0xf]
      %v4172 = vld [vmem:[#allocation3 + $0x288] sm:$0xff]
      %v4173 = vld [vmem:[#allocation3 + $0x290] sm:$0xff]
      %v4174 = vld [vmem:[#allocation3 + $0x298] sm:$0xff]
      %v4175 = vld [vmem:[#allocation3 + $0x2a0] sm:$0xff]
      %v4176 = vld [vmem:[#allocation3 + $0x2a8] sm:$0xf]
      %v4177 = vld [vmem:[#allocation3 + $0x2ac] sm:$0xff]
      %v4178 = vld [vmem:[#allocation3 + $0x2b4] sm:$0xff]
      %v4179 = vld [vmem:[#allocation3 + $0x2bc] sm:$0xff]
      %v4180 = vld [vmem:[#allocation3 + $0x2c4] sm:$0xff]
      %v4181 = vld [vmem:[#allocation3 + $0x2cc] sm:$0xf]
      %v4182 = vld [vmem:[#allocation3 + $0x2d0] sm:$0xff]
      %v4183 = vld [vmem:[#allocation3 + $0x2d8] sm:$0xff]
      %v4184 = vld [vmem:[#allocation3 + $0x2e0] sm:$0xff]
      %v4185 = vld [vmem:[#allocation3 + $0x2e8] sm:$0xff]
      %v4186 = vld [vmem:[#allocation3 + $0x2f0] sm:$0xf]
      %v4187 = vld [vmem:[#allocation3 + $0x2f4] sm:$0xff]
      %v4188 = vld [vmem:[#allocation3 + $0x2fc] sm:$0xff]
      %v4189 = vld [vmem:[#allocation3 + $0x304] sm:$0xff]
      %v4190 = vld [vmem:[#allocation3 + $0x30c] sm:$0xff]
      %v4191 = vld [vmem:[#allocation3 + $0x314] sm:$0xf]
      %v4192 = vld [vmem:[#allocation3 + $0x318] sm:$0xff]
      %v4193 = vld [vmem:[#allocation3 + $0x320] sm:$0xff]
      %v4194 = vld [vmem:[#allocation3 + $0x328] sm:$0xff]
      %v4195 = vld [vmem:[#allocation3 + $0x330] sm:$0xff]
      %v4196 = vld [vmem:[#allocation3 + $0x338] sm:$0xf]
      %v4197 = vld [vmem:[#allocation3 + $0x33c] sm:$0xff]
      %v4198 = vld [vmem:[#allocation3 + $0x344] sm:$0xff]
      %v4199 = vld [vmem:[#allocation3 + $0x34c] sm:$0xff]
      %v4200 = vld [vmem:[#allocation3 + $0x354] sm:$0xff]
      %v4201 = vld [vmem:[#allocation3 + $0x35c] sm:$0xf]
      %v4202 = vld [vmem:[#allocation3 + $0x360] sm:$0xff]
      %v4203 = vld [vmem:[#allocation3 + $0x368] sm:$0xff]
      %v4204 = vld [vmem:[#allocation3 + $0x370] sm:$0xff]
      %v4205 = vld [vmem:[#allocation3 + $0x378] sm:$0xff]
      %v4206 = vld [vmem:[#allocation3 + $0x380] sm:$0xf]
      %v4207 = vld [vmem:[#allocation3 + $0x384] sm:$0xff]
      %v4208 = vld [vmem:[#allocation3 + $0x38c] sm:$0xff]
      %v4209 = vld [vmem:[#allocation3 + $0x394] sm:$0xff]
      %v4210 = vld [vmem:[#allocation3 + $0x39c] sm:$0xff]
      %v4211 = vld [vmem:[#allocation3 + $0x3a4] sm:$0xf]
      %v4212 = vld [vmem:[#allocation3 + $0x3a8] sm:$0xff]
      %v4213 = vld [vmem:[#allocation3 + $0x3b0] sm:$0xff]
      %v4214 = vld [vmem:[#allocation3 + $0x3b8] sm:$0xff]
      %v4215 = vld [vmem:[#allocation3 + $0x3c0] sm:$0xff]
      %v4216 = vld [vmem:[#allocation3 + $0x3c8] sm:$0xf]
      %v4217 = vld [vmem:[#allocation3 + $0x3cc] sm:$0xff]
      %v4218 = vld [vmem:[#allocation3 + $0x3d4] sm:$0xff]
      %v4219 = vld [vmem:[#allocation3 + $0x3dc] sm:$0xff]
      %v4220 = vld [vmem:[#allocation3 + $0x3e4] sm:$0xff]
      %v4221 = vld [vmem:[#allocation3 + $0x3ec] sm:$0xf]
      %v4222 = vld [vmem:[#allocation3 + $0x3f0] sm:$0xff]
      %v4223 = vld [vmem:[#allocation3 + $0x3f8] sm:$0xff]
      %v4224 = vld [vmem:[#allocation3 + $0x400] sm:$0xff]
      %v4225 = vld [vmem:[#allocation3 + $0x408] sm:$0xff]
      %v4226 = vld [vmem:[#allocation3 + $0x410] sm:$0xf]
      %v4227 = vld [vmem:[#allocation3 + $0x414] sm:$0xff]
      %v4228 = vld [vmem:[#allocation3 + $0x41c] sm:$0xff]
      %v4229 = vld [vmem:[#allocation3 + $0x424] sm:$0xff]
      %v4230 = vld [vmem:[#allocation3 + $0x42c] sm:$0xff]
      %v4231 = vld [vmem:[#allocation3 + $0x434] sm:$0xf]
      %v4232 = vld [vmem:[#allocation3 + $0x438] sm:$0xff]
      %v4233 = vld [vmem:[#allocation3 + $0x440] sm:$0xff]
      %v4234 = vld [vmem:[#allocation3 + $0x448] sm:$0xff]
      %v4235 = vld [vmem:[#allocation3 + $0x450] sm:$0xff]
      %v4236 = vld [vmem:[#allocation3 + $0x458] sm:$0xf]
      %v4237 = vld [vmem:[#allocation3 + $0x45c] sm:$0xff]
      %v4238 = vld [vmem:[#allocation3 + $0x464] sm:$0xff]
      %v4239 = vld [vmem:[#allocation3 + $0x46c] sm:$0xff]
      %v4240 = vld [vmem:[#allocation3 + $0x474] sm:$0xff]
      %v4241 = vld [vmem:[#allocation3 + $0x47c] sm:$0xf]
      %v4242 = vld [vmem:[%s4] sm:$0xf]
      %v4243 = vld [vmem:[%s4 + $0x4] sm:$0xf]
      %v4244 = vld [vmem:[%s4 + $0x8] sm:$0xf]
      %v4245 = vld [vmem:[%s4 + $0xc] sm:$0xf]
      %v4246 = vld [vmem:[%s4 + $0x10] sm:$0xf]
      %v4247 = vld [vmem:[%s4 + $0x14] sm:$0xf]
      %v4248 = vld [vmem:[%s4 + $0x18] sm:$0xf]
      %v4249 = vld [vmem:[%s4 + $0x1c] sm:$0xf]
      %v4250 = vld [vmem:[%s4 + $0x20] sm:$0xf]
      %v4251 = vld [vmem:[%s4 + $0x24] sm:$0xf]
      %v4252 = vld [vmem:[%s4 + $0x28] sm:$0xf]
      %v4253 = vld [vmem:[%s4 + $0x2c] sm:$0xf]
      %v4254 = vld [vmem:[%s4 + $0x30] sm:$0xf]
      %v4255 = vld [vmem:[%s4 + $0x34] sm:$0xf]
      %v4256 = vld [vmem:[%s4 + $0x38] sm:$0xf]
      %v4257 = vld [vmem:[%s4 + $0x3c] sm:$0xf]
      %v4258 = vld [vmem:[%s4 + $0x40] sm:$0xf]
      %v4259 = vld [vmem:[%s4 + $0x44] sm:$0xf]
      %v4260 = vld [vmem:[%s4 + $0x48] sm:$0xf]
      %v4261 = vld [vmem:[%s4 + $0x4c] sm:$0xf]
      %v4262 = vld [vmem:[%s4 + $0x50] sm:$0xf]
      %v4263 = vld [vmem:[%s4 + $0x54] sm:$0xf]
      %v4264 = vld [vmem:[%s4 + $0x58] sm:$0xf]
      %v4265 = vld [vmem:[%s4 + $0x5c] sm:$0xf]
      %v4266 = vld [vmem:[%s4 + $0x60] sm:$0xf]
      %v4267 = vld [vmem:[%s4 + $0x64] sm:$0xf]
      %v4268 = vld [vmem:[%s4 + $0x68] sm:$0xf]
      %v4269 = vld [vmem:[%s4 + $0x6c] sm:$0xf]
      %v4270 = vld [vmem:[%s4 + $0x70] sm:$0xf]
      %v4271 = vld [vmem:[%s4 + $0x74] sm:$0xf]
      %v4272 = vld [vmem:[%s4 + $0x78] sm:$0xf]
      %v4273 = vld [vmem:[%s4 + $0x7c] sm:$0xf]
      %v4274 = vld [vmem:[%s4 + $0x80] sm:$0xf]
      %v4275 = vld [vmem:[%s4 + $0x84] sm:$0xf]
      %v4276 = vld [vmem:[%s4 + $0x88] sm:$0xf]
      %v4277 = vld [vmem:[%s4 + $0x8c] sm:$0xf]
      %v4278 = vld [vmem:[%s4 + $0x90] sm:$0xf]
      %v4279 = vld [vmem:[%s4 + $0x94] sm:$0xf]
      %v4280 = vld [vmem:[%s4 + $0x98] sm:$0xf]
      %v4281 = vld [vmem:[%s4 + $0x9c] sm:$0xf]
      %v4282 = vld [vmem:[%s4 + $0xa0] sm:$0xf]
      %v4283 = vld [vmem:[%s4 + $0xa4] sm:$0xf]
      %v4284 = vld [vmem:[%s4 + $0xa8] sm:$0xf]
      %v4285 = vld [vmem:[%s4 + $0xac] sm:$0xf]
      %v4286 = vld [vmem:[%s4 + $0xb0] sm:$0xf]
      %v4287 = vld [vmem:[%s4 + $0xb4] sm:$0xf]
      %v4288 = vld [vmem:[%s4 + $0xb8] sm:$0xf]
      %v4289 = vld [vmem:[%s4 + $0xbc] sm:$0xf]
      %v4290 = vld [vmem:[%s4 + $0xc0] sm:$0xf]
      %v4291 = vld [vmem:[%s4 + $0xc4] sm:$0xf]
      %v4292 = vld [vmem:[%s4 + $0xc8] sm:$0xf]
      %v4293 = vld [vmem:[%s4 + $0xcc] sm:$0xf]
      %v4294 = vld [vmem:[%s4 + $0xd0] sm:$0xf]
      %v4295 = vld [vmem:[%s4 + $0xd4] sm:$0xf]
      %v4296 = vld [vmem:[%s4 + $0xd8] sm:$0xf]
      %v4297 = vld [vmem:[%s4 + $0xdc] sm:$0xf]
      %v4298 = vld [vmem:[%s4 + $0xe0] sm:$0xf]
      %v4299 = vld [vmem:[%s4 + $0xe4] sm:$0xf]
      %v4300 = vld [vmem:[%s4 + $0xe8] sm:$0xf]
      %v4301 = vld [vmem:[%s4 + $0xec] sm:$0xf]
      %v4302 = vld [vmem:[%s4 + $0xf0] sm:$0xf]
      %v4303 = vld [vmem:[%s4 + $0xf4] sm:$0xf]
      %v4304 = vld [vmem:[%s4 + $0xf8] sm:$0xf]
      %v4305 = vld [vmem:[%s4 + $0xfc] sm:$0xf]
      %v4306 = vld [vmem:[%s4 + $0x100] sm:$0xf]
      %v4307 = vld [vmem:[%s4 + $0x104] sm:$0xf]
      %v4308 = vld [vmem:[%s4 + $0x108] sm:$0xf]
      %v4309 = vld [vmem:[%s4 + $0x10c] sm:$0xf]
      %v4310 = vld [vmem:[%s4 + $0x110] sm:$0xf]
      %v4311 = vld [vmem:[%s4 + $0x114] sm:$0xf]
      %v4312 = vld [vmem:[%s4 + $0x118] sm:$0xf]
      %v4313 = vld [vmem:[%s4 + $0x11c] sm:$0xf]
      %v4314 = vld [vmem:[%s4 + $0x120] sm:$0xf]
      %v4315 = vld [vmem:[%s4 + $0x124] sm:$0xf]
      %v4316 = vld [vmem:[%s4 + $0x128] sm:$0xf]
      %v4317 = vld [vmem:[%s4 + $0x12c] sm:$0xf]
      %v4318 = vld [vmem:[%s4 + $0x130] sm:$0xf]
      %v4319 = vld [vmem:[%s4 + $0x134] sm:$0xf]
      %v4320 = vld [vmem:[%s4 + $0x138] sm:$0xf]
      %v4321 = vld [vmem:[%s4 + $0x13c] sm:$0xf]
      %v4322 = vld [vmem:[%s4 + $0x140] sm:$0xf]
      %v4323 = vld [vmem:[%s4 + $0x144] sm:$0xf]
      %v4324 = vld [vmem:[%s4 + $0x148] sm:$0xf]
      %v4325 = vld [vmem:[%s4 + $0x14c] sm:$0xf]
      %v4326 = vld [vmem:[%s4 + $0x150] sm:$0xf]
      %v4327 = vld [vmem:[%s4 + $0x154] sm:$0xf]
      %v4328 = vld [vmem:[%s4 + $0x158] sm:$0xf]
      %v4329 = vld [vmem:[%s4 + $0x15c] sm:$0xf]
      %v4330 = vld [vmem:[%s4 + $0x160] sm:$0xf]
      %v4331 = vld [vmem:[%s4 + $0x164] sm:$0xf]
      %v4332 = vld [vmem:[%s4 + $0x168] sm:$0xf]
      %v4333 = vld [vmem:[%s4 + $0x16c] sm:$0xf]
      %v4334 = vld [vmem:[%s4 + $0x170] sm:$0xf]
      %v4335 = vld [vmem:[%s4 + $0x174] sm:$0xf]
      %v4336 = vld [vmem:[%s4 + $0x178] sm:$0xf]
      %v4337 = vld [vmem:[%s4 + $0x17c] sm:$0xf]
      %v4338 = vld [vmem:[%s4 + $0x180] sm:$0xf]
      %v4339 = vld [vmem:[%s4 + $0x184] sm:$0xf]
      %v4340 = vld [vmem:[%s4 + $0x188] sm:$0xf]
      %v4341 = vld [vmem:[%s4 + $0x18c] sm:$0xf]
      %v4342 = vld [vmem:[%s4 + $0x190] sm:$0xf]
      %v4343 = vld [vmem:[%s4 + $0x194] sm:$0xf]
      %v4344 = vld [vmem:[%s4 + $0x198] sm:$0xf]
      %v4345 = vld [vmem:[%s4 + $0x19c] sm:$0xf]
      %v4346 = vld [vmem:[%s4 + $0x1a0] sm:$0xf]
      %v4347 = vld [vmem:[%s4 + $0x1a4] sm:$0xf]
      %v4348 = vld [vmem:[%s4 + $0x1a8] sm:$0xf]
      %v4349 = vld [vmem:[%s4 + $0x1ac] sm:$0xf]
      %v4350 = vld [vmem:[%s4 + $0x1b0] sm:$0xf]
      %v4351 = vld [vmem:[%s4 + $0x1b4] sm:$0xf]
      %v4352 = vld [vmem:[%s4 + $0x1b8] sm:$0xf]
      %v4353 = vld [vmem:[%s4 + $0x1bc] sm:$0xf]
      %v4354 = vld [vmem:[%s4 + $0x1c0] sm:$0xf]
      %v4355 = vld [vmem:[%s4 + $0x1c4] sm:$0xf]
      %v4356 = vld [vmem:[%s4 + $0x1c8] sm:$0xf]
      %v4357 = vld [vmem:[%s4 + $0x1cc] sm:$0xf]
      %v4358 = vld [vmem:[%s4 + $0x1d0] sm:$0xf]
      %v4359 = vld [vmem:[%s4 + $0x1d4] sm:$0xf]
      %v4360 = vld [vmem:[%s4 + $0x1d8] sm:$0xf]
      %v4361 = vld [vmem:[%s4 + $0x1dc] sm:$0xf]
      %v4362 = vld [vmem:[%s4 + $0x1e0] sm:$0xf]
      %v4363 = vld [vmem:[%s4 + $0x1e4] sm:$0xf]
      %v4364 = vld [vmem:[%s4 + $0x1e8] sm:$0xf]
      %v4365 = vld [vmem:[%s4 + $0x1ec] sm:$0xf]
      %v4366 = vld [vmem:[%s4 + $0x1f0] sm:$0xf]
      %v4367 = vld [vmem:[%s4 + $0x1f4] sm:$0xf]
      %v4368 = vld [vmem:[%s4 + $0x1f8] sm:$0xf]
      %v4369 = vld [vmem:[%s4 + $0x1fc] sm:$0xf]
      %v4370 = vld [vmem:[%s4 + $0x200] sm:$0xf]
      %v4371 = vld [vmem:[%s4 + $0x204] sm:$0xf]
      %v4372 = vld [vmem:[%s4 + $0x208] sm:$0xf]
      %v4373 = vld [vmem:[%s4 + $0x20c] sm:$0xf]
      %v4374 = vld [vmem:[%s4 + $0x210] sm:$0xf]
      %v4375 = vld [vmem:[%s4 + $0x214] sm:$0xf]
      %v4376 = vld [vmem:[%s4 + $0x218] sm:$0xf]
      %v4377 = vld [vmem:[%s4 + $0x21c] sm:$0xf]
      %v4378 = vld [vmem:[%s4 + $0x220] sm:$0xf]
      %v4379 = vld [vmem:[%s4 + $0x224] sm:$0xf]
      %v4380 = vld [vmem:[%s4 + $0x228] sm:$0xf]
      %v4381 = vld [vmem:[%s4 + $0x22c] sm:$0xf]
      %v4382 = vld [vmem:[%s4 + $0x230] sm:$0xf]
      %v4383 = vld [vmem:[%s4 + $0x234] sm:$0xf]
      %v4384 = vld [vmem:[%s4 + $0x238] sm:$0xf]
      %v4385 = vld [vmem:[%s4 + $0x23c] sm:$0xf]
      %v4546 = vunpack.c.l.b16 %v4082
      %v4547 = vunpack.c.h.b16 %v4082
      %v4548 = vunpack.c.l.b16 %v4083
      %v4549 = vunpack.c.h.b16 %v4083
      %v4550 = vunpack.c.l.b16 %v4084
      %v4551 = vunpack.c.h.b16 %v4084
      %v4552 = vunpack.c.l.b16 %v4085
      %v4553 = vunpack.c.h.b16 %v4085
      %v4554 = vunpack.c.l.b16 %v4086
      %v4555 = vunpack.c.l.b16 %v4087
      %v4556 = vunpack.c.h.b16 %v4087
      %v4557 = vunpack.c.l.b16 %v4088
      %v4558 = vunpack.c.h.b16 %v4088
      %v4559 = vunpack.c.l.b16 %v4089
      %v4560 = vunpack.c.h.b16 %v4089
      %v4561 = vunpack.c.l.b16 %v4090
      %v4562 = vunpack.c.h.b16 %v4090
      %v4563 = vunpack.c.l.b16 %v4091
      %v4564 = vunpack.c.l.b16 %v4092
      %v4565 = vunpack.c.h.b16 %v4092
      %v4566 = vunpack.c.l.b16 %v4093
      %v4567 = vunpack.c.h.b16 %v4093
      %v4568 = vunpack.c.l.b16 %v4094
      %v4569 = vunpack.c.h.b16 %v4094
      %v4570 = vunpack.c.l.b16 %v4095
      %v4571 = vunpack.c.h.b16 %v4095
      %v4572 = vunpack.c.l.b16 %v4096
      %v4573 = vunpack.c.l.b16 %v4097
      %v4574 = vunpack.c.h.b16 %v4097
      %v4575 = vunpack.c.l.b16 %v4098
      %v4576 = vunpack.c.h.b16 %v4098
      %v4577 = vunpack.c.l.b16 %v4099
      %v4578 = vunpack.c.h.b16 %v4099
      %v4579 = vunpack.c.l.b16 %v4100
      %v4580 = vunpack.c.h.b16 %v4100
      %v4581 = vunpack.c.l.b16 %v4101
      %v4582 = vunpack.c.l.b16 %v4102
      %v4583 = vunpack.c.h.b16 %v4102
      %v4584 = vunpack.c.l.b16 %v4103
      %v4585 = vunpack.c.h.b16 %v4103
      %v4586 = vunpack.c.l.b16 %v4104
      %v4587 = vunpack.c.h.b16 %v4104
      %v4588 = vunpack.c.l.b16 %v4105
      %v4589 = vunpack.c.h.b16 %v4105
      %v4590 = vunpack.c.l.b16 %v4106
      %v4591 = vunpack.c.l.b16 %v4107
      %v4592 = vunpack.c.h.b16 %v4107
      %v4593 = vunpack.c.l.b16 %v4108
      %v4594 = vunpack.c.h.b16 %v4108
      %v4595 = vunpack.c.l.b16 %v4109
      %v4596 = vunpack.c.h.b16 %v4109
      %v4597 = vunpack.c.l.b16 %v4110
      %v4598 = vunpack.c.h.b16 %v4110
      %v4599 = vunpack.c.l.b16 %v4111
      %v4600 = vunpack.c.l.b16 %v4112
      %v4601 = vunpack.c.h.b16 %v4112
      %v4602 = vunpack.c.l.b16 %v4113
      %v4603 = vunpack.c.h.b16 %v4113
      %v4604 = vunpack.c.l.b16 %v4114
      %v4605 = vunpack.c.h.b16 %v4114
      %v4606 = vunpack.c.l.b16 %v4115
      %v4607 = vunpack.c.h.b16 %v4115
      %v4608 = vunpack.c.l.b16 %v4116
      %v4609 = vunpack.c.l.b16 %v4117
      %v4610 = vunpack.c.h.b16 %v4117
      %v4611 = vunpack.c.l.b16 %v4118
      %v4612 = vunpack.c.h.b16 %v4118
      %v4613 = vunpack.c.l.b16 %v4119
      %v4614 = vunpack.c.h.b16 %v4119
      %v4615 = vunpack.c.l.b16 %v4120
      %v4616 = vunpack.c.h.b16 %v4120
      %v4617 = vunpack.c.l.b16 %v4121
      %v4618 = vunpack.c.l.b16 %v4122
      %v4619 = vunpack.c.h.b16 %v4122
      %v4620 = vunpack.c.l.b16 %v4123
      %v4621 = vunpack.c.h.b16 %v4123
      %v4622 = vunpack.c.l.b16 %v4124
      %v4623 = vunpack.c.h.b16 %v4124
      %v4624 = vunpack.c.l.b16 %v4125
      %v4625 = vunpack.c.h.b16 %v4125
      %v4626 = vunpack.c.l.b16 %v4126
      %v4627 = vunpack.c.l.b16 %v4127
      %v4628 = vunpack.c.h.b16 %v4127
      %v4629 = vunpack.c.l.b16 %v4128
      %v4630 = vunpack.c.h.b16 %v4128
      %v4631 = vunpack.c.l.b16 %v4129
      %v4632 = vunpack.c.h.b16 %v4129
      %v4633 = vunpack.c.l.b16 %v4130
      %v4634 = vunpack.c.h.b16 %v4130
      %v4635 = vunpack.c.l.b16 %v4131
      %v4636 = vunpack.c.l.b16 %v4132
      %v4637 = vunpack.c.h.b16 %v4132
      %v4638 = vunpack.c.l.b16 %v4133
      %v4639 = vunpack.c.h.b16 %v4133
      %v4640 = vunpack.c.l.b16 %v4134
      %v4641 = vunpack.c.h.b16 %v4134
      %v4642 = vunpack.c.l.b16 %v4135
      %v4643 = vunpack.c.h.b16 %v4135
      %v4644 = vunpack.c.l.b16 %v4136
      %v4645 = vunpack.c.l.b16 %v4137
      %v4646 = vunpack.c.h.b16 %v4137
      %v4647 = vunpack.c.l.b16 %v4138
      %v4648 = vunpack.c.h.b16 %v4138
      %v4649 = vunpack.c.l.b16 %v4139
      %v4650 = vunpack.c.h.b16 %v4139
      %v4651 = vunpack.c.l.b16 %v4140
      %v4652 = vunpack.c.h.b16 %v4140
      %v4653 = vunpack.c.l.b16 %v4141
      %v4654 = vunpack.c.l.b16 %v4142
      %v4655 = vunpack.c.h.b16 %v4142
      %v4656 = vunpack.c.l.b16 %v4143
      %v4657 = vunpack.c.h.b16 %v4143
      %v4658 = vunpack.c.l.b16 %v4144
      %v4659 = vunpack.c.h.b16 %v4144
      %v4660 = vunpack.c.l.b16 %v4145
      %v4661 = vunpack.c.h.b16 %v4145
      %v4662 = vunpack.c.l.b16 %v4146
      %v4663 = vunpack.c.l.b16 %v4147
      %v4664 = vunpack.c.h.b16 %v4147
      %v4665 = vunpack.c.l.b16 %v4148
      %v4666 = vunpack.c.h.b16 %v4148
      %v4667 = vunpack.c.l.b16 %v4149
      %v4668 = vunpack.c.h.b16 %v4149
      %v4669 = vunpack.c.l.b16 %v4150
      %v4670 = vunpack.c.h.b16 %v4150
      %v4671 = vunpack.c.l.b16 %v4151
      %v4672 = vunpack.c.l.b16 %v4152
      %v4673 = vunpack.c.h.b16 %v4152
      %v4674 = vunpack.c.l.b16 %v4153
      %v4675 = vunpack.c.h.b16 %v4153
      %v4676 = vunpack.c.l.b16 %v4154
      %v4677 = vunpack.c.h.b16 %v4154
      %v4678 = vunpack.c.l.b16 %v4155
      %v4679 = vunpack.c.h.b16 %v4155
      %v4680 = vunpack.c.l.b16 %v4156
      %v4681 = vunpack.c.l.b16 %v4157
      %v4682 = vunpack.c.h.b16 %v4157
      %v4683 = vunpack.c.l.b16 %v4158
      %v4684 = vunpack.c.h.b16 %v4158
      %v4685 = vunpack.c.l.b16 %v4159
      %v4686 = vunpack.c.h.b16 %v4159
      %v4687 = vunpack.c.l.b16 %v4160
      %v4688 = vunpack.c.h.b16 %v4160
      %v4689 = vunpack.c.l.b16 %v4161
      %v4690 = vunpack.c.l.b16 %v4162
      %v4691 = vunpack.c.h.b16 %v4162
      %v4692 = vunpack.c.l.b16 %v4163
      %v4693 = vunpack.c.h.b16 %v4163
      %v4694 = vunpack.c.l.b16 %v4164
      %v4695 = vunpack.c.h.b16 %v4164
      %v4696 = vunpack.c.l.b16 %v4165
      %v4697 = vunpack.c.h.b16 %v4165
      %v4698 = vunpack.c.l.b16 %v4166
      %v4699 = vunpack.c.l.b16 %v4167
      %v4700 = vunpack.c.h.b16 %v4167
      %v4701 = vunpack.c.l.b16 %v4168
      %v4702 = vunpack.c.h.b16 %v4168
      %v4703 = vunpack.c.l.b16 %v4169
      %v4704 = vunpack.c.h.b16 %v4169
      %v4705 = vunpack.c.l.b16 %v4170
      %v4706 = vunpack.c.h.b16 %v4170
      %v4707 = vunpack.c.l.b16 %v4171
      %v4708 = vunpack.c.l.b16 %v4172
      %v4709 = vunpack.c.h.b16 %v4172
      %v4710 = vunpack.c.l.b16 %v4173
      %v4711 = vunpack.c.h.b16 %v4173
      %v4712 = vunpack.c.l.b16 %v4174
      %v4713 = vunpack.c.h.b16 %v4174
      %v4714 = vunpack.c.l.b16 %v4175
      %v4715 = vunpack.c.h.b16 %v4175
      %v4716 = vunpack.c.l.b16 %v4176
      %v4717 = vunpack.c.l.b16 %v4177
      %v4718 = vunpack.c.h.b16 %v4177
      %v4719 = vunpack.c.l.b16 %v4178
      %v4720 = vunpack.c.h.b16 %v4178
      %v4721 = vunpack.c.l.b16 %v4179
      %v4722 = vunpack.c.h.b16 %v4179
      %v4723 = vunpack.c.l.b16 %v4180
      %v4724 = vunpack.c.h.b16 %v4180
      %v4725 = vunpack.c.l.b16 %v4181
      %v4726 = vunpack.c.l.b16 %v4182
      %v4727 = vunpack.c.h.b16 %v4182
      %v4728 = vunpack.c.l.b16 %v4183
      %v4729 = vunpack.c.h.b16 %v4183
      %v4730 = vunpack.c.l.b16 %v4184
      %v4731 = vunpack.c.h.b16 %v4184
      %v4732 = vunpack.c.l.b16 %v4185
      %v4733 = vunpack.c.h.b16 %v4185
      %v4734 = vunpack.c.l.b16 %v4186
      %v4735 = vunpack.c.l.b16 %v4187
      %v4736 = vunpack.c.h.b16 %v4187
      %v4737 = vunpack.c.l.b16 %v4188
      %v4738 = vunpack.c.h.b16 %v4188
      %v4739 = vunpack.c.l.b16 %v4189
      %v4740 = vunpack.c.h.b16 %v4189
      %v4741 = vunpack.c.l.b16 %v4190
      %v4742 = vunpack.c.h.b16 %v4190
      %v4743 = vunpack.c.l.b16 %v4191
      %v4744 = vunpack.c.l.b16 %v4192
      %v4745 = vunpack.c.h.b16 %v4192
      %v4746 = vunpack.c.l.b16 %v4193
      %v4747 = vunpack.c.h.b16 %v4193
      %v4748 = vunpack.c.l.b16 %v4194
      %v4749 = vunpack.c.h.b16 %v4194
      %v4750 = vunpack.c.l.b16 %v4195
      %v4751 = vunpack.c.h.b16 %v4195
      %v4752 = vunpack.c.l.b16 %v4196
      %v4753 = vunpack.c.l.b16 %v4197
      %v4754 = vunpack.c.h.b16 %v4197
      %v4755 = vunpack.c.l.b16 %v4198
      %v4756 = vunpack.c.h.b16 %v4198
      %v4757 = vunpack.c.l.b16 %v4199
      %v4758 = vunpack.c.h.b16 %v4199
      %v4759 = vunpack.c.l.b16 %v4200
      %v4760 = vunpack.c.h.b16 %v4200
      %v4761 = vunpack.c.l.b16 %v4201
      %v4762 = vunpack.c.l.b16 %v4202
      %v4763 = vunpack.c.h.b16 %v4202
      %v4764 = vunpack.c.l.b16 %v4203
      %v4765 = vunpack.c.h.b16 %v4203
      %v4766 = vunpack.c.l.b16 %v4204
      %v4767 = vunpack.c.h.b16 %v4204
      %v4768 = vunpack.c.l.b16 %v4205
      %v4769 = vunpack.c.h.b16 %v4205
      %v4770 = vunpack.c.l.b16 %v4206
      %v4771 = vunpack.c.l.b16 %v4207
      %v4772 = vunpack.c.h.b16 %v4207
      %v4773 = vunpack.c.l.b16 %v4208
      %v4774 = vunpack.c.h.b16 %v4208
      %v4775 = vunpack.c.l.b16 %v4209
      %v4776 = vunpack.c.h.b16 %v4209
      %v4777 = vunpack.c.l.b16 %v4210
      %v4778 = vunpack.c.h.b16 %v4210
      %v4779 = vunpack.c.l.b16 %v4211
      %v4780 = vunpack.c.l.b16 %v4212
      %v4781 = vunpack.c.h.b16 %v4212
      %v4782 = vunpack.c.l.b16 %v4213
      %v4783 = vunpack.c.h.b16 %v4213
      %v4784 = vunpack.c.l.b16 %v4214
      %v4785 = vunpack.c.h.b16 %v4214
      %v4786 = vunpack.c.l.b16 %v4215
      %v4787 = vunpack.c.h.b16 %v4215
      %v4788 = vunpack.c.l.b16 %v4216
      %v4789 = vunpack.c.l.b16 %v4217
      %v4790 = vunpack.c.h.b16 %v4217
      %v4791 = vunpack.c.l.b16 %v4218
      %v4792 = vunpack.c.h.b16 %v4218
      %v4793 = vunpack.c.l.b16 %v4219
      %v4794 = vunpack.c.h.b16 %v4219
      %v4795 = vunpack.c.l.b16 %v4220
      %v4796 = vunpack.c.h.b16 %v4220
      %v4797 = vunpack.c.l.b16 %v4221
      %v4798 = vunpack.c.l.b16 %v4222
      %v4799 = vunpack.c.h.b16 %v4222
      %v4800 = vunpack.c.l.b16 %v4223
      %v4801 = vunpack.c.h.b16 %v4223
      %v4802 = vunpack.c.l.b16 %v4224
      %v4803 = vunpack.c.h.b16 %v4224
      %v4804 = vunpack.c.l.b16 %v4225
      %v4805 = vunpack.c.h.b16 %v4225
      %v4806 = vunpack.c.l.b16 %v4226
      %v4807 = vunpack.c.l.b16 %v4227
      %v4808 = vunpack.c.h.b16 %v4227
      %v4809 = vunpack.c.l.b16 %v4228
      %v4810 = vunpack.c.h.b16 %v4228
      %v4811 = vunpack.c.l.b16 %v4229
      %v4812 = vunpack.c.h.b16 %v4229
      %v4813 = vunpack.c.l.b16 %v4230
      %v4814 = vunpack.c.h.b16 %v4230
      %v4815 = vunpack.c.l.b16 %v4231
      %v4816 = vunpack.c.l.b16 %v4232
      %v4817 = vunpack.c.h.b16 %v4232
      %v4818 = vunpack.c.l.b16 %v4233
      %v4819 = vunpack.c.h.b16 %v4233
      %v4820 = vunpack.c.l.b16 %v4234
      %v4821 = vunpack.c.h.b16 %v4234
      %v4822 = vunpack.c.l.b16 %v4235
      %v4823 = vunpack.c.h.b16 %v4235
      %v4824 = vunpack.c.l.b16 %v4236
      %v4825 = vunpack.c.l.b16 %v4237
      %v4826 = vunpack.c.h.b16 %v4237
      %v4827 = vunpack.c.l.b16 %v4238
      %v4828 = vunpack.c.h.b16 %v4238
      %v4829 = vunpack.c.l.b16 %v4239
      %v4830 = vunpack.c.h.b16 %v4239
      %v4831 = vunpack.c.l.b16 %v4240
      %v4832 = vunpack.c.h.b16 %v4240
      %v4833 = vunpack.c.l.b16 %v4241
      %v4834 = vpack.c.b16 %v4555, %v4546
      %v4835 = vpack.c.b16 %v4556, %v4547
      %v4836 = vpack.c.b16 %v4557, %v4548
      %v4837 = vpack.c.b16 %v4558, %v4549
      %v4838 = vpack.c.b16 %v4559, %v4550
      %v4839 = vpack.c.b16 %v4560, %v4551
      %v4840 = vpack.c.b16 %v4561, %v4552
      %v4841 = vpack.c.b16 %v4562, %v4553
      %v4842 = vpack.c.b16 %v4563, %v4554
      %v4843 = vpack.c.b16 %v4573, %v4564
      %v4844 = vpack.c.b16 %v4574, %v4565
      %v4845 = vpack.c.b16 %v4575, %v4566
      %v4846 = vpack.c.b16 %v4576, %v4567
      %v4847 = vpack.c.b16 %v4577, %v4568
      %v4848 = vpack.c.b16 %v4578, %v4569
      %v4849 = vpack.c.b16 %v4579, %v4570
      %v4850 = vpack.c.b16 %v4580, %v4571
      %v4851 = vpack.c.b16 %v4581, %v4572
      %v4852 = vpack.c.b16 %v4591, %v4582
      %v4853 = vpack.c.b16 %v4592, %v4583
      %v4854 = vpack.c.b16 %v4593, %v4584
      %v4855 = vpack.c.b16 %v4594, %v4585
      %v4856 = vpack.c.b16 %v4595, %v4586
      %v4857 = vpack.c.b16 %v4596, %v4587
      %v4858 = vpack.c.b16 %v4597, %v4588
      %v4859 = vpack.c.b16 %v4598, %v4589
      %v4860 = vpack.c.b16 %v4599, %v4590
      %v4861 = vpack.c.b16 %v4609, %v4600
      %v4862 = vpack.c.b16 %v4610, %v4601
      %v4863 = vpack.c.b16 %v4611, %v4602
      %v4864 = vpack.c.b16 %v4612, %v4603
      %v4865 = vpack.c.b16 %v4613, %v4604
      %v4866 = vpack.c.b16 %v4614, %v4605
      %v4867 = vpack.c.b16 %v4615, %v4606
      %v4868 = vpack.c.b16 %v4616, %v4607
      %v4869 = vpack.c.b16 %v4617, %v4608
      %v4870 = vpack.c.b16 %v4627, %v4618
      %v4871 = vpack.c.b16 %v4628, %v4619
      %v4872 = vpack.c.b16 %v4629, %v4620
      %v4873 = vpack.c.b16 %v4630, %v4621
      %v4874 = vpack.c.b16 %v4631, %v4622
      %v4875 = vpack.c.b16 %v4632, %v4623
      %v4876 = vpack.c.b16 %v4633, %v4624
      %v4877 = vpack.c.b16 %v4634, %v4625
      %v4878 = vpack.c.b16 %v4635, %v4626
      %v4879 = vpack.c.b16 %v4645, %v4636
      %v4880 = vpack.c.b16 %v4646, %v4637
      %v4881 = vpack.c.b16 %v4647, %v4638
      %v4882 = vpack.c.b16 %v4648, %v4639
      %v4883 = vpack.c.b16 %v4649, %v4640
      %v4884 = vpack.c.b16 %v4650, %v4641
      %v4885 = vpack.c.b16 %v4651, %v4642
      %v4886 = vpack.c.b16 %v4652, %v4643
      %v4887 = vpack.c.b16 %v4653, %v4644
      %v4888 = vpack.c.b16 %v4663, %v4654
      %v4889 = vpack.c.b16 %v4664, %v4655
      %v4890 = vpack.c.b16 %v4665, %v4656
      %v4891 = vpack.c.b16 %v4666, %v4657
      %v4892 = vpack.c.b16 %v4667, %v4658
      %v4893 = vpack.c.b16 %v4668, %v4659
      %v4894 = vpack.c.b16 %v4669, %v4660
      %v4895 = vpack.c.b16 %v4670, %v4661
      %v4896 = vpack.c.b16 %v4671, %v4662
      %v4897 = vpack.c.b16 %v4681, %v4672
      %v4898 = vpack.c.b16 %v4682, %v4673
      %v4899 = vpack.c.b16 %v4683, %v4674
      %v4900 = vpack.c.b16 %v4684, %v4675
      %v4901 = vpack.c.b16 %v4685, %v4676
      %v4902 = vpack.c.b16 %v4686, %v4677
      %v4903 = vpack.c.b16 %v4687, %v4678
      %v4904 = vpack.c.b16 %v4688, %v4679
      %v4905 = vpack.c.b16 %v4689, %v4680
      %v4906 = vpack.c.b16 %v4699, %v4690
      %v4907 = vpack.c.b16 %v4700, %v4691
      %v4908 = vpack.c.b16 %v4701, %v4692
      %v4909 = vpack.c.b16 %v4702, %v4693
      %v4910 = vpack.c.b16 %v4703, %v4694
      %v4911 = vpack.c.b16 %v4704, %v4695
      %v4912 = vpack.c.b16 %v4705, %v4696
      %v4913 = vpack.c.b16 %v4706, %v4697
      %v4914 = vpack.c.b16 %v4707, %v4698
      %v4915 = vpack.c.b16 %v4717, %v4708
      %v4916 = vpack.c.b16 %v4718, %v4709
      %v4917 = vpack.c.b16 %v4719, %v4710
      %v4918 = vpack.c.b16 %v4720, %v4711
      %v4919 = vpack.c.b16 %v4721, %v4712
      %v4920 = vpack.c.b16 %v4722, %v4713
      %v4921 = vpack.c.b16 %v4723, %v4714
      %v4922 = vpack.c.b16 %v4724, %v4715
      %v4923 = vpack.c.b16 %v4725, %v4716
      %v4924 = vpack.c.b16 %v4735, %v4726
      %v4925 = vpack.c.b16 %v4736, %v4727
      %v4926 = vpack.c.b16 %v4737, %v4728
      %v4927 = vpack.c.b16 %v4738, %v4729
      %v4928 = vpack.c.b16 %v4739, %v4730
      %v4929 = vpack.c.b16 %v4740, %v4731
      %v4930 = vpack.c.b16 %v4741, %v4732
      %v4931 = vpack.c.b16 %v4742, %v4733
      %v4932 = vpack.c.b16 %v4743, %v4734
      %v4933 = vpack.c.b16 %v4753, %v4744
      %v4934 = vpack.c.b16 %v4754, %v4745
      %v4935 = vpack.c.b16 %v4755, %v4746
      %v4936 = vpack.c.b16 %v4756, %v4747
      %v4937 = vpack.c.b16 %v4757, %v4748
      %v4938 = vpack.c.b16 %v4758, %v4749
      %v4939 = vpack.c.b16 %v4759, %v4750
      %v4940 = vpack.c.b16 %v4760, %v4751
      %v4941 = vpack.c.b16 %v4761, %v4752
      %v4942 = vpack.c.b16 %v4771, %v4762
      %v4943 = vpack.c.b16 %v4772, %v4763
      %v4944 = vpack.c.b16 %v4773, %v4764
      %v4945 = vpack.c.b16 %v4774, %v4765
      %v4946 = vpack.c.b16 %v4775, %v4766
      %v4947 = vpack.c.b16 %v4776, %v4767
      %v4948 = vpack.c.b16 %v4777, %v4768
      %v4949 = vpack.c.b16 %v4778, %v4769
      %v4950 = vpack.c.b16 %v4779, %v4770
      %v4951 = vpack.c.b16 %v4789, %v4780
      %v4952 = vpack.c.b16 %v4790, %v4781
      %v4953 = vpack.c.b16 %v4791, %v4782
      %v4954 = vpack.c.b16 %v4792, %v4783
      %v4955 = vpack.c.b16 %v4793, %v4784
      %v4956 = vpack.c.b16 %v4794, %v4785
      %v4957 = vpack.c.b16 %v4795, %v4786
      %v4958 = vpack.c.b16 %v4796, %v4787
      %v4959 = vpack.c.b16 %v4797, %v4788
      %v4960 = vpack.c.b16 %v4807, %v4798
      %v4961 = vpack.c.b16 %v4808, %v4799
      %v4962 = vpack.c.b16 %v4809, %v4800
      %v4963 = vpack.c.b16 %v4810, %v4801
      %v4964 = vpack.c.b16 %v4811, %v4802
      %v4965 = vpack.c.b16 %v4812, %v4803
      %v4966 = vpack.c.b16 %v4813, %v4804
      %v4967 = vpack.c.b16 %v4814, %v4805
      %v4968 = vpack.c.b16 %v4815, %v4806
      %v4969 = vpack.c.b16 %v4825, %v4816
      %v4970 = vpack.c.b16 %v4826, %v4817
      %v4971 = vpack.c.b16 %v4827, %v4818
      %v4972 = vpack.c.b16 %v4828, %v4819
      %v4973 = vpack.c.b16 %v4829, %v4820
      %v4974 = vpack.c.b16 %v4830, %v4821
      %v4975 = vpack.c.b16 %v4831, %v4822
      %v4976 = vpack.c.b16 %v4832, %v4823
      %v4977 = vpack.c.b16 %v4833, %v4824
      %v5266 = vunpack.c.l.b16 %v4242
      %v5267 = vunpack.c.l.b16 %v4243
      %v5268 = vunpack.c.l.b16 %v4244
      %v5269 = vunpack.c.l.b16 %v4245
      %v5270 = vunpack.c.l.b16 %v4246
      %v5271 = vunpack.c.l.b16 %v4247
      %v5272 = vunpack.c.l.b16 %v4248
      %v5273 = vunpack.c.l.b16 %v4249
      %v5274 = vunpack.c.l.b16 %v4250
      %v5275 = vunpack.c.l.b16 %v4251
      %v5276 = vunpack.c.l.b16 %v4252
      %v5277 = vunpack.c.l.b16 %v4253
      %v5278 = vunpack.c.l.b16 %v4254
      %v5279 = vunpack.c.l.b16 %v4255
      %v5280 = vunpack.c.l.b16 %v4256
      %v5281 = vunpack.c.l.b16 %v4257
      %v5282 = vunpack.c.l.b16 %v4258
      %v5283 = vunpack.c.l.b16 %v4259
      %v5284 = vunpack.c.l.b16 %v4260
      %v5285 = vunpack.c.l.b16 %v4261
      %v5286 = vunpack.c.l.b16 %v4262
      %v5287 = vunpack.c.l.b16 %v4263
      %v5288 = vunpack.c.l.b16 %v4264
      %v5289 = vunpack.c.l.b16 %v4265
      %v5290 = vunpack.c.l.b16 %v4266
      %v5291 = vunpack.c.l.b16 %v4267
      %v5292 = vunpack.c.l.b16 %v4268
      %v5293 = vunpack.c.l.b16 %v4269
      %v5294 = vunpack.c.l.b16 %v4270
      %v5295 = vunpack.c.l.b16 %v4271
      %v5296 = vunpack.c.l.b16 %v4272
      %v5297 = vunpack.c.l.b16 %v4273
      %v5298 = vunpack.c.l.b16 %v4274
      %v5299 = vunpack.c.l.b16 %v4275
      %v5300 = vunpack.c.l.b16 %v4276
      %v5301 = vunpack.c.l.b16 %v4277
      %v5302 = vunpack.c.l.b16 %v4278
      %v5303 = vunpack.c.l.b16 %v4279
      %v5304 = vunpack.c.l.b16 %v4280
      %v5305 = vunpack.c.l.b16 %v4281
      %v5306 = vunpack.c.l.b16 %v4282
      %v5307 = vunpack.c.l.b16 %v4283
      %v5308 = vunpack.c.l.b16 %v4284
      %v5309 = vunpack.c.l.b16 %v4285
      %v5310 = vunpack.c.l.b16 %v4286
      %v5311 = vunpack.c.l.b16 %v4287
      %v5312 = vunpack.c.l.b16 %v4288
      %v5313 = vunpack.c.l.b16 %v4289
      %v5314 = vunpack.c.l.b16 %v4290
      %v5315 = vunpack.c.l.b16 %v4291
      %v5316 = vunpack.c.l.b16 %v4292
      %v5317 = vunpack.c.l.b16 %v4293
      %v5318 = vunpack.c.l.b16 %v4294
      %v5319 = vunpack.c.l.b16 %v4295
      %v5320 = vunpack.c.l.b16 %v4296
      %v5321 = vunpack.c.l.b16 %v4297
      %v5322 = vunpack.c.l.b16 %v4298
      %v5323 = vunpack.c.l.b16 %v4299
      %v5324 = vunpack.c.l.b16 %v4300
      %v5325 = vunpack.c.l.b16 %v4301
      %v5326 = vunpack.c.l.b16 %v4302
      %v5327 = vunpack.c.l.b16 %v4303
      %v5328 = vunpack.c.l.b16 %v4304
      %v5329 = vunpack.c.l.b16 %v4305
      %v5330 = vunpack.c.l.b16 %v4306
      %v5331 = vunpack.c.l.b16 %v4307
      %v5332 = vunpack.c.l.b16 %v4308
      %v5333 = vunpack.c.l.b16 %v4309
      %v5334 = vunpack.c.l.b16 %v4310
      %v5335 = vunpack.c.l.b16 %v4311
      %v5336 = vunpack.c.l.b16 %v4312
      %v5337 = vunpack.c.l.b16 %v4313
      %v5338 = vunpack.c.l.b16 %v4314
      %v5339 = vunpack.c.l.b16 %v4315
      %v5340 = vunpack.c.l.b16 %v4316
      %v5341 = vunpack.c.l.b16 %v4317
      %v5342 = vunpack.c.l.b16 %v4318
      %v5343 = vunpack.c.l.b16 %v4319
      %v5344 = vunpack.c.l.b16 %v4320
      %v5345 = vunpack.c.l.b16 %v4321
      %v5346 = vunpack.c.l.b16 %v4322
      %v5347 = vunpack.c.l.b16 %v4323
      %v5348 = vunpack.c.l.b16 %v4324
      %v5349 = vunpack.c.l.b16 %v4325
      %v5350 = vunpack.c.l.b16 %v4326
      %v5351 = vunpack.c.l.b16 %v4327
      %v5352 = vunpack.c.l.b16 %v4328
      %v5353 = vunpack.c.l.b16 %v4329
      %v5354 = vunpack.c.l.b16 %v4330
      %v5355 = vunpack.c.l.b16 %v4331
      %v5356 = vunpack.c.l.b16 %v4332
      %v5357 = vunpack.c.l.b16 %v4333
      %v5358 = vunpack.c.l.b16 %v4334
      %v5359 = vunpack.c.l.b16 %v4335
      %v5360 = vunpack.c.l.b16 %v4336
      %v5361 = vunpack.c.l.b16 %v4337
      %v5362 = vunpack.c.l.b16 %v4338
      %v5363 = vunpack.c.l.b16 %v4339
      %v5364 = vunpack.c.l.b16 %v4340
      %v5365 = vunpack.c.l.b16 %v4341
      %v5366 = vunpack.c.l.b16 %v4342
      %v5367 = vunpack.c.l.b16 %v4343
      %v5368 = vunpack.c.l.b16 %v4344
      %v5369 = vunpack.c.l.b16 %v4345
      %v5370 = vunpack.c.l.b16 %v4346
      %v5371 = vunpack.c.l.b16 %v4347
      %v5372 = vunpack.c.l.b16 %v4348
      %v5373 = vunpack.c.l.b16 %v4349
      %v5374 = vunpack.c.l.b16 %v4350
      %v5375 = vunpack.c.l.b16 %v4351
      %v5376 = vunpack.c.l.b16 %v4352
      %v5377 = vunpack.c.l.b16 %v4353
      %v5378 = vunpack.c.l.b16 %v4354
      %v5379 = vunpack.c.l.b16 %v4355
      %v5380 = vunpack.c.l.b16 %v4356
      %v5381 = vunpack.c.l.b16 %v4357
      %v5382 = vunpack.c.l.b16 %v4358
      %v5383 = vunpack.c.l.b16 %v4359
      %v5384 = vunpack.c.l.b16 %v4360
      %v5385 = vunpack.c.l.b16 %v4361
      %v5386 = vunpack.c.l.b16 %v4362
      %v5387 = vunpack.c.l.b16 %v4363
      %v5388 = vunpack.c.l.b16 %v4364
      %v5389 = vunpack.c.l.b16 %v4365
      %v5390 = vunpack.c.l.b16 %v4366
      %v5391 = vunpack.c.l.b16 %v4367
      %v5392 = vunpack.c.l.b16 %v4368
      %v5393 = vunpack.c.l.b16 %v4369
      %v5394 = vunpack.c.l.b16 %v4370
      %v5395 = vunpack.c.l.b16 %v4371
      %v5396 = vunpack.c.l.b16 %v4372
      %v5397 = vunpack.c.l.b16 %v4373
      %v5398 = vunpack.c.l.b16 %v4374
      %v5399 = vunpack.c.l.b16 %v4375
      %v5400 = vunpack.c.l.b16 %v4376
      %v5401 = vunpack.c.l.b16 %v4377
      %v5402 = vunpack.c.l.b16 %v4378
      %v5403 = vunpack.c.l.b16 %v4379
      %v5404 = vunpack.c.l.b16 %v4380
      %v5405 = vunpack.c.l.b16 %v4381
      %v5406 = vunpack.c.l.b16 %v4382
      %v5407 = vunpack.c.l.b16 %v4383
      %v5408 = vunpack.c.l.b16 %v4384
      %v5409 = vunpack.c.l.b16 %v4385
      %v5410 = vpack.c.b16 %v5267, %v5266
      %v5411 = vpack.c.b16 %v5269, %v5268
      %v5412 = vpack.c.b16 %v5271, %v5270
      %v5413 = vpack.c.b16 %v5273, %v5272
      %v5414 = vpack.c.b16 %v5275, %v5274
      %v5415 = vpack.c.b16 %v5277, %v5276
      %v5416 = vpack.c.b16 %v5279, %v5278
      %v5417 = vpack.c.b16 %v5281, %v5280
      %v5418 = vpack.c.b16 %v5283, %v5282
      %v5419 = vpack.c.b16 %v5285, %v5284
      %v5420 = vpack.c.b16 %v5287, %v5286
      %v5421 = vpack.c.b16 %v5289, %v5288
      %v5422 = vpack.c.b16 %v5291, %v5290
      %v5423 = vpack.c.b16 %v5293, %v5292
      %v5424 = vpack.c.b16 %v5295, %v5294
      %v5425 = vpack.c.b16 %v5297, %v5296
      %v5426 = vpack.c.b16 %v5299, %v5298
      %v5427 = vpack.c.b16 %v5301, %v5300
      %v5428 = vpack.c.b16 %v5303, %v5302
      %v5429 = vpack.c.b16 %v5305, %v5304
      %v5430 = vpack.c.b16 %v5307, %v5306
      %v5431 = vpack.c.b16 %v5309, %v5308
      %v5432 = vpack.c.b16 %v5311, %v5310
      %v5433 = vpack.c.b16 %v5313, %v5312
      %v5434 = vpack.c.b16 %v5315, %v5314
      %v5435 = vpack.c.b16 %v5317, %v5316
      %v5436 = vpack.c.b16 %v5319, %v5318
      %v5437 = vpack.c.b16 %v5321, %v5320
      %v5438 = vpack.c.b16 %v5323, %v5322
      %v5439 = vpack.c.b16 %v5325, %v5324
      %v5440 = vpack.c.b16 %v5327, %v5326
      %v5441 = vpack.c.b16 %v5329, %v5328
      %v5442 = vpack.c.b16 %v5331, %v5330
      %v5443 = vpack.c.b16 %v5333, %v5332
      %v5444 = vpack.c.b16 %v5335, %v5334
      %v5445 = vpack.c.b16 %v5337, %v5336
      %v5446 = vpack.c.b16 %v5339, %v5338
      %v5447 = vpack.c.b16 %v5341, %v5340
      %v5448 = vpack.c.b16 %v5343, %v5342
      %v5449 = vpack.c.b16 %v5345, %v5344
      %v5450 = vpack.c.b16 %v5347, %v5346
      %v5451 = vpack.c.b16 %v5349, %v5348
      %v5452 = vpack.c.b16 %v5351, %v5350
      %v5453 = vpack.c.b16 %v5353, %v5352
      %v5454 = vpack.c.b16 %v5355, %v5354
      %v5455 = vpack.c.b16 %v5357, %v5356
      %v5456 = vpack.c.b16 %v5359, %v5358
      %v5457 = vpack.c.b16 %v5361, %v5360
      %v5458 = vpack.c.b16 %v5363, %v5362
      %v5459 = vpack.c.b16 %v5365, %v5364
      %v5460 = vpack.c.b16 %v5367, %v5366
      %v5461 = vpack.c.b16 %v5369, %v5368
      %v5462 = vpack.c.b16 %v5371, %v5370
      %v5463 = vpack.c.b16 %v5373, %v5372
      %v5464 = vpack.c.b16 %v5375, %v5374
      %v5465 = vpack.c.b16 %v5377, %v5376
      %v5466 = vpack.c.b16 %v5379, %v5378
      %v5467 = vpack.c.b16 %v5381, %v5380
      %v5468 = vpack.c.b16 %v5383, %v5382
      %v5469 = vpack.c.b16 %v5385, %v5384
      %v5470 = vpack.c.b16 %v5387, %v5386
      %v5471 = vpack.c.b16 %v5389, %v5388
      %v5472 = vpack.c.b16 %v5391, %v5390
      %v5473 = vpack.c.b16 %v5393, %v5392
      %v5474 = vpack.c.b16 %v5395, %v5394
      %v5475 = vpack.c.b16 %v5397, %v5396
      %v5476 = vpack.c.b16 %v5399, %v5398
      %v5477 = vpack.c.b16 %v5401, %v5400
      %v5478 = vpack.c.b16 %v5403, %v5402
      %v5479 = vpack.c.b16 %v5405, %v5404
      %v5480 = vpack.c.b16 %v5407, %v5406
      %v5481 = vpack.c.b16 %v5409, %v5408
      %5554 = vmatpush.bf16.msra.mxu0 %v5417
      %5555 = vmatpush.bf16.msra.mxu0 %v5416
      %5556 = vmatpush.bf16.msra.mxu0 %v5415
      %5557 = vmatpush.bf16.msra.mxu0 %v5414
      %5558 = vmatpush.bf16.msra.mxu0 %v5413
      %5559 = vmatpush.bf16.msra.mxu0 %v5412
      %5560 = vmatpush.bf16.msra.mxu0 %v5411
      %5561 = vmatpush.bf16.msra.mxu0 %v5410
      %5562 = vmatmul.bf16.gmra.mxu0 %v4834
      %v5563 = vpop.f32.mrf.mxu0
      %v5564 = vadd.f32 0.0, %v5563
      %v5565 = vpop.f32.mrf.mxu0
      %v5566 = vadd.f32 0.0, %v5565
      %5567 = vmatmul.bf16.gmra.mxu0 %v4843
      %v5568 = vpop.f32.mrf.mxu0
      %v5569 = vadd.f32 0.0, %v5568
      %v5570 = vpop.f32.mrf.mxu0
      %v5571 = vadd.f32 0.0, %v5570
      %5572 = vmatmul.bf16.gmra.mxu0 %v4852
      %v5573 = vpop.f32.mrf.mxu0
      %v5574 = vadd.f32 0.0, %v5573
      %v5575 = vpop.f32.mrf.mxu0
      %v5576 = vadd.f32 0.0, %v5575
      %5577 = vmatmul.bf16.gmra.mxu0 %v4861
      %v5578 = vpop.f32.mrf.mxu0
      %v5579 = vadd.f32 0.0, %v5578
      %v5580 = vpop.f32.mrf.mxu0
      %v5581 = vadd.f32 0.0, %v5580
      %5582 = vmatmul.bf16.gmra.mxu0 %v4870
      %v5583 = vpop.f32.mrf.mxu0
      %v5584 = vadd.f32 0.0, %v5583
      %v5585 = vpop.f32.mrf.mxu0
      %v5586 = vadd.f32 0.0, %v5585
      %5587 = vmatmul.bf16.gmra.mxu0 %v4879
      %v5588 = vpop.f32.mrf.mxu0
      %v5589 = vadd.f32 0.0, %v5588
      %v5590 = vpop.f32.mrf.mxu0
      %v5591 = vadd.f32 0.0, %v5590
      %5592 = vmatmul.bf16.gmra.mxu0 %v4888
      %v5593 = vpop.f32.mrf.mxu0
      %v5594 = vadd.f32 0.0, %v5593
      %v5595 = vpop.f32.mrf.mxu0
      %v5596 = vadd.f32 0.0, %v5595
      %5597 = vmatmul.bf16.gmra.mxu0 %v4897
      %v5598 = vpop.f32.mrf.mxu0
      %v5599 = vadd.f32 0.0, %v5598
      %v5600 = vpop.f32.mrf.mxu0
      %v5601 = vadd.f32 0.0, %v5600
      %5602 = vmatmul.bf16.gmra.mxu0 %v4906
      %v5603 = vpop.f32.mrf.mxu0
      %v5604 = vadd.f32 0.0, %v5603
      %v5605 = vpop.f32.mrf.mxu0
      %v5606 = vadd.f32 0.0, %v5605
      %5607 = vmatmul.bf16.gmra.mxu0 %v4915
      %v5608 = vpop.f32.mrf.mxu0
      %v5609 = vadd.f32 0.0, %v5608
      %v5610 = vpop.f32.mrf.mxu0
      %v5611 = vadd.f32 0.0, %v5610
      %5612 = vmatmul.bf16.gmra.mxu0 %v4924
      %v5613 = vpop.f32.mrf.mxu0
      %v5614 = vadd.f32 0.0, %v5613
      %v5615 = vpop.f32.mrf.mxu0
      %v5616 = vadd.f32 0.0, %v5615
      %5617 = vmatmul.bf16.gmra.mxu0 %v4933
      %v5618 = vpop.f32.mrf.mxu0
      %v5619 = vadd.f32 0.0, %v5618
      %v5620 = vpop.f32.mrf.mxu0
      %v5621 = vadd.f32 0.0, %v5620
      %5622 = vmatmul.bf16.gmra.mxu0 %v4942
      %v5623 = vpop.f32.mrf.mxu0
      %v5624 = vadd.f32 0.0, %v5623
      %v5625 = vpop.f32.mrf.mxu0
      %v5626 = vadd.f32 0.0, %v5625
      %5627 = vmatmul.bf16.gmra.mxu0 %v4951
      %v5628 = vpop.f32.mrf.mxu0
      %v5629 = vadd.f32 0.0, %v5628
      %v5630 = vpop.f32.mrf.mxu0
      %v5631 = vadd.f32 0.0, %v5630
      %5632 = vmatmul.bf16.gmra.mxu0 %v4960
      %v5633 = vpop.f32.mrf.mxu0
      %v5634 = vadd.f32 0.0, %v5633
      %v5635 = vpop.f32.mrf.mxu0
      %v5636 = vadd.f32 0.0, %v5635
      %5637 = vmatmul.bf16.gmra.mxu0 %v4969
      %v5638 = vpop.f32.mrf.mxu0
      %v5639 = vadd.f32 0.0, %v5638
      %v5640 = vpop.f32.mrf.mxu0
      %v5641 = vadd.f32 0.0, %v5640
      %5642 = vdwg.mxu0
      %5643 = vmatpush.bf16.msra.mxu0 %v5425
      %5644 = vmatpush.bf16.msra.mxu0 %v5424
      %5645 = vmatpush.bf16.msra.mxu0 %v5423
      %5646 = vmatpush.bf16.msra.mxu0 %v5422
      %5647 = vmatpush.bf16.msra.mxu0 %v5421
      %5648 = vmatpush.bf16.msra.mxu0 %v5420
      %5649 = vmatpush.bf16.msra.mxu0 %v5419
      %5650 = vmatpush.bf16.msra.mxu0 %v5418
      %5651 = vmatmul.bf16.gmra.mxu0 %v4835
      %v5652 = vpop.f32.mrf.mxu0
      %v5653 = vadd.f32 %v5564, %v5652
      %v5654 = vpop.f32.mrf.mxu0
      %v5655 = vadd.f32 %v5566, %v5654
      %5656 = vmatmul.bf16.gmra.mxu0 %v4844
      %v5657 = vpop.f32.mrf.mxu0
      %v5658 = vadd.f32 %v5569, %v5657
      %v5659 = vpop.f32.mrf.mxu0
      %v5660 = vadd.f32 %v5571, %v5659
      %5661 = vmatmul.bf16.gmra.mxu0 %v4853
      %v5662 = vpop.f32.mrf.mxu0
      %v5663 = vadd.f32 %v5574, %v5662
      %v5664 = vpop.f32.mrf.mxu0
      %v5665 = vadd.f32 %v5576, %v5664
      %5666 = vmatmul.bf16.gmra.mxu0 %v4862
      %v5667 = vpop.f32.mrf.mxu0
      %v5668 = vadd.f32 %v5579, %v5667
      %v5669 = vpop.f32.mrf.mxu0
      %v5670 = vadd.f32 %v5581, %v5669
      %5671 = vmatmul.bf16.gmra.mxu0 %v4871
      %v5672 = vpop.f32.mrf.mxu0
      %v5673 = vadd.f32 %v5584, %v5672
      %v5674 = vpop.f32.mrf.mxu0
      %v5675 = vadd.f32 %v5586, %v5674
      %5676 = vmatmul.bf16.gmra.mxu0 %v4880
      %v5677 = vpop.f32.mrf.mxu0
      %v5678 = vadd.f32 %v5589, %v5677
      %v5679 = vpop.f32.mrf.mxu0
      %v5680 = vadd.f32 %v5591, %v5679
      %5681 = vmatmul.bf16.gmra.mxu0 %v4889
      %v5682 = vpop.f32.mrf.mxu0
      %v5683 = vadd.f32 %v5594, %v5682
      %v5684 = vpop.f32.mrf.mxu0
      %v5685 = vadd.f32 %v5596, %v5684
      %5686 = vmatmul.bf16.gmra.mxu0 %v4898
      %v5687 = vpop.f32.mrf.mxu0
      %v5688 = vadd.f32 %v5599, %v5687
      %v5689 = vpop.f32.mrf.mxu0
      %v5690 = vadd.f32 %v5601, %v5689
      %5691 = vmatmul.bf16.gmra.mxu0 %v4907
      %v5692 = vpop.f32.mrf.mxu0
      %v5693 = vadd.f32 %v5604, %v5692
      %v5694 = vpop.f32.mrf.mxu0
      %v5695 = vadd.f32 %v5606, %v5694
      %5696 = vmatmul.bf16.gmra.mxu0 %v4916
      %v5697 = vpop.f32.mrf.mxu0
      %v5698 = vadd.f32 %v5609, %v5697
      %v5699 = vpop.f32.mrf.mxu0
      %v5700 = vadd.f32 %v5611, %v5699
      %5701 = vmatmul.bf16.gmra.mxu0 %v4925
      %v5702 = vpop.f32.mrf.mxu0
      %v5703 = vadd.f32 %v5614, %v5702
      %v5704 = vpop.f32.mrf.mxu0
      %v5705 = vadd.f32 %v5616, %v5704
      %5706 = vmatmul.bf16.gmra.mxu0 %v4934
      %v5707 = vpop.f32.mrf.mxu0
      %v5708 = vadd.f32 %v5619, %v5707
      %v5709 = vpop.f32.mrf.mxu0
      %v5710 = vadd.f32 %v5621, %v5709
      %5711 = vmatmul.bf16.gmra.mxu0 %v4943
      %v5712 = vpop.f32.mrf.mxu0
      %v5713 = vadd.f32 %v5624, %v5712
      %v5714 = vpop.f32.mrf.mxu0
      %v5715 = vadd.f32 %v5626, %v5714
      %5716 = vmatmul.bf16.gmra.mxu0 %v4952
      %v5717 = vpop.f32.mrf.mxu0
      %v5718 = vadd.f32 %v5629, %v5717
      %v5719 = vpop.f32.mrf.mxu0
      %v5720 = vadd.f32 %v5631, %v5719
      %5721 = vmatmul.bf16.gmra.mxu0 %v4961
      %v5722 = vpop.f32.mrf.mxu0
      %v5723 = vadd.f32 %v5634, %v5722
      %v5724 = vpop.f32.mrf.mxu0
      %v5725 = vadd.f32 %v5636, %v5724
      %5726 = vmatmul.bf16.gmra.mxu0 %v4970
      %v5727 = vpop.f32.mrf.mxu0
      %v5728 = vadd.f32 %v5639, %v5727
      %v5729 = vpop.f32.mrf.mxu0
      %v5730 = vadd.f32 %v5641, %v5729
      %5731 = vdwg.mxu0
      %5732 = vmatpush.bf16.msra.mxu0 %v5433
      %5733 = vmatpush.bf16.msra.mxu0 %v5432
      %5734 = vmatpush.bf16.msra.mxu0 %v5431
      %5735 = vmatpush.bf16.msra.mxu0 %v5430
      %5736 = vmatpush.bf16.msra.mxu0 %v5429
      %5737 = vmatpush.bf16.msra.mxu0 %v5428
      %5738 = vmatpush.bf16.msra.mxu0 %v5427
      %5739 = vmatpush.bf16.msra.mxu0 %v5426
      %5740 = vmatmul.bf16.gmra.mxu0 %v4836
      %v5741 = vpop.f32.mrf.mxu0
      %v5742 = vadd.f32 %v5653, %v5741
      %v5743 = vpop.f32.mrf.mxu0
      %v5744 = vadd.f32 %v5655, %v5743
      %5745 = vmatmul.bf16.gmra.mxu0 %v4845
      %v5746 = vpop.f32.mrf.mxu0
      %v5747 = vadd.f32 %v5658, %v5746
      %v5748 = vpop.f32.mrf.mxu0
      %v5749 = vadd.f32 %v5660, %v5748
      %5750 = vmatmul.bf16.gmra.mxu0 %v4854
      %v5751 = vpop.f32.mrf.mxu0
      %v5752 = vadd.f32 %v5663, %v5751
      %v5753 = vpop.f32.mrf.mxu0
      %v5754 = vadd.f32 %v5665, %v5753
      %5755 = vmatmul.bf16.gmra.mxu0 %v4863
      %v5756 = vpop.f32.mrf.mxu0
      %v5757 = vadd.f32 %v5668, %v5756
      %v5758 = vpop.f32.mrf.mxu0
      %v5759 = vadd.f32 %v5670, %v5758
      %5760 = vmatmul.bf16.gmra.mxu0 %v4872
      %v5761 = vpop.f32.mrf.mxu0
      %v5762 = vadd.f32 %v5673, %v5761
      %v5763 = vpop.f32.mrf.mxu0
      %v5764 = vadd.f32 %v5675, %v5763
      %5765 = vmatmul.bf16.gmra.mxu0 %v4881
      %v5766 = vpop.f32.mrf.mxu0
      %v5767 = vadd.f32 %v5678, %v5766
      %v5768 = vpop.f32.mrf.mxu0
      %v5769 = vadd.f32 %v5680, %v5768
      %5770 = vmatmul.bf16.gmra.mxu0 %v4890
      %v5771 = vpop.f32.mrf.mxu0
      %v5772 = vadd.f32 %v5683, %v5771
      %v5773 = vpop.f32.mrf.mxu0
      %v5774 = vadd.f32 %v5685, %v5773
      %5775 = vmatmul.bf16.gmra.mxu0 %v4899
      %v5776 = vpop.f32.mrf.mxu0
      %v5777 = vadd.f32 %v5688, %v5776
      %v5778 = vpop.f32.mrf.mxu0
      %v5779 = vadd.f32 %v5690, %v5778
      %5780 = vmatmul.bf16.gmra.mxu0 %v4908
      %v5781 = vpop.f32.mrf.mxu0
      %v5782 = vadd.f32 %v5693, %v5781
      %v5783 = vpop.f32.mrf.mxu0
      %v5784 = vadd.f32 %v5695, %v5783
      %5785 = vmatmul.bf16.gmra.mxu0 %v4917
      %v5786 = vpop.f32.mrf.mxu0
      %v5787 = vadd.f32 %v5698, %v5786
      %v5788 = vpop.f32.mrf.mxu0
      %v5789 = vadd.f32 %v5700, %v5788
      %5790 = vmatmul.bf16.gmra.mxu0 %v4926
      %v5791 = vpop.f32.mrf.mxu0
      %v5792 = vadd.f32 %v5703, %v5791
      %v5793 = vpop.f32.mrf.mxu0
      %v5794 = vadd.f32 %v5705, %v5793
      %5795 = vmatmul.bf16.gmra.mxu0 %v4935
      %v5796 = vpop.f32.mrf.mxu0
      %v5797 = vadd.f32 %v5708, %v5796
      %v5798 = vpop.f32.mrf.mxu0
      %v5799 = vadd.f32 %v5710, %v5798
      %5800 = vmatmul.bf16.gmra.mxu0 %v4944
      %v5801 = vpop.f32.mrf.mxu0
      %v5802 = vadd.f32 %v5713, %v5801
      %v5803 = vpop.f32.mrf.mxu0
      %v5804 = vadd.f32 %v5715, %v5803
      %5805 = vmatmul.bf16.gmra.mxu0 %v4953
      %v5806 = vpop.f32.mrf.mxu0
      %v5807 = vadd.f32 %v5718, %v5806
      %v5808 = vpop.f32.mrf.mxu0
      %v5809 = vadd.f32 %v5720, %v5808
      %5810 = vmatmul.bf16.gmra.mxu0 %v4962
      %v5811 = vpop.f32.mrf.mxu0
      %v5812 = vadd.f32 %v5723, %v5811
      %v5813 = vpop.f32.mrf.mxu0
      %v5814 = vadd.f32 %v5725, %v5813
      %5815 = vmatmul.bf16.gmra.mxu0 %v4971
      %v5816 = vpop.f32.mrf.mxu0
      %v5817 = vadd.f32 %v5728, %v5816
      %v5818 = vpop.f32.mrf.mxu0
      %v5819 = vadd.f32 %v5730, %v5818
      %5820 = vdwg.mxu0
      %5821 = vmatpush.bf16.msra.mxu0 %v5441
      %5822 = vmatpush.bf16.msra.mxu0 %v5440
      %5823 = vmatpush.bf16.msra.mxu0 %v5439
      %5824 = vmatpush.bf16.msra.mxu0 %v5438
      %5825 = vmatpush.bf16.msra.mxu0 %v5437
      %5826 = vmatpush.bf16.msra.mxu0 %v5436
      %5827 = vmatpush.bf16.msra.mxu0 %v5435
      %5828 = vmatpush.bf16.msra.mxu0 %v5434
      %5829 = vmatmul.bf16.gmra.mxu0 %v4837
      %v5830 = vpop.f32.mrf.mxu0
      %v5831 = vadd.f32 %v5742, %v5830
      %v5832 = vpop.f32.mrf.mxu0
      %v5833 = vadd.f32 %v5744, %v5832
      %5834 = vmatmul.bf16.gmra.mxu0 %v4846
      %v5835 = vpop.f32.mrf.mxu0
      %v5836 = vadd.f32 %v5747, %v5835
      %v5837 = vpop.f32.mrf.mxu0
      %v5838 = vadd.f32 %v5749, %v5837
      %5839 = vmatmul.bf16.gmra.mxu0 %v4855
      %v5840 = vpop.f32.mrf.mxu0
      %v5841 = vadd.f32 %v5752, %v5840
      %v5842 = vpop.f32.mrf.mxu0
      %v5843 = vadd.f32 %v5754, %v5842
      %5844 = vmatmul.bf16.gmra.mxu0 %v4864
      %v5845 = vpop.f32.mrf.mxu0
      %v5846 = vadd.f32 %v5757, %v5845
      %v5847 = vpop.f32.mrf.mxu0
      %v5848 = vadd.f32 %v5759, %v5847
      %5849 = vmatmul.bf16.gmra.mxu0 %v4873
      %v5850 = vpop.f32.mrf.mxu0
      %v5851 = vadd.f32 %v5762, %v5850
      %v5852 = vpop.f32.mrf.mxu0
      %v5853 = vadd.f32 %v5764, %v5852
      %5854 = vmatmul.bf16.gmra.mxu0 %v4882
      %v5855 = vpop.f32.mrf.mxu0
      %v5856 = vadd.f32 %v5767, %v5855
      %v5857 = vpop.f32.mrf.mxu0
      %v5858 = vadd.f32 %v5769, %v5857
      %5859 = vmatmul.bf16.gmra.mxu0 %v4891
      %v5860 = vpop.f32.mrf.mxu0
      %v5861 = vadd.f32 %v5772, %v5860
      %v5862 = vpop.f32.mrf.mxu0
      %v5863 = vadd.f32 %v5774, %v5862
      %5864 = vmatmul.bf16.gmra.mxu0 %v4900
      %v5865 = vpop.f32.mrf.mxu0
      %v5866 = vadd.f32 %v5777, %v5865
      %v5867 = vpop.f32.mrf.mxu0
      %v5868 = vadd.f32 %v5779, %v5867
      %5869 = vmatmul.bf16.gmra.mxu0 %v4909
      %v5870 = vpop.f32.mrf.mxu0
      %v5871 = vadd.f32 %v5782, %v5870
      %v5872 = vpop.f32.mrf.mxu0
      %v5873 = vadd.f32 %v5784, %v5872
      %5874 = vmatmul.bf16.gmra.mxu0 %v4918
      %v5875 = vpop.f32.mrf.mxu0
      %v5876 = vadd.f32 %v5787, %v5875
      %v5877 = vpop.f32.mrf.mxu0
      %v5878 = vadd.f32 %v5789, %v5877
      %5879 = vmatmul.bf16.gmra.mxu0 %v4927
      %v5880 = vpop.f32.mrf.mxu0
      %v5881 = vadd.f32 %v5792, %v5880
      %v5882 = vpop.f32.mrf.mxu0
      %v5883 = vadd.f32 %v5794, %v5882
      %5884 = vmatmul.bf16.gmra.mxu0 %v4936
      %v5885 = vpop.f32.mrf.mxu0
      %v5886 = vadd.f32 %v5797, %v5885
      %v5887 = vpop.f32.mrf.mxu0
      %v5888 = vadd.f32 %v5799, %v5887
      %5889 = vmatmul.bf16.gmra.mxu0 %v4945
      %v5890 = vpop.f32.mrf.mxu0
      %v5891 = vadd.f32 %v5802, %v5890
      %v5892 = vpop.f32.mrf.mxu0
      %v5893 = vadd.f32 %v5804, %v5892
      %5894 = vmatmul.bf16.gmra.mxu0 %v4954
      %v5895 = vpop.f32.mrf.mxu0
      %v5896 = vadd.f32 %v5807, %v5895
      %v5897 = vpop.f32.mrf.mxu0
      %v5898 = vadd.f32 %v5809, %v5897
      %5899 = vmatmul.bf16.gmra.mxu0 %v4963
      %v5900 = vpop.f32.mrf.mxu0
      %v5901 = vadd.f32 %v5812, %v5900
      %v5902 = vpop.f32.mrf.mxu0
      %v5903 = vadd.f32 %v5814, %v5902
      %5904 = vmatmul.bf16.gmra.mxu0 %v4972
      %v5905 = vpop.f32.mrf.mxu0
      %v5906 = vadd.f32 %v5817, %v5905
      %v5907 = vpop.f32.mrf.mxu0
      %v5908 = vadd.f32 %v5819, %v5907
      %5909 = vdwg.mxu0
      %5910 = vmatpush.bf16.msra.mxu0 %v5449
      %5911 = vmatpush.bf16.msra.mxu0 %v5448
      %5912 = vmatpush.bf16.msra.mxu0 %v5447
      %5913 = vmatpush.bf16.msra.mxu0 %v5446
      %5914 = vmatpush.bf16.msra.mxu0 %v5445
      %5915 = vmatpush.bf16.msra.mxu0 %v5444
      %5916 = vmatpush.bf16.msra.mxu0 %v5443
      %5917 = vmatpush.bf16.msra.mxu0 %v5442
      %5918 = vmatmul.bf16.gmra.mxu0 %v4838
      %v5919 = vpop.f32.mrf.mxu0
      %v5920 = vadd.f32 %v5831, %v5919
      %v5921 = vpop.f32.mrf.mxu0
      %v5922 = vadd.f32 %v5833, %v5921
      %5923 = vmatmul.bf16.gmra.mxu0 %v4847
      %v5924 = vpop.f32.mrf.mxu0
      %v5925 = vadd.f32 %v5836, %v5924
      %v5926 = vpop.f32.mrf.mxu0
      %v5927 = vadd.f32 %v5838, %v5926
      %5928 = vmatmul.bf16.gmra.mxu0 %v4856
      %v5929 = vpop.f32.mrf.mxu0
      %v5930 = vadd.f32 %v5841, %v5929
      %v5931 = vpop.f32.mrf.mxu0
      %v5932 = vadd.f32 %v5843, %v5931
      %5933 = vmatmul.bf16.gmra.mxu0 %v4865
      %v5934 = vpop.f32.mrf.mxu0
      %v5935 = vadd.f32 %v5846, %v5934
      %v5936 = vpop.f32.mrf.mxu0
      %v5937 = vadd.f32 %v5848, %v5936
      %5938 = vmatmul.bf16.gmra.mxu0 %v4874
      %v5939 = vpop.f32.mrf.mxu0
      %v5940 = vadd.f32 %v5851, %v5939
      %v5941 = vpop.f32.mrf.mxu0
      %v5942 = vadd.f32 %v5853, %v5941
      %5943 = vmatmul.bf16.gmra.mxu0 %v4883
      %v5944 = vpop.f32.mrf.mxu0
      %v5945 = vadd.f32 %v5856, %v5944
      %v5946 = vpop.f32.mrf.mxu0
      %v5947 = vadd.f32 %v5858, %v5946
      %5948 = vmatmul.bf16.gmra.mxu0 %v4892
      %v5949 = vpop.f32.mrf.mxu0
      %v5950 = vadd.f32 %v5861, %v5949
      %v5951 = vpop.f32.mrf.mxu0
      %v5952 = vadd.f32 %v5863, %v5951
      %5953 = vmatmul.bf16.gmra.mxu0 %v4901
      %v5954 = vpop.f32.mrf.mxu0
      %v5955 = vadd.f32 %v5866, %v5954
      %v5956 = vpop.f32.mrf.mxu0
      %v5957 = vadd.f32 %v5868, %v5956
      %5958 = vmatmul.bf16.gmra.mxu0 %v4910
      %v5959 = vpop.f32.mrf.mxu0
      %v5960 = vadd.f32 %v5871, %v5959
      %v5961 = vpop.f32.mrf.mxu0
      %v5962 = vadd.f32 %v5873, %v5961
      %5963 = vmatmul.bf16.gmra.mxu0 %v4919
      %v5964 = vpop.f32.mrf.mxu0
      %v5965 = vadd.f32 %v5876, %v5964
      %v5966 = vpop.f32.mrf.mxu0
      %v5967 = vadd.f32 %v5878, %v5966
      %5968 = vmatmul.bf16.gmra.mxu0 %v4928
      %v5969 = vpop.f32.mrf.mxu0
      %v5970 = vadd.f32 %v5881, %v5969
      %v5971 = vpop.f32.mrf.mxu0
      %v5972 = vadd.f32 %v5883, %v5971
      %5973 = vmatmul.bf16.gmra.mxu0 %v4937
      %v5974 = vpop.f32.mrf.mxu0
      %v5975 = vadd.f32 %v5886, %v5974
      %v5976 = vpop.f32.mrf.mxu0
      %v5977 = vadd.f32 %v5888, %v5976
      %5978 = vmatmul.bf16.gmra.mxu0 %v4946
      %v5979 = vpop.f32.mrf.mxu0
      %v5980 = vadd.f32 %v5891, %v5979
      %v5981 = vpop.f32.mrf.mxu0
      %v5982 = vadd.f32 %v5893, %v5981
      %5983 = vmatmul.bf16.gmra.mxu0 %v4955
      %v5984 = vpop.f32.mrf.mxu0
      %v5985 = vadd.f32 %v5896, %v5984
      %v5986 = vpop.f32.mrf.mxu0
      %v5987 = vadd.f32 %v5898, %v5986
      %5988 = vmatmul.bf16.gmra.mxu0 %v4964
      %v5989 = vpop.f32.mrf.mxu0
      %v5990 = vadd.f32 %v5901, %v5989
      %v5991 = vpop.f32.mrf.mxu0
      %v5992 = vadd.f32 %v5903, %v5991
      %5993 = vmatmul.bf16.gmra.mxu0 %v4973
      %v5994 = vpop.f32.mrf.mxu0
      %v5995 = vadd.f32 %v5906, %v5994
      %v5996 = vpop.f32.mrf.mxu0
      %v5997 = vadd.f32 %v5908, %v5996
      %5998 = vdwg.mxu0
      %5999 = vmatpush.bf16.msra.mxu0 %v5457
      %6000 = vmatpush.bf16.msra.mxu0 %v5456
      %6001 = vmatpush.bf16.msra.mxu0 %v5455
      %6002 = vmatpush.bf16.msra.mxu0 %v5454
      %6003 = vmatpush.bf16.msra.mxu0 %v5453
      %6004 = vmatpush.bf16.msra.mxu0 %v5452
      %6005 = vmatpush.bf16.msra.mxu0 %v5451
      %6006 = vmatpush.bf16.msra.mxu0 %v5450
      %6007 = vmatmul.bf16.gmra.mxu0 %v4839
      %v6008 = vpop.f32.mrf.mxu0
      %v6009 = vadd.f32 %v5920, %v6008
      %v6010 = vpop.f32.mrf.mxu0
      %v6011 = vadd.f32 %v5922, %v6010
      %6012 = vmatmul.bf16.gmra.mxu0 %v4848
      %v6013 = vpop.f32.mrf.mxu0
      %v6014 = vadd.f32 %v5925, %v6013
      %v6015 = vpop.f32.mrf.mxu0
      %v6016 = vadd.f32 %v5927, %v6015
      %6017 = vmatmul.bf16.gmra.mxu0 %v4857
      %v6018 = vpop.f32.mrf.mxu0
      %v6019 = vadd.f32 %v5930, %v6018
      %v6020 = vpop.f32.mrf.mxu0
      %v6021 = vadd.f32 %v5932, %v6020
      %6022 = vmatmul.bf16.gmra.mxu0 %v4866
      %v6023 = vpop.f32.mrf.mxu0
      %v6024 = vadd.f32 %v5935, %v6023
      %v6025 = vpop.f32.mrf.mxu0
      %v6026 = vadd.f32 %v5937, %v6025
      %6027 = vmatmul.bf16.gmra.mxu0 %v4875
      %v6028 = vpop.f32.mrf.mxu0
      %v6029 = vadd.f32 %v5940, %v6028
      %v6030 = vpop.f32.mrf.mxu0
      %v6031 = vadd.f32 %v5942, %v6030
      %6032 = vmatmul.bf16.gmra.mxu0 %v4884
      %v6033 = vpop.f32.mrf.mxu0
      %v6034 = vadd.f32 %v5945, %v6033
      %v6035 = vpop.f32.mrf.mxu0
      %v6036 = vadd.f32 %v5947, %v6035
      %6037 = vmatmul.bf16.gmra.mxu0 %v4893
      %v6038 = vpop.f32.mrf.mxu0
      %v6039 = vadd.f32 %v5950, %v6038
      %v6040 = vpop.f32.mrf.mxu0
      %v6041 = vadd.f32 %v5952, %v6040
      %6042 = vmatmul.bf16.gmra.mxu0 %v4902
      %v6043 = vpop.f32.mrf.mxu0
      %v6044 = vadd.f32 %v5955, %v6043
      %v6045 = vpop.f32.mrf.mxu0
      %v6046 = vadd.f32 %v5957, %v6045
      %6047 = vmatmul.bf16.gmra.mxu0 %v4911
      %v6048 = vpop.f32.mrf.mxu0
      %v6049 = vadd.f32 %v5960, %v6048
      %v6050 = vpop.f32.mrf.mxu0
      %v6051 = vadd.f32 %v5962, %v6050
      %6052 = vmatmul.bf16.gmra.mxu0 %v4920
      %v6053 = vpop.f32.mrf.mxu0
      %v6054 = vadd.f32 %v5965, %v6053
      %v6055 = vpop.f32.mrf.mxu0
      %v6056 = vadd.f32 %v5967, %v6055
      %6057 = vmatmul.bf16.gmra.mxu0 %v4929
      %v6058 = vpop.f32.mrf.mxu0
      %v6059 = vadd.f32 %v5970, %v6058
      %v6060 = vpop.f32.mrf.mxu0
      %v6061 = vadd.f32 %v5972, %v6060
      %6062 = vmatmul.bf16.gmra.mxu0 %v4938
      %v6063 = vpop.f32.mrf.mxu0
      %v6064 = vadd.f32 %v5975, %v6063
      %v6065 = vpop.f32.mrf.mxu0
      %v6066 = vadd.f32 %v5977, %v6065
      %6067 = vmatmul.bf16.gmra.mxu0 %v4947
      %v6068 = vpop.f32.mrf.mxu0
      %v6069 = vadd.f32 %v5980, %v6068
      %v6070 = vpop.f32.mrf.mxu0
      %v6071 = vadd.f32 %v5982, %v6070
      %6072 = vmatmul.bf16.gmra.mxu0 %v4956
      %v6073 = vpop.f32.mrf.mxu0
      %v6074 = vadd.f32 %v5985, %v6073
      %v6075 = vpop.f32.mrf.mxu0
      %v6076 = vadd.f32 %v5987, %v6075
      %6077 = vmatmul.bf16.gmra.mxu0 %v4965
      %v6078 = vpop.f32.mrf.mxu0
      %v6079 = vadd.f32 %v5990, %v6078
      %v6080 = vpop.f32.mrf.mxu0
      %v6081 = vadd.f32 %v5992, %v6080
      %6082 = vmatmul.bf16.gmra.mxu0 %v4974
      %v6083 = vpop.f32.mrf.mxu0
      %v6084 = vadd.f32 %v5995, %v6083
      %v6085 = vpop.f32.mrf.mxu0
      %v6086 = vadd.f32 %v5997, %v6085
      %6087 = vdwg.mxu0
      %6088 = vmatpush.bf16.msra.mxu0 %v5465
      %6089 = vmatpush.bf16.msra.mxu0 %v5464
      %6090 = vmatpush.bf16.msra.mxu0 %v5463
      %6091 = vmatpush.bf16.msra.mxu0 %v5462
      %6092 = vmatpush.bf16.msra.mxu0 %v5461
      %6093 = vmatpush.bf16.msra.mxu0 %v5460
      %6094 = vmatpush.bf16.msra.mxu0 %v5459
      %6095 = vmatpush.bf16.msra.mxu0 %v5458
      %6096 = vmatmul.bf16.gmra.mxu0 %v4840
      %v6097 = vpop.f32.mrf.mxu0
      %v6098 = vadd.f32 %v6009, %v6097
      %v6099 = vpop.f32.mrf.mxu0
      %v6100 = vadd.f32 %v6011, %v6099
      %6101 = vmatmul.bf16.gmra.mxu0 %v4849
      %v6102 = vpop.f32.mrf.mxu0
      %v6103 = vadd.f32 %v6014, %v6102
      %v6104 = vpop.f32.mrf.mxu0
      %v6105 = vadd.f32 %v6016, %v6104
      %6106 = vmatmul.bf16.gmra.mxu0 %v4858
      %v6107 = vpop.f32.mrf.mxu0
      %v6108 = vadd.f32 %v6019, %v6107
      %v6109 = vpop.f32.mrf.mxu0
      %v6110 = vadd.f32 %v6021, %v6109
      %6111 = vmatmul.bf16.gmra.mxu0 %v4867
      %v6112 = vpop.f32.mrf.mxu0
      %v6113 = vadd.f32 %v6024, %v6112
      %v6114 = vpop.f32.mrf.mxu0
      %v6115 = vadd.f32 %v6026, %v6114
      %6116 = vmatmul.bf16.gmra.mxu0 %v4876
      %v6117 = vpop.f32.mrf.mxu0
      %v6118 = vadd.f32 %v6029, %v6117
      %v6119 = vpop.f32.mrf.mxu0
      %v6120 = vadd.f32 %v6031, %v6119
      %6121 = vmatmul.bf16.gmra.mxu0 %v4885
      %v6122 = vpop.f32.mrf.mxu0
      %v6123 = vadd.f32 %v6034, %v6122
      %v6124 = vpop.f32.mrf.mxu0
      %v6125 = vadd.f32 %v6036, %v6124
      %6126 = vmatmul.bf16.gmra.mxu0 %v4894
      %v6127 = vpop.f32.mrf.mxu0
      %v6128 = vadd.f32 %v6039, %v6127
      %v6129 = vpop.f32.mrf.mxu0
      %v6130 = vadd.f32 %v6041, %v6129
      %6131 = vmatmul.bf16.gmra.mxu0 %v4903
      %v6132 = vpop.f32.mrf.mxu0
      %v6133 = vadd.f32 %v6044, %v6132
      %v6134 = vpop.f32.mrf.mxu0
      %v6135 = vadd.f32 %v6046, %v6134
      %6136 = vmatmul.bf16.gmra.mxu0 %v4912
      %v6137 = vpop.f32.mrf.mxu0
      %v6138 = vadd.f32 %v6049, %v6137
      %v6139 = vpop.f32.mrf.mxu0
      %v6140 = vadd.f32 %v6051, %v6139
      %6141 = vmatmul.bf16.gmra.mxu0 %v4921
      %v6142 = vpop.f32.mrf.mxu0
      %v6143 = vadd.f32 %v6054, %v6142
      %v6144 = vpop.f32.mrf.mxu0
      %v6145 = vadd.f32 %v6056, %v6144
      %6146 = vmatmul.bf16.gmra.mxu0 %v4930
      %v6147 = vpop.f32.mrf.mxu0
      %v6148 = vadd.f32 %v6059, %v6147
      %v6149 = vpop.f32.mrf.mxu0
      %v6150 = vadd.f32 %v6061, %v6149
      %6151 = vmatmul.bf16.gmra.mxu0 %v4939
      %v6152 = vpop.f32.mrf.mxu0
      %v6153 = vadd.f32 %v6064, %v6152
      %v6154 = vpop.f32.mrf.mxu0
      %v6155 = vadd.f32 %v6066, %v6154
      %6156 = vmatmul.bf16.gmra.mxu0 %v4948
      %v6157 = vpop.f32.mrf.mxu0
      %v6158 = vadd.f32 %v6069, %v6157
      %v6159 = vpop.f32.mrf.mxu0
      %v6160 = vadd.f32 %v6071, %v6159
      %6161 = vmatmul.bf16.gmra.mxu0 %v4957
      %v6162 = vpop.f32.mrf.mxu0
      %v6163 = vadd.f32 %v6074, %v6162
      %v6164 = vpop.f32.mrf.mxu0
      %v6165 = vadd.f32 %v6076, %v6164
      %6166 = vmatmul.bf16.gmra.mxu0 %v4966
      %v6167 = vpop.f32.mrf.mxu0
      %v6168 = vadd.f32 %v6079, %v6167
      %v6169 = vpop.f32.mrf.mxu0
      %v6170 = vadd.f32 %v6081, %v6169
      %6171 = vmatmul.bf16.gmra.mxu0 %v4975
      %v6172 = vpop.f32.mrf.mxu0
      %v6173 = vadd.f32 %v6084, %v6172
      %v6174 = vpop.f32.mrf.mxu0
      %v6175 = vadd.f32 %v6086, %v6174
      %6176 = vdwg.mxu0
      %6177 = vmatpush.bf16.msra.mxu0 %v5473
      %6178 = vmatpush.bf16.msra.mxu0 %v5472
      %6179 = vmatpush.bf16.msra.mxu0 %v5471
      %6180 = vmatpush.bf16.msra.mxu0 %v5470
      %6181 = vmatpush.bf16.msra.mxu0 %v5469
      %6182 = vmatpush.bf16.msra.mxu0 %v5468
      %6183 = vmatpush.bf16.msra.mxu0 %v5467
      %6184 = vmatpush.bf16.msra.mxu0 %v5466
      %6185 = vmatmul.bf16.gmra.mxu0 %v4841
      %v6186 = vpop.f32.mrf.mxu0
      %v6187 = vadd.f32 %v6098, %v6186
      %v6188 = vpop.f32.mrf.mxu0
      %v6189 = vadd.f32 %v6100, %v6188
      %6190 = vmatmul.bf16.gmra.mxu0 %v4850
      %v6191 = vpop.f32.mrf.mxu0
      %v6192 = vadd.f32 %v6103, %v6191
      %v6193 = vpop.f32.mrf.mxu0
      %v6194 = vadd.f32 %v6105, %v6193
      %6195 = vmatmul.bf16.gmra.mxu0 %v4859
      %v6196 = vpop.f32.mrf.mxu0
      %v6197 = vadd.f32 %v6108, %v6196
      %v6198 = vpop.f32.mrf.mxu0
      %v6199 = vadd.f32 %v6110, %v6198
      %6200 = vmatmul.bf16.gmra.mxu0 %v4868
      %v6201 = vpop.f32.mrf.mxu0
      %v6202 = vadd.f32 %v6113, %v6201
      %v6203 = vpop.f32.mrf.mxu0
      %v6204 = vadd.f32 %v6115, %v6203
      %6205 = vmatmul.bf16.gmra.mxu0 %v4877
      %v6206 = vpop.f32.mrf.mxu0
      %v6207 = vadd.f32 %v6118, %v6206
      %v6208 = vpop.f32.mrf.mxu0
      %v6209 = vadd.f32 %v6120, %v6208
      %6210 = vmatmul.bf16.gmra.mxu0 %v4886
      %v6211 = vpop.f32.mrf.mxu0
      %v6212 = vadd.f32 %v6123, %v6211
      %v6213 = vpop.f32.mrf.mxu0
      %v6214 = vadd.f32 %v6125, %v6213
      %6215 = vmatmul.bf16.gmra.mxu0 %v4895
      %v6216 = vpop.f32.mrf.mxu0
      %v6217 = vadd.f32 %v6128, %v6216
      %v6218 = vpop.f32.mrf.mxu0
      %v6219 = vadd.f32 %v6130, %v6218
      %6220 = vmatmul.bf16.gmra.mxu0 %v4904
      %v6221 = vpop.f32.mrf.mxu0
      %v6222 = vadd.f32 %v6133, %v6221
      %v6223 = vpop.f32.mrf.mxu0
      %v6224 = vadd.f32 %v6135, %v6223
      %6225 = vmatmul.bf16.gmra.mxu0 %v4913
      %v6226 = vpop.f32.mrf.mxu0
      %v6227 = vadd.f32 %v6138, %v6226
      %v6228 = vpop.f32.mrf.mxu0
      %v6229 = vadd.f32 %v6140, %v6228
      %6230 = vmatmul.bf16.gmra.mxu0 %v4922
      %v6231 = vpop.f32.mrf.mxu0
      %v6232 = vadd.f32 %v6143, %v6231
      %v6233 = vpop.f32.mrf.mxu0
      %v6234 = vadd.f32 %v6145, %v6233
      %6235 = vmatmul.bf16.gmra.mxu0 %v4931
      %v6236 = vpop.f32.mrf.mxu0
      %v6237 = vadd.f32 %v6148, %v6236
      %v6238 = vpop.f32.mrf.mxu0
      %v6239 = vadd.f32 %v6150, %v6238
      %6240 = vmatmul.bf16.gmra.mxu0 %v4940
      %v6241 = vpop.f32.mrf.mxu0
      %v6242 = vadd.f32 %v6153, %v6241
      %v6243 = vpop.f32.mrf.mxu0
      %v6244 = vadd.f32 %v6155, %v6243
      %6245 = vmatmul.bf16.gmra.mxu0 %v4949
      %v6246 = vpop.f32.mrf.mxu0
      %v6247 = vadd.f32 %v6158, %v6246
      %v6248 = vpop.f32.mrf.mxu0
      %v6249 = vadd.f32 %v6160, %v6248
      %6250 = vmatmul.bf16.gmra.mxu0 %v4958
      %v6251 = vpop.f32.mrf.mxu0
      %v6252 = vadd.f32 %v6163, %v6251
      %v6253 = vpop.f32.mrf.mxu0
      %v6254 = vadd.f32 %v6165, %v6253
      %6255 = vmatmul.bf16.gmra.mxu0 %v4967
      %v6256 = vpop.f32.mrf.mxu0
      %v6257 = vadd.f32 %v6168, %v6256
      %v6258 = vpop.f32.mrf.mxu0
      %v6259 = vadd.f32 %v6170, %v6258
      %6260 = vmatmul.bf16.gmra.mxu0 %v4976
      %v6261 = vpop.f32.mrf.mxu0
      %v6262 = vadd.f32 %v6173, %v6261
      %v6263 = vpop.f32.mrf.mxu0
      %v6264 = vadd.f32 %v6175, %v6263
      %6265 = vdwg.mxu0
      %6266 = vmatpush.bf16.msra.mxu0 %v5481
      %6267 = vmatpush.bf16.msra.mxu0 %v5480
      %6268 = vmatpush.bf16.msra.mxu0 %v5479
      %6269 = vmatpush.bf16.msra.mxu0 %v5478
      %6270 = vmatpush.bf16.msra.mxu0 %v5477
      %6271 = vmatpush.bf16.msra.mxu0 %v5476
      %6272 = vmatpush.bf16.msra.mxu0 %v5475
      %6273 = vmatpush.bf16.msra.mxu0 %v5474
      %6274 = vmatmul.bf16.gmra.mxu0 %v4842
      %v6275 = vpop.f32.mrf.mxu0
      %v6276 = vadd.f32 %v6187, %v6275
      %v6277 = vpop.f32.mrf.mxu0
      %v6278 = vadd.f32 %v6189, %v6277
      %6279 = vmatmul.bf16.gmra.mxu0 %v4851
      %v6280 = vpop.f32.mrf.mxu0
      %v6281 = vadd.f32 %v6192, %v6280
      %v6282 = vpop.f32.mrf.mxu0
      %v6283 = vadd.f32 %v6194, %v6282
      %6284 = vmatmul.bf16.gmra.mxu0 %v4860
      %v6285 = vpop.f32.mrf.mxu0
      %v6286 = vadd.f32 %v6197, %v6285
      %v6287 = vpop.f32.mrf.mxu0
      %v6288 = vadd.f32 %v6199, %v6287
      %6289 = vmatmul.bf16.gmra.mxu0 %v4869
      %v6290 = vpop.f32.mrf.mxu0
      %v6291 = vadd.f32 %v6202, %v6290
      %v6292 = vpop.f32.mrf.mxu0
      %v6293 = vadd.f32 %v6204, %v6292
      %6294 = vmatmul.bf16.gmra.mxu0 %v4878
      %v6295 = vpop.f32.mrf.mxu0
      %v6296 = vadd.f32 %v6207, %v6295
      %v6297 = vpop.f32.mrf.mxu0
      %v6298 = vadd.f32 %v6209, %v6297
      %6299 = vmatmul.bf16.gmra.mxu0 %v4887
      %v6300 = vpop.f32.mrf.mxu0
      %v6301 = vadd.f32 %v6212, %v6300
      %v6302 = vpop.f32.mrf.mxu0
      %v6303 = vadd.f32 %v6214, %v6302
      %6304 = vmatmul.bf16.gmra.mxu0 %v4896
      %v6305 = vpop.f32.mrf.mxu0
      %v6306 = vadd.f32 %v6217, %v6305
      %v6307 = vpop.f32.mrf.mxu0
      %v6308 = vadd.f32 %v6219, %v6307
      %6309 = vmatmul.bf16.gmra.mxu0 %v4905
      %v6310 = vpop.f32.mrf.mxu0
      %v6311 = vadd.f32 %v6222, %v6310
      %v6312 = vpop.f32.mrf.mxu0
      %v6313 = vadd.f32 %v6224, %v6312
      %6314 = vmatmul.bf16.gmra.mxu0 %v4914
      %v6315 = vpop.f32.mrf.mxu0
      %v6316 = vadd.f32 %v6227, %v6315
      %v6317 = vpop.f32.mrf.mxu0
      %v6318 = vadd.f32 %v6229, %v6317
      %6319 = vmatmul.bf16.gmra.mxu0 %v4923
      %v6320 = vpop.f32.mrf.mxu0
      %v6321 = vadd.f32 %v6232, %v6320
      %v6322 = vpop.f32.mrf.mxu0
      %v6323 = vadd.f32 %v6234, %v6322
      %6324 = vmatmul.bf16.gmra.mxu0 %v4932
      %v6325 = vpop.f32.mrf.mxu0
      %v6326 = vadd.f32 %v6237, %v6325
      %v6327 = vpop.f32.mrf.mxu0
      %v6328 = vadd.f32 %v6239, %v6327
      %6329 = vmatmul.bf16.gmra.mxu0 %v4941
      %v6330 = vpop.f32.mrf.mxu0
      %v6331 = vadd.f32 %v6242, %v6330
      %v6332 = vpop.f32.mrf.mxu0
      %v6333 = vadd.f32 %v6244, %v6332
      %6334 = vmatmul.bf16.gmra.mxu0 %v4950
      %v6335 = vpop.f32.mrf.mxu0
      %v6336 = vadd.f32 %v6247, %v6335
      %v6337 = vpop.f32.mrf.mxu0
      %v6338 = vadd.f32 %v6249, %v6337
      %6339 = vmatmul.bf16.gmra.mxu0 %v4959
      %v6340 = vpop.f32.mrf.mxu0
      %v6341 = vadd.f32 %v6252, %v6340
      %v6342 = vpop.f32.mrf.mxu0
      %v6343 = vadd.f32 %v6254, %v6342
      %6344 = vmatmul.bf16.gmra.mxu0 %v4968
      %v6345 = vpop.f32.mrf.mxu0
      %v6346 = vadd.f32 %v6257, %v6345
      %v6347 = vpop.f32.mrf.mxu0
      %v6348 = vadd.f32 %v6259, %v6347
      %6349 = vmatmul.bf16.gmra.mxu0 %v4977
      %v6350 = vpop.f32.mrf.mxu0
      %v6351 = vadd.f32 %v6262, %v6350
      %v6352 = vpop.f32.mrf.mxu0
      %v6353 = vadd.f32 %v6264, %v6352
      %6354 = vdwg.mxu0
      %v6355 = vld [vmem:[%s5] sm:$0x1]
      %v6357 = vperm.slane %v6355, 0
      %v6359 = vmul.f32 %v6276, %v6357
      %v6360 = vmul.f32 %v6278, %v6357
      %v6361 = vmul.f32 %v6281, %v6357
      %v6362 = vmul.f32 %v6283, %v6357
      %v6363 = vmul.f32 %v6286, %v6357
      %v6364 = vmul.f32 %v6288, %v6357
      %v6365 = vmul.f32 %v6291, %v6357
      %v6366 = vmul.f32 %v6293, %v6357
      %v6367 = vmul.f32 %v6296, %v6357
      %v6368 = vmul.f32 %v6298, %v6357
      %v6369 = vmul.f32 %v6301, %v6357
      %v6370 = vmul.f32 %v6303, %v6357
      %v6371 = vmul.f32 %v6306, %v6357
      %v6372 = vmul.f32 %v6308, %v6357
      %v6373 = vmul.f32 %v6311, %v6357
      %v6374 = vmul.f32 %v6313, %v6357
      %v6375 = vmul.f32 %v6316, %v6357
      %v6376 = vmul.f32 %v6318, %v6357
      %v6377 = vmul.f32 %v6321, %v6357
      %v6378 = vmul.f32 %v6323, %v6357
      %v6379 = vmul.f32 %v6326, %v6357
      %v6380 = vmul.f32 %v6328, %v6357
      %v6381 = vmul.f32 %v6331, %v6357
      %v6382 = vmul.f32 %v6333, %v6357
      %v6383 = vmul.f32 %v6336, %v6357
      %v6384 = vmul.f32 %v6338, %v6357
      %v6385 = vmul.f32 %v6341, %v6357
      %v6386 = vmul.f32 %v6343, %v6357
      %v6387 = vmul.f32 %v6346, %v6357
      %v6388 = vmul.f32 %v6348, %v6357
      %v6389 = vmul.f32 %v6351, %v6357
      %v6390 = vmul.f32 %v6353, %v6357
      %v6391 = vld [vmem:[%s6] sm:$0x1]
      %v6393 = vperm.slane %v6391, 0
      %v6395 = vadd.f32 %v6359, %v6393
      %v6396 = vadd.f32 %v6360, %v6393
      %v6397 = vadd.f32 %v6361, %v6393
      %v6398 = vadd.f32 %v6362, %v6393
      %v6399 = vadd.f32 %v6363, %v6393
      %v6400 = vadd.f32 %v6364, %v6393
      %v6401 = vadd.f32 %v6365, %v6393
      %v6402 = vadd.f32 %v6366, %v6393
      %v6403 = vadd.f32 %v6367, %v6393
      %v6404 = vadd.f32 %v6368, %v6393
      %v6405 = vadd.f32 %v6369, %v6393
      %v6406 = vadd.f32 %v6370, %v6393
      %v6407 = vadd.f32 %v6371, %v6393
      %v6408 = vadd.f32 %v6372, %v6393
      %v6409 = vadd.f32 %v6373, %v6393
      %v6410 = vadd.f32 %v6374, %v6393
      %v6411 = vadd.f32 %v6375, %v6393
      %v6412 = vadd.f32 %v6376, %v6393
      %v6413 = vadd.f32 %v6377, %v6393
      %v6414 = vadd.f32 %v6378, %v6393
      %v6415 = vadd.f32 %v6379, %v6393
      %v6416 = vadd.f32 %v6380, %v6393
      %v6417 = vadd.f32 %v6381, %v6393
      %v6418 = vadd.f32 %v6382, %v6393
      %v6419 = vadd.f32 %v6383, %v6393
      %v6420 = vadd.f32 %v6384, %v6393
      %v6421 = vadd.f32 %v6385, %v6393
      %v6422 = vadd.f32 %v6386, %v6393
      %v6423 = vadd.f32 %v6387, %v6393
      %v6424 = vadd.f32 %v6388, %v6393
      %v6425 = vadd.f32 %v6389, %v6393
      %v6426 = vadd.f32 %v6390, %v6393
      %v6427 = vmax.f32 %v6395, 0.0
      %v6428 = vmax.f32 %v6396, 0.0
      %v6429 = vmax.f32 %v6397, 0.0
      %v6430 = vmax.f32 %v6398, 0.0
      %v6431 = vmax.f32 %v6399, 0.0
      %v6432 = vmax.f32 %v6400, 0.0
      %v6433 = vmax.f32 %v6401, 0.0
      %v6434 = vmax.f32 %v6402, 0.0
      %v6435 = vmax.f32 %v6403, 0.0
      %v6436 = vmax.f32 %v6404, 0.0
      %v6437 = vmax.f32 %v6405, 0.0
      %v6438 = vmax.f32 %v6406, 0.0
      %v6439 = vmax.f32 %v6407, 0.0
      %v6440 = vmax.f32 %v6408, 0.0
      %v6441 = vmax.f32 %v6409, 0.0
      %v6442 = vmax.f32 %v6410, 0.0
      %v6443 = vmax.f32 %v6411, 0.0
      %v6444 = vmax.f32 %v6412, 0.0
      %v6445 = vmax.f32 %v6413, 0.0
      %v6446 = vmax.f32 %v6414, 0.0
      %v6447 = vmax.f32 %v6415, 0.0
      %v6448 = vmax.f32 %v6416, 0.0
      %v6449 = vmax.f32 %v6417, 0.0
      %v6450 = vmax.f32 %v6418, 0.0
      %v6451 = vmax.f32 %v6419, 0.0
      %v6452 = vmax.f32 %v6420, 0.0
      %v6453 = vmax.f32 %v6421, 0.0
      %v6454 = vmax.f32 %v6422, 0.0
      %v6455 = vmax.f32 %v6423, 0.0
      %v6456 = vmax.f32 %v6424, 0.0
      %v6457 = vmax.f32 %v6425, 0.0
      %v6458 = vmax.f32 %v6426, 0.0
      %v6459 = vpack.c.bf16 %v6428, %v6427
      %v6460 = vpack.c.bf16 %v6430, %v6429
      %v6461 = vpack.c.bf16 %v6432, %v6431
      %v6462 = vpack.c.bf16 %v6434, %v6433
      %v6463 = vpack.c.bf16 %v6436, %v6435
      %v6464 = vpack.c.bf16 %v6438, %v6437
      %v6465 = vpack.c.bf16 %v6440, %v6439
      %v6466 = vpack.c.bf16 %v6442, %v6441
      %v6467 = vpack.c.bf16 %v6444, %v6443
      %v6468 = vpack.c.bf16 %v6446, %v6445
      %v6469 = vpack.c.bf16 %v6448, %v6447
      %v6470 = vpack.c.bf16 %v6450, %v6449
      %v6471 = vpack.c.bf16 %v6452, %v6451
      %v6472 = vpack.c.bf16 %v6454, %v6453
      %v6473 = vpack.c.bf16 %v6456, %v6455
      %v6474 = vpack.c.bf16 %v6458, %v6457
      %v6475 = vld [vmem:[%s7] sm:$0xf]
      %v6476 = vld [vmem:[%s7 + $0x4] sm:$0xf]
      %v6477 = vld [vmem:[%s7 + $0x8] sm:$0xf]
      %v6478 = vld [vmem:[%s7 + $0xc] sm:$0xf]
      %v6479 = vld [vmem:[%s7 + $0x10] sm:$0xf]
      %v6480 = vld [vmem:[%s7 + $0x14] sm:$0xf]
      %v6481 = vld [vmem:[%s7 + $0x18] sm:$0xf]
      %v6482 = vld [vmem:[%s7 + $0x1c] sm:$0xf]
      %v6483 = vld [vmem:[%s7 + $0x20] sm:$0xf]
      %v6484 = vld [vmem:[%s7 + $0x24] sm:$0xf]
      %v6485 = vld [vmem:[%s7 + $0x28] sm:$0xf]
      %v6486 = vld [vmem:[%s7 + $0x2c] sm:$0xf]
      %v6487 = vld [vmem:[%s7 + $0x30] sm:$0xf]
      %v6488 = vld [vmem:[%s7 + $0x34] sm:$0xf]
      %v6489 = vld [vmem:[%s7 + $0x38] sm:$0xf]
      %v6490 = vld [vmem:[%s7 + $0x3c] sm:$0xf]
      %v6507 = vunpack.c.l.b16 %v6475
      %v6508 = vunpack.c.l.b16 %v6476
      %v6509 = vunpack.c.l.b16 %v6477
      %v6510 = vunpack.c.l.b16 %v6478
      %v6511 = vunpack.c.l.b16 %v6479
      %v6512 = vunpack.c.l.b16 %v6480
      %v6513 = vunpack.c.l.b16 %v6481
      %v6514 = vunpack.c.l.b16 %v6482
      %v6515 = vunpack.c.l.b16 %v6483
      %v6516 = vunpack.c.l.b16 %v6484
      %v6517 = vunpack.c.l.b16 %v6485
      %v6518 = vunpack.c.l.b16 %v6486
      %v6519 = vunpack.c.l.b16 %v6487
      %v6520 = vunpack.c.l.b16 %v6488
      %v6521 = vunpack.c.l.b16 %v6489
      %v6522 = vunpack.c.l.b16 %v6490
      %v6523 = vpack.c.b16 %v6508, %v6507
      %v6524 = vpack.c.b16 %v6510, %v6509
      %v6525 = vpack.c.b16 %v6512, %v6511
      %v6526 = vpack.c.b16 %v6514, %v6513
      %v6527 = vpack.c.b16 %v6516, %v6515
      %v6528 = vpack.c.b16 %v6518, %v6517
      %v6529 = vpack.c.b16 %v6520, %v6519
      %v6530 = vpack.c.b16 %v6522, %v6521
      %6539 = vmatpush.bf16.msra.mxu0 %v6530
      %6540 = vmatpush.bf16.msra.mxu0 %v6529
      %6541 = vmatpush.bf16.msra.mxu0 %v6528
      %6542 = vmatpush.bf16.msra.mxu0 %v6527
      %6543 = vmatpush.bf16.msra.mxu0 %v6526
      %6544 = vmatpush.bf16.msra.mxu0 %v6525
      %6545 = vmatpush.bf16.msra.mxu0 %v6524
      %6546 = vmatpush.bf16.msra.mxu0 %v6523
      %6547 = vmatmul.bf16.gmra.mxu0 %v6459
      %v6548 = vpop.f32.mrf.mxu0
      %v6549 = vadd.f32 0.0, %v6548
      %v6550 = vpop.f32.mrf.mxu0
      %v6551 = vadd.f32 0.0, %v6550
      %6552 = vmatmul.bf16.gmra.mxu0 %v6460
      %v6553 = vpop.f32.mrf.mxu0
      %v6554 = vadd.f32 0.0, %v6553
      %v6555 = vpop.f32.mrf.mxu0
      %v6556 = vadd.f32 0.0, %v6555
      %6557 = vmatmul.bf16.gmra.mxu0 %v6461
      %v6558 = vpop.f32.mrf.mxu0
      %v6559 = vadd.f32 0.0, %v6558
      %v6560 = vpop.f32.mrf.mxu0
      %v6561 = vadd.f32 0.0, %v6560
      %6562 = vmatmul.bf16.gmra.mxu0 %v6462
      %v6563 = vpop.f32.mrf.mxu0
      %v6564 = vadd.f32 0.0, %v6563
      %v6565 = vpop.f32.mrf.mxu0
      %v6566 = vadd.f32 0.0, %v6565
      %6567 = vmatmul.bf16.gmra.mxu0 %v6463
      %v6568 = vpop.f32.mrf.mxu0
      %v6569 = vadd.f32 0.0, %v6568
      %v6570 = vpop.f32.mrf.mxu0
      %v6571 = vadd.f32 0.0, %v6570
      %6572 = vmatmul.bf16.gmra.mxu0 %v6464
      %v6573 = vpop.f32.mrf.mxu0
      %v6574 = vadd.f32 0.0, %v6573
      %v6575 = vpop.f32.mrf.mxu0
      %v6576 = vadd.f32 0.0, %v6575
      %6577 = vmatmul.bf16.gmra.mxu0 %v6465
      %v6578 = vpop.f32.mrf.mxu0
      %v6579 = vadd.f32 0.0, %v6578
      %v6580 = vpop.f32.mrf.mxu0
      %v6581 = vadd.f32 0.0, %v6580
      %6582 = vmatmul.bf16.gmra.mxu0 %v6466
      %v6583 = vpop.f32.mrf.mxu0
      %v6584 = vadd.f32 0.0, %v6583
      %v6585 = vpop.f32.mrf.mxu0
      %v6586 = vadd.f32 0.0, %v6585
      %6587 = vmatmul.bf16.gmra.mxu0 %v6467
      %v6588 = vpop.f32.mrf.mxu0
      %v6589 = vadd.f32 0.0, %v6588
      %v6590 = vpop.f32.mrf.mxu0
      %v6591 = vadd.f32 0.0, %v6590
      %6592 = vmatmul.bf16.gmra.mxu0 %v6468
      %v6593 = vpop.f32.mrf.mxu0
      %v6594 = vadd.f32 0.0, %v6593
      %v6595 = vpop.f32.mrf.mxu0
      %v6596 = vadd.f32 0.0, %v6595
      %6597 = vmatmul.bf16.gmra.mxu0 %v6469
      %v6598 = vpop.f32.mrf.mxu0
      %v6599 = vadd.f32 0.0, %v6598
      %v6600 = vpop.f32.mrf.mxu0
      %v6601 = vadd.f32 0.0, %v6600
      %6602 = vmatmul.bf16.gmra.mxu0 %v6470
      %v6603 = vpop.f32.mrf.mxu0
      %v6604 = vadd.f32 0.0, %v6603
      %v6605 = vpop.f32.mrf.mxu0
      %v6606 = vadd.f32 0.0, %v6605
      %6607 = vmatmul.bf16.gmra.mxu0 %v6471
      %v6608 = vpop.f32.mrf.mxu0
      %v6609 = vadd.f32 0.0, %v6608
      %v6610 = vpop.f32.mrf.mxu0
      %v6611 = vadd.f32 0.0, %v6610
      %6612 = vmatmul.bf16.gmra.mxu0 %v6472
      %v6613 = vpop.f32.mrf.mxu0
      %v6614 = vadd.f32 0.0, %v6613
      %v6615 = vpop.f32.mrf.mxu0
      %v6616 = vadd.f32 0.0, %v6615
      %6617 = vmatmul.bf16.gmra.mxu0 %v6473
      %v6618 = vpop.f32.mrf.mxu0
      %v6619 = vadd.f32 0.0, %v6618
      %v6620 = vpop.f32.mrf.mxu0
      %v6621 = vadd.f32 0.0, %v6620
      %6622 = vmatmul.bf16.gmra.mxu0 %v6474
      %v6623 = vpop.f32.mrf.mxu0
      %v6624 = vadd.f32 0.0, %v6623
      %v6625 = vpop.f32.mrf.mxu0
      %v6626 = vadd.f32 0.0, %v6625
      %6627 = vdwg.mxu0
      %v6628 = vld [vmem:[%s8] sm:$0x1]
      %v6630 = vperm.slane %v6628, 0
      %v6632 = vmul.f32 %v6549, %v6630
      %v6633 = vmul.f32 %v6551, %v6630
      %v6634 = vmul.f32 %v6554, %v6630
      %v6635 = vmul.f32 %v6556, %v6630
      %v6636 = vmul.f32 %v6559, %v6630
      %v6637 = vmul.f32 %v6561, %v6630
      %v6638 = vmul.f32 %v6564, %v6630
      %v6639 = vmul.f32 %v6566, %v6630
      %v6640 = vmul.f32 %v6569, %v6630
      %v6641 = vmul.f32 %v6571, %v6630
      %v6642 = vmul.f32 %v6574, %v6630
      %v6643 = vmul.f32 %v6576, %v6630
      %v6644 = vmul.f32 %v6579, %v6630
      %v6645 = vmul.f32 %v6581, %v6630
      %v6646 = vmul.f32 %v6584, %v6630
      %v6647 = vmul.f32 %v6586, %v6630
      %v6648 = vmul.f32 %v6589, %v6630
      %v6649 = vmul.f32 %v6591, %v6630
      %v6650 = vmul.f32 %v6594, %v6630
      %v6651 = vmul.f32 %v6596, %v6630
      %v6652 = vmul.f32 %v6599, %v6630
      %v6653 = vmul.f32 %v6601, %v6630
      %v6654 = vmul.f32 %v6604, %v6630
      %v6655 = vmul.f32 %v6606, %v6630
      %v6656 = vmul.f32 %v6609, %v6630
      %v6657 = vmul.f32 %v6611, %v6630
      %v6658 = vmul.f32 %v6614, %v6630
      %v6659 = vmul.f32 %v6616, %v6630
      %v6660 = vmul.f32 %v6619, %v6630
      %v6661 = vmul.f32 %v6621, %v6630
      %v6662 = vmul.f32 %v6624, %v6630
      %v6663 = vmul.f32 %v6626, %v6630
      %v6664 = vld [vmem:[%s9] sm:$0x1]
      %v6666 = vperm.slane %v6664, 0
      %v6668 = vadd.f32 %v6632, %v6666
      %v6669 = vadd.f32 %v6633, %v6666
      %v6670 = vadd.f32 %v6634, %v6666
      %v6671 = vadd.f32 %v6635, %v6666
      %v6672 = vadd.f32 %v6636, %v6666
      %v6673 = vadd.f32 %v6637, %v6666
      %v6674 = vadd.f32 %v6638, %v6666
      %v6675 = vadd.f32 %v6639, %v6666
      %v6676 = vadd.f32 %v6640, %v6666
      %v6677 = vadd.f32 %v6641, %v6666
      %v6678 = vadd.f32 %v6642, %v6666
      %v6679 = vadd.f32 %v6643, %v6666
      %v6680 = vadd.f32 %v6644, %v6666
      %v6681 = vadd.f32 %v6645, %v6666
      %v6682 = vadd.f32 %v6646, %v6666
      %v6683 = vadd.f32 %v6647, %v6666
      %v6684 = vadd.f32 %v6648, %v6666
      %v6685 = vadd.f32 %v6649, %v6666
      %v6686 = vadd.f32 %v6650, %v6666
      %v6687 = vadd.f32 %v6651, %v6666
      %v6688 = vadd.f32 %v6652, %v6666
      %v6689 = vadd.f32 %v6653, %v6666
      %v6690 = vadd.f32 %v6654, %v6666
      %v6691 = vadd.f32 %v6655, %v6666
      %v6692 = vadd.f32 %v6656, %v6666
      %v6693 = vadd.f32 %v6657, %v6666
      %v6694 = vadd.f32 %v6658, %v6666
      %v6695 = vadd.f32 %v6659, %v6666
      %v6696 = vadd.f32 %v6660, %v6666
      %v6697 = vadd.f32 %v6661, %v6666
      %v6698 = vadd.f32 %v6662, %v6666
      %v6699 = vadd.f32 %v6663, %v6666
      %v6700 = vadd.f32 %v6668, %v763
      %v6701 = vadd.f32 %v6669, %v764
      %v6702 = vadd.f32 %v6670, %v765
      %v6703 = vadd.f32 %v6671, %v766
      %v6704 = vadd.f32 %v6672, %v767
      %v6705 = vadd.f32 %v6673, %v768
      %v6706 = vadd.f32 %v6674, %v769
      %v6707 = vadd.f32 %v6675, %v770
      %v6708 = vadd.f32 %v6676, %v771
      %v6709 = vadd.f32 %v6677, %v772
      %v6710 = vadd.f32 %v6678, %v773
      %v6711 = vadd.f32 %v6679, %v774
      %v6712 = vadd.f32 %v6680, %v775
      %v6713 = vadd.f32 %v6681, %v776
      %v6714 = vadd.f32 %v6682, %v777
      %v6715 = vadd.f32 %v6683, %v778
      %v6716 = vadd.f32 %v6684, %v779
      %v6717 = vadd.f32 %v6685, %v780
      %v6718 = vadd.f32 %v6686, %v781
      %v6719 = vadd.f32 %v6687, %v782
      %v6720 = vadd.f32 %v6688, %v783
      %v6721 = vadd.f32 %v6689, %v784
      %v6722 = vadd.f32 %v6690, %v785
      %v6723 = vadd.f32 %v6691, %v786
      %v6724 = vadd.f32 %v6692, %v787
      %v6725 = vadd.f32 %v6693, %v788
      %v6726 = vadd.f32 %v6694, %v789
      %v6727 = vadd.f32 %v6695, %v790
      %v6728 = vadd.f32 %v6696, %v791
      %v6729 = vadd.f32 %v6697, %v792
      %v6730 = vadd.f32 %v6698, %v793
      %v6731 = vadd.f32 %v6699, %v794
      %v6732 = vmax.f32 %v6700, 0.0
      %v6733 = vmax.f32 %v6701, 0.0
      %v6734 = vmax.f32 %v6702, 0.0
      %v6735 = vmax.f32 %v6703, 0.0
      %v6736 = vmax.f32 %v6704, 0.0
      %v6737 = vmax.f32 %v6705, 0.0
      %v6738 = vmax.f32 %v6706, 0.0
      %v6739 = vmax.f32 %v6707, 0.0
      %v6740 = vmax.f32 %v6708, 0.0
      %v6741 = vmax.f32 %v6709, 0.0
      %v6742 = vmax.f32 %v6710, 0.0
      %v6743 = vmax.f32 %v6711, 0.0
      %v6744 = vmax.f32 %v6712, 0.0
      %v6745 = vmax.f32 %v6713, 0.0
      %v6746 = vmax.f32 %v6714, 0.0
      %v6747 = vmax.f32 %v6715, 0.0
      %v6748 = vmax.f32 %v6716, 0.0
      %v6749 = vmax.f32 %v6717, 0.0
      %v6750 = vmax.f32 %v6718, 0.0
      %v6751 = vmax.f32 %v6719, 0.0
      %v6752 = vmax.f32 %v6720, 0.0
      %v6753 = vmax.f32 %v6721, 0.0
      %v6754 = vmax.f32 %v6722, 0.0
      %v6755 = vmax.f32 %v6723, 0.0
      %v6756 = vmax.f32 %v6724, 0.0
      %v6757 = vmax.f32 %v6725, 0.0
      %v6758 = vmax.f32 %v6726, 0.0
      %v6759 = vmax.f32 %v6727, 0.0
      %v6760 = vmax.f32 %v6728, 0.0
      %v6761 = vmax.f32 %v6729, 0.0
      %v6762 = vmax.f32 %v6730, 0.0
      %v6763 = vmax.f32 %v6731, 0.0
      %v6764 = vpack.c.bf16 %v6732, %v6732
      %v6765 = vpack.c.bf16 %v6733, %v6733
      %v6766 = vpack.c.bf16 %v6734, %v6734
      %v6767 = vpack.c.bf16 %v6735, %v6735
      %v6768 = vpack.c.bf16 %v6736, %v6736
      %v6769 = vpack.c.bf16 %v6737, %v6737
      %v6770 = vpack.c.bf16 %v6738, %v6738
      %v6771 = vpack.c.bf16 %v6739, %v6739
      %v6772 = vpack.c.bf16 %v6740, %v6740
      %v6773 = vpack.c.bf16 %v6741, %v6741
      %v6774 = vpack.c.bf16 %v6742, %v6742
      %v6775 = vpack.c.bf16 %v6743, %v6743
      %v6776 = vpack.c.bf16 %v6744, %v6744
      %v6777 = vpack.c.bf16 %v6745, %v6745
      %v6778 = vpack.c.bf16 %v6746, %v6746
      %v6779 = vpack.c.bf16 %v6747, %v6747
      %v6780 = vpack.c.bf16 %v6748, %v6748
      %v6781 = vpack.c.bf16 %v6749, %v6749
      %v6782 = vpack.c.bf16 %v6750, %v6750
      %v6783 = vpack.c.bf16 %v6751, %v6751
      %v6784 = vpack.c.bf16 %v6752, %v6752
      %v6785 = vpack.c.bf16 %v6753, %v6753
      %v6786 = vpack.c.bf16 %v6754, %v6754
      %v6787 = vpack.c.bf16 %v6755, %v6755
      %v6788 = vpack.c.bf16 %v6756, %v6756
      %v6789 = vpack.c.bf16 %v6757, %v6757
      %v6790 = vpack.c.bf16 %v6758, %v6758
      %v6791 = vpack.c.bf16 %v6759, %v6759
      %v6792 = vpack.c.bf16 %v6760, %v6760
      %v6793 = vpack.c.bf16 %v6761, %v6761
      %v6794 = vpack.c.bf16 %v6762, %v6762
      %v6795 = vpack.c.bf16 %v6763, %v6763
      %6796 = vst [vmem:[%s440] sm:$0xf] %v6764
      %6797 = vst [vmem:[%s440 + $0x4] sm:$0xf] %v6765
      %6798 = vst [vmem:[%s440 + $0x8] sm:$0xf] %v6766
      %6799 = vst [vmem:[%s440 + $0xc] sm:$0xf] %v6767
      %6800 = vst [vmem:[%s440 + $0x10] sm:$0xf] %v6768
      %6801 = vst [vmem:[%s440 + $0x14] sm:$0xf] %v6769
      %6802 = vst [vmem:[%s440 + $0x18] sm:$0xf] %v6770
      %6803 = vst [vmem:[%s440 + $0x1c] sm:$0xf] %v6771
      %6804 = vst [vmem:[%s440 + $0x20] sm:$0xf] %v6772
      %6805 = vst [vmem:[%s440 + $0x24] sm:$0xf] %v6773
      %6806 = vst [vmem:[%s440 + $0x28] sm:$0xf] %v6774
      %6807 = vst [vmem:[%s440 + $0x2c] sm:$0xf] %v6775
      %6808 = vst [vmem:[%s440 + $0x30] sm:$0xf] %v6776
      %6809 = vst [vmem:[%s440 + $0x34] sm:$0xf] %v6777
      %6810 = vst [vmem:[%s440 + $0x38] sm:$0xf] %v6778
      %6811 = vst [vmem:[%s440 + $0x3c] sm:$0xf] %v6779
      %6812 = vst [vmem:[%s440 + $0x40] sm:$0xf] %v6780
      %6813 = vst [vmem:[%s440 + $0x44] sm:$0xf] %v6781
      %6814 = vst [vmem:[%s440 + $0x48] sm:$0xf] %v6782
      %6815 = vst [vmem:[%s440 + $0x4c] sm:$0xf] %v6783
      %6816 = vst [vmem:[%s440 + $0x50] sm:$0xf] %v6784
      %6817 = vst [vmem:[%s440 + $0x54] sm:$0xf] %v6785
      %6818 = vst [vmem:[%s440 + $0x58] sm:$0xf] %v6786
      %6819 = vst [vmem:[%s440 + $0x5c] sm:$0xf] %v6787
      %6820 = vst [vmem:[%s440 + $0x60] sm:$0xf] %v6788
      %6821 = vst [vmem:[%s440 + $0x64] sm:$0xf] %v6789
      %6822 = vst [vmem:[%s440 + $0x68] sm:$0xf] %v6790
      %6823 = vst [vmem:[%s440 + $0x6c] sm:$0xf] %v6791
      %6824 = vst [vmem:[%s440 + $0x70] sm:$0xf] %v6792
      %6825 = vst [vmem:[%s440 + $0x74] sm:$0xf] %v6793
      %6826 = vst [vmem:[%s440 + $0x78] sm:$0xf] %v6794
      %6827 = vst [vmem:[%s440 + $0x7c] sm:$0xf] %v6795
      %p6828 = scmp.lt.s32.totalorder %s24, 1
      %s6829 = scalar_select %p6828, %s24, 1
      %s6830 = smul.addr %s6829, 32
      %s6831 = smul.addr %s6830, 4
      %s6832 = scalar_lea.vmem %s13, %s6831
      // Predicated region
      $region73: #{bottleneck_forward.1} parent=71 // pred_check
        %p6833 = pneg %p320
      $region74: #{bottleneck_forward.1} parent=71 // pred_check_branch
        %6835 = sbr.rel (%p6833) target = $region76
      $region75: #{bottleneck_forward.1} parent=71 // pred_region
        _
      $region76: #{bottleneck_forward.1} parent=71 // pred_fallthru
        _
    $region72: #{bottleneck_forward.1} parent=5 // pred_fallthru
      _
    %p6836 = scmp.le.s32.totalorder 2, %s19
    // Predicated region
    $region77: #{bottleneck_forward.1} parent=5 // pred_check
      %p6837 = pneg %p6836
    $region78: #{bottleneck_forward.1} parent=5 // pred_check_branch
      %6839 = sbr.rel (%p6837) target = $region80
    $region79: #{bottleneck_forward.1} parent=5 // pred_region
      %s6840 = ssub.s32 %s19, 2
      // Predicated region
      $region81: #{bottleneck_forward.1} parent=79 // pred_check
        %p6841 = pneg %p326
      $region82: #{bottleneck_forward.1} parent=79 // pred_check_branch
        %6843 = sbr.rel (%p6841) target = $region84
      $region83: #{bottleneck_forward.1} parent=79 // pred_region
        %p6844 = scmp.lt.s32.totalorder %s25, 1
        %s6845 = scalar_select %p6844, %s25, 1
        %s6846 = smul.addr %s6845, 32
        %s6847 = smul.addr %s6846, 4
        %s6848 = scalar_lea.vmem %s13, %s6847
      $region84: #{bottleneck_forward.1} parent=79 // pred_fallthru
        _
    $region80: #{bottleneck_forward.1} parent=5 // pred_fallthru
      _
  $region6: #{bottleneck_forward.1} parent=0 // loop_footer
    %s23 = sadd.s32 1, %s19
  $region7: #{bottleneck_forward.1} parent=0 // loop_footer_branch
    %18 = sbr.rel target = $region3
  $region8: #{bottleneck_forward.1} parent=0 // loop_exit
    _

</llo_original>
